<compile_context>
chip_gen: v5e
topology: v5e:2x2
jax: 0.10.0
libtpu: 0.0.40
codegen_flags: <defaults>
</compile_context>

<pallas_src>
import math

import jax
import jax.numpy as jnp
import numpy as np
from jax import lax
from jax.experimental import pallas as pl
from jax.experimental.pallas import tpu as pltpu

_LANE = 128  # lane-dense output width


# ------------------------------ Pallas kernel ------------------------------

def _make_fused_kernel(n_batch, m_out, k2):
    """conv1 (one matmul) + conv2 (k2 banded matmuls) + tanh-GELU, fused."""

    def kernel(x_ref, w1_ref, w2_ref, b2_ref, o_ref):
        # conv1:  (rows, K1big) @ (K1big, OW1*C1); rows=(oy, n), cols=(ox*C1+c)
        # (conv1 bias is folded into b2_ref, so no bias add here)
        v1 = jnp.dot(x_ref[...], w1_ref[...],
                     preferred_element_type=jnp.float32,
                     precision=lax.Precision.HIGHEST)

        # conv2: sum over k2 kernel-row taps; each tap is a CONTIGUOUS row
        # slice of v1 thanks to the (oy, n) row ordering.  Kept as one
        # dependent acc chain (MRB in-place accumulate on v7x).
        acc = jnp.dot(v1[0:m_out, :], w2_ref[0],
                      preferred_element_type=jnp.float32,
                      precision=lax.Precision.HIGHEST)
        for dy in range(1, k2):
            acc = acc + jnp.dot(v1[dy * n_batch: dy * n_batch + m_out, :],
                                w2_ref[dy],
                                preferred_element_type=jnp.float32,
                                precision=lax.Precision.HIGHEST)
        v2 = acc + b2_ref[...]

        # fused tanh-GELU chain (tanh goes to the EUP slot)
        sq = v2 * v2
        inner = (v2 + v2 * sq * 0.044715) * 0.7978845608028654
        o_ref[...] = (0.5 * v2) * (jnp.tanh(inner) + 1.0)

    return kernel


# ------------------------------- parameters --------------------------------

def init_params(key):
    k1, k2, k3, k4 = jax.random.split(key, 4)
    # conv1: Conv2d(2, 3, kernel_size=6, stride=7, padding=1)
    fan1 = 2 * 6 * 6
    bound1 = 1.0 / math.sqrt(fan1)
    w1 = jax.random.uniform(k1, (3, 2, 6, 6), jnp.float32, -bound1, bound1)
    b1 = jax.random.uniform(k2, (3,), jnp.float32, -bound1, bound1)
    # TODO(synk): the original module declares conv2 = Conv2d(5, 4, 6) but conv1
    # only produces 3 channels (and x3 has 5 channels vs conv1's 2), so the
    # stated PyTorch forward cannot run; conv2 is built with in_channels=3 here
    # so the pipeline is runnable end-to-end.
    fan2 = 3 * 6 * 6
    bound2 = 1.0 / math.sqrt(fan2)
    w2 = jax.random.uniform(k3, (4, 3, 6, 6), jnp.float32, -bound2, bound2)
    b2 = jax.random.uniform(k4, (4,), jnp.float32, -bound2, bound2)
    return (w1, b1, w2, b2)


# ---------------- one-time, params-only operand preparation -----------------

def _prepare_fused_operands(params, input_shape):
    """Build the banded weight matrices and folded bias (host-side, once)."""
    w1, b1, w2, b2 = (np.asarray(p, dtype=np.float32) for p in params)
    N, Cin, H, W = input_shape
    C1, _, K1, _ = w1.shape            # 3, 2, 6, 6
    C2, Cm, K2, _ = w2.shape           # 4, 3, 6, 6
    assert Cm == C1, "conv2 in_channels must match conv1 out_channels"
    S, P = 7, 1                        # conv1 stride / padding
    OH1 = (H + 2 * P - K1) // S + 1
    OW1 = (W + 2 * P - K1) // S + 1
    HP, WP = S * OH1, S * OW1          # pad spatial dims up to a stride multiple
    OH2, OW2 = OH1 - K2 + 1, OW1 - K2 + 1
    assert HP - H - P >= 0 and WP - W - P >= 0 and OH2 >= 1 and OW2 >= 1

    M2 = OH2 * N                       # real output rows
    M_OUT = max(8, -(-M2 // 8) * 8)    # sublane-padded output rows (one vreg)
    R1 = OH1 * N                       # real conv1 rows
    R1_PAD = max(R1, (K2 - 1) * N + M_OUT)  # rows X must provide

    # W1_big[(dy,ci,S*ox+dx), (ox'*C1+c)] = w1[c,ci,dy,dx] * delta(ox, ox')
    # (extra dy/dx taps up to the stride are zero-padded -> no effect).
    w1p = np.zeros((C1, Cin, S, S), np.float32)
    w1p[:, :, :K1, :K1] = w1
    A = w1p.transpose(2, 1, 3, 0)                      # (dy, ci, dx, c)
    eye = np.eye(OW1, dtype=np.float32)
    W1_big = (A[:, :, None, :, None, :] *
              eye[None, None, :, None, :, None]        # (dy,ci,ox,dx,ox',c)
              ).reshape(S * Cin * WP, OW1 * C1)

    # conv2: per-dy banded weight blocks, lane-padded to 128.
    blk = w2.transpose(2, 3, 1, 0).reshape(K2, K2 * Cm, C2)   # (dy,(dx,c),co)
    W2_stack = np.zeros((K2, OW1 * Cm, _LANE), np.float32)
    # fold conv1 bias through the linear conv2:  b2_eff = b2 + sum w2 * b1
    b2_eff = b2 + w2.sum(axis=(2, 3)) @ b1
    b2_row = np.zeros((1, _LANE), np.float32)
    for ox2 in range(OW2):
        W2_stack[:, Cm * ox2: Cm * ox2 + K2 * Cm,
                 C2 * ox2: C2 * (ox2 + 1)] = blk
        b2_row[0, C2 * ox2: C2 * (ox2 + 1)] = b2_eff

    geom = dict(N=N, Cin=Cin, H=H, W=W, S=S, P=P, K2=K2, C2=C2,
                OH1=OH1, OW1=OW1, HP=HP, WP=WP, OH2=OH2, OW2=OW2,
                M2=M2, M_OUT=M_OUT, R1=R1, R1_PAD=R1_PAD)
    return (jnp.asarray(W1_big), jnp.asarray(W2_stack), jnp.asarray(b2_row),
            geom)


# ------------------------------- the model ---------------------------------

def make_forward_fn(params, input_shape):
    """Returns a jitted forward(x) with all weight-side prep cached."""
    W1_big, W2_stack, b2_row, g = _prepare_fused_operands(params, input_shape)
    N, Cin, H, W = g["N"], g["Cin"], g["H"], g["W"]
    S, P, K2, C2 = g["S"], g["P"], g["K2"], g["C2"]
    OH1, WP, HP = g["OH1"], g["WP"], g["HP"]
    OH2, OW2 = g["OH2"], g["OW2"]
    M2, M_OUT, R1, R1_PAD = g["M2"], g["M_OUT"], g["R1"], g["R1_PAD"]

    kernel = _make_fused_kernel(N, M_OUT, K2)

    flops = (2 * R1_PAD * W1_big.shape[0] * W1_big.shape[1]
             + 2 * K2 * M_OUT * W2_stack.shape[1] * _LANE
             + 12 * M_OUT * _LANE)
    bytes_accessed = 4 * (R1_PAD * W1_big.shape[0] + W1_big.size
                          + W2_stack.size + b2_row.size + M_OUT * _LANE)

    # Grid-less pallas_call: whole working set (<0.5 MB) lives in VMEM,
    # single-buffered, no pipeline prologue.
    fused_call = pl.pallas_call(
        kernel,
        out_shape=jax.ShapeDtypeStruct((M_OUT, _LANE), jnp.float32),
        in_specs=[pl.BlockSpec(memory_space=pltpu.MemorySpace.VMEM)] * 4,
        out_specs=pl.BlockSpec(memory_space=pltpu.MemorySpace.VMEM),
        cost_estimate=pl.CostEstimate(flops=flops,
                                      transcendentals=M_OUT * _LANE,
                                      bytes_accessed=bytes_accessed),
    )

    @jax.jit
    def forward(x_nchw):
        # X rows = (oy, n); cols = (dy, ci, S*ox+dx) -> conv1 as one matmul.
        xp = jnp.pad(x_nchw,
                     ((0, 0), (0, 0), (P, HP - H - P), (P, WP - W - P)))
        X = (xp.reshape(N, Cin, OH1, S, WP)
               .transpose(2, 0, 3, 1, 4)              # (oy, n, dy, ci, col)
               .reshape(OH1 * N, S * Cin * WP))
        # zero-pad extra rows so the kernel can emit a full (M_OUT, 128) block
        # with unmasked slices/stores (padded rows are sliced away below).
        X = jnp.pad(X, ((0, R1_PAD - R1), (0, 0)))

        out_mat = fused_call(X, W1_big, W2_stack, b2_row)

        # rows=(oy2, n), cols=(ox2*C2+co)  ->  NCHW (tiny 32-element fixup)
        out = (out_mat[:M2, :OW2 * C2]
               .reshape(OH2, N, OW2, C2)
               .transpose(1, 3, 0, 2))
        return out

    return forward


# ------------------------------- reference ----------------------------------

def _reference_forward(x, params):
    w1, b1, w2, b2 = params
    dn = ("NCHW", "OIHW", "NCHW")
    v1 = lax.conv_general_dilated(
        x, w1, (7, 7), [(1, 1), (1, 1)], dimension_numbers=dn,
        precision=lax.Precision.HIGHEST) + b1[None, :, None, None]
    v2 = lax.conv_general_dilated(
        v1, w2, (1, 1), [(0, 0), (0, 0)], dimension_numbers=dn,
        precision=lax.Precision.HIGHEST) + b2[None, :, None, None]
    v3 = v2 * 0.5
    v6 = v2 * v2 * v2 * 0.044715
    v8 = (v2 + v6) * 0.7978845608028654
    return v3 * (jnp.tanh(v8) + 1.0)


if __name__ == "__main__":
    key = jax.random.PRNGKey(0)
    k_param, k_x = jax.random.split(key)
    params = init_params(k_param)
    # 46x46 input: conv1 (k=6, s=7, p=1) -> 7x7, conv2 (k=6, s=1) -> 2x2.
    x = jax.random.normal(k_x, (2, 2, 46, 46), jnp.float32)

    forward = make_forward_fn(params, x.shape)
    out = jax.block_until_ready(forward(x))
    ref = jax.block_until_ready(_reference_forward(x, params))
    np.testing.assert_allclose(np.asarray(out), np.asarray(ref),
                               atol=1e-4, rtol=1e-4)
    print("KERNEL_OK")
</pallas_src>

<mosaic_0001>
module attributes {stable_mosaic.version = 11 : i64} {
  func.func @kernel(%arg0: memref<18x686xf32, #tpu.memory_space<vmem>>, %arg1: memref<686x21xf32, #tpu.memory_space<vmem>>, %arg2: memref<6x21x128xf32, #tpu.memory_space<vmem>>, %arg3: memref<1x128xf32, #tpu.memory_space<vmem>>, %arg4: memref<8x128xf32, #tpu.memory_space<vmem>>) attributes {dimension_semantics = [], scalar_prefetch = 0 : i64, scratch_operands = 0 : i64, tpu.core_type = #tpu.core_type<tc>} {
    %c0 = arith.constant 0 : index
    %c0_0 = arith.constant 0 : index
    %0 = vector.load %arg0[%c0, %c0_0] : memref<18x686xf32, #tpu.memory_space<vmem>>, vector<18x686xf32>
    %c0_1 = arith.constant 0 : index
    %c0_2 = arith.constant 0 : index
    %1 = vector.load %arg1[%c0_1, %c0_2] : memref<686x21xf32, #tpu.memory_space<vmem>>, vector<686x21xf32>
    %cst = arith.constant dense<0.000000e+00> : vector<18x21xf32>
    %2 = tpu.matmul %0, %1, %cst {dimension_numbers = #tpu.dot_dimension_numbers<[1], [0], [0], [1], [0, 0, 1, 1], [], []>, precision = #tpu.contract_precision<fp32>} : vector<18x686xf32>, vector<686x21xf32>, vector<18x21xf32> -> vector<18x21xf32>
    %3 = vector.extract_strided_slice %2 {offsets = [0, 0], sizes = [8, 21], strides = [1, 1]} : vector<18x21xf32> to vector<8x21xf32>
    %c0_3 = arith.constant 0 : index
    %c0_4 = arith.constant 0 : index
    %c0_5 = arith.constant 0 : index
    %4 = vector.load %arg2[%c0_3, %c0_4, %c0_5] : memref<6x21x128xf32, #tpu.memory_space<vmem>>, vector<1x21x128xf32>
    %5 = vector.shape_cast %4 : vector<1x21x128xf32> to vector<21x128xf32>
    %cst_6 = arith.constant dense<0.000000e+00> : vector<8x128xf32>
    %6 = tpu.matmul %3, %5, %cst_6 {dimension_numbers = #tpu.dot_dimension_numbers<[1], [0], [0], [1], [0, 0, 1, 1], [], []>, precision = #tpu.contract_precision<fp32>} : vector<8x21xf32>, vector<21x128xf32>, vector<8x128xf32> -> vector<8x128xf32>
    %7 = vector.extract_strided_slice %2 {offsets = [2, 0], sizes = [8, 21], strides = [1, 1]} : vector<18x21xf32> to vector<8x21xf32>
    %c1 = arith.constant 1 : index
    %c0_7 = arith.constant 0 : index
    %c0_8 = arith.constant 0 : index
    %8 = vector.load %arg2[%c1, %c0_7, %c0_8] : memref<6x21x128xf32, #tpu.memory_space<vmem>>, vector<1x21x128xf32>
    %9 = vector.shape_cast %8 : vector<1x21x128xf32> to vector<21x128xf32>
    %cst_9 = arith.constant dense<0.000000e+00> : vector<8x128xf32>
    %10 = tpu.matmul %7, %9, %cst_9 {dimension_numbers = #tpu.dot_dimension_numbers<[1], [0], [0], [1], [0, 0, 1, 1], [], []>, precision = #tpu.contract_precision<fp32>} : vector<8x21xf32>, vector<21x128xf32>, vector<8x128xf32> -> vector<8x128xf32>
    %11 = arith.addf %6, %10 : vector<8x128xf32>
    %12 = vector.extract_strided_slice %2 {offsets = [4, 0], sizes = [8, 21], strides = [1, 1]} : vector<18x21xf32> to vector<8x21xf32>
    %c2 = arith.constant 2 : index
    %c0_10 = arith.constant 0 : index
    %c0_11 = arith.constant 0 : index
    %13 = vector.load %arg2[%c2, %c0_10, %c0_11] : memref<6x21x128xf32, #tpu.memory_space<vmem>>, vector<1x21x128xf32>
    %14 = vector.shape_cast %13 : vector<1x21x128xf32> to vector<21x128xf32>
    %cst_12 = arith.constant dense<0.000000e+00> : vector<8x128xf32>
    %15 = tpu.matmul %12, %14, %cst_12 {dimension_numbers = #tpu.dot_dimension_numbers<[1], [0], [0], [1], [0, 0, 1, 1], [], []>, precision = #tpu.contract_precision<fp32>} : vector<8x21xf32>, vector<21x128xf32>, vector<8x128xf32> -> vector<8x128xf32>
    %16 = arith.addf %11, %15 : vector<8x128xf32>
    %17 = vector.extract_strided_slice %2 {offsets = [6, 0], sizes = [8, 21], strides = [1, 1]} : vector<18x21xf32> to vector<8x21xf32>
    %c3 = arith.constant 3 : index
    %c0_13 = arith.constant 0 : index
    %c0_14 = arith.constant 0 : index
    %18 = vector.load %arg2[%c3, %c0_13, %c0_14] : memref<6x21x128xf32, #tpu.memory_space<vmem>>, vector<1x21x128xf32>
    %19 = vector.shape_cast %18 : vector<1x21x128xf32> to vector<21x128xf32>
    %cst_15 = arith.constant dense<0.000000e+00> : vector<8x128xf32>
    %20 = tpu.matmul %17, %19, %cst_15 {dimension_numbers = #tpu.dot_dimension_numbers<[1], [0], [0], [1], [0, 0, 1, 1], [], []>, precision = #tpu.contract_precision<fp32>} : vector<8x21xf32>, vector<21x128xf32>, vector<8x128xf32> -> vector<8x128xf32>
    %21 = arith.addf %16, %20 : vector<8x128xf32>
    %22 = vector.extract_strided_slice %2 {offsets = [8, 0], sizes = [8, 21], strides = [1, 1]} : vector<18x21xf32> to vector<8x21xf32>
    %c4 = arith.constant 4 : index
    %c0_16 = arith.constant 0 : index
    %c0_17 = arith.constant 0 : index
    %23 = vector.load %arg2[%c4, %c0_16, %c0_17] : memref<6x21x128xf32, #tpu.memory_space<vmem>>, vector<1x21x128xf32>
    %24 = vector.shape_cast %23 : vector<1x21x128xf32> to vector<21x128xf32>
    %cst_18 = arith.constant dense<0.000000e+00> : vector<8x128xf32>
    %25 = tpu.matmul %22, %24, %cst_18 {dimension_numbers = #tpu.dot_dimension_numbers<[1], [0], [0], [1], [0, 0, 1, 1], [], []>, precision = #tpu.contract_precision<fp32>} : vector<8x21xf32>, vector<21x128xf32>, vector<8x128xf32> -> vector<8x128xf32>
    %26 = arith.addf %21, %25 : vector<8x128xf32>
    %27 = vector.extract_strided_slice %2 {offsets = [10, 0], sizes = [8, 21], strides = [1, 1]} : vector<18x21xf32> to vector<8x21xf32>
    %c5 = arith.constant 5 : index
    %c0_19 = arith.constant 0 : index
    %c0_20 = arith.constant 0 : index
    %28 = vector.load %arg2[%c5, %c0_19, %c0_20] : memref<6x21x128xf32, #tpu.memory_space<vmem>>, vector<1x21x128xf32>
    %29 = vector.shape_cast %28 : vector<1x21x128xf32> to vector<21x128xf32>
    %cst_21 = arith.constant dense<0.000000e+00> : vector<8x128xf32>
    %30 = tpu.matmul %27, %29, %cst_21 {dimension_numbers = #tpu.dot_dimension_numbers<[1], [0], [0], [1], [0, 0, 1, 1], [], []>, precision = #tpu.contract_precision<fp32>} : vector<8x21xf32>, vector<21x128xf32>, vector<8x128xf32> -> vector<8x128xf32>
    %31 = arith.addf %26, %30 : vector<8x128xf32>
    %c0_22 = arith.constant 0 : index
    %c0_23 = arith.constant 0 : index
    %32 = vector.load %arg3[%c0_22, %c0_23] : memref<1x128xf32, #tpu.memory_space<vmem>>, vector<1x128xf32>
    %33 = vector.broadcast %32 : vector<1x128xf32> to vector<8x128xf32>
    %34 = arith.addf %31, %33 : vector<8x128xf32>
    %35 = arith.mulf %34, %34 : vector<8x128xf32>
    %36 = arith.mulf %34, %35 : vector<8x128xf32>
    %cst_24 = arith.constant 4.471500e-02 : f32
    %37 = vector.broadcast %cst_24 : f32 to vector<8x128xf32>
    %38 = arith.mulf %36, %37 : vector<8x128xf32>
    %39 = arith.addf %34, %38 : vector<8x128xf32>
    %cst_25 = arith.constant 0.797884583 : f32
    %40 = vector.broadcast %cst_25 : f32 to vector<8x128xf32>
    %41 = arith.mulf %39, %40 : vector<8x128xf32>
    %cst_26 = arith.constant 5.000000e-01 : f32
    %42 = vector.broadcast %cst_26 : f32 to vector<8x128xf32>
    %43 = arith.mulf %42, %34 : vector<8x128xf32>
    %44 = math.tanh %41 : vector<8x128xf32>
    %cst_27 = arith.constant 1.000000e+00 : f32
    %45 = vector.broadcast %cst_27 : f32 to vector<8x128xf32>
    %46 = arith.addf %44, %45 : vector<8x128xf32>
    %47 = arith.mulf %43, %46 : vector<8x128xf32>
    %c0_28 = arith.constant 0 : index
    %c0_29 = arith.constant 0 : index
    %48 = vector.load %arg4[%c0_28, %c0_29] : memref<8x128xf32, #tpu.memory_space<vmem>>, vector<8x128xf32>
    tpu.vector_store %arg4[%c0_28, %c0_29], %47 {strides = array<i32>} : memref<8x128xf32, #tpu.memory_space<vmem>>, vector<8x128xf32>,
    return
  }
}

</mosaic_0001>

<llo_original>
// kernel: forward.1
$region0: #{forward.1}
  #allocation0 [shape = 'u32[]', space=smem, size = 0x4, offset = 0x4, fixed_abs, tag = 'smem constant byte address 0x4 - core index']
  #allocation1 [shape = 'u32[72,128]{1,0:T(1,128)}', space=vmem, size = 0x9000, scoped, tag = 'internal scratch']
  %s0 = inlined_call_operand.vmem [shape: f32[18,686], index: 0, kind: input, shape index: {}]
  %s1 = inlined_call_operand.vmem [shape: f32[686,21], index: 1, kind: input, shape index: {}]
  %s2 = inlined_call_operand.vmem [shape: f32[6,21,128], index: 2, kind: input, shape index: {}]
  %s3 = inlined_call_operand.vmem [shape: f32[1,128], index: 3, kind: input, shape index: {}]
  %s4 = inlined_call_operand.vmem [shape: f32[8,128], index: 4, kind: output, shape index: {}]
  %s5 = sld [smem:[#allocation0]]
  $region26: #{forward.1} parent=0
    _
  %s7 = ssub.s32 1, %s5
  %s8 = scalar_select 0, %s7, %s5
  // Predicated region
  $region2: #{forward.1} parent=0 // pred_check
    _
  $region3: #{forward.1} parent=0 // pred_check_branch
    %10 = sbr.rel (0) target = $region5
  $region4: #{forward.1} parent=0 // pred_region
    _
  $region5: #{forward.1} parent=0 // pred_fallthru
    _
  // Predicated region
  $region6: #{forward.1} parent=0 // pred_check
    _
  $region7: #{forward.1} parent=0 // pred_check_branch
    %12 = sbr.rel (0) target = $region9
  $region8: #{forward.1} parent=0 // pred_region
    _
  $region9: #{forward.1} parent=0 // pred_fallthru
    _
  // Predicated region
  $region10: #{forward.1} parent=0 // pred_check
    _
  $region11: #{forward.1} parent=0 // pred_check_branch
    %14 = sbr.rel (0) target = $region13
  $region12: #{forward.1} parent=0 // pred_region
    _
  $region13: #{forward.1} parent=0 // pred_fallthru
    _
  // Predicated region
  $region14: #{forward.1} parent=0 // pred_check
    _
  $region15: #{forward.1} parent=0 // pred_check_branch
    %16 = sbr.rel (0) target = $region17
  $region16: #{forward.1} parent=0 // pred_region
    _
  $region17: #{forward.1} parent=0 // pred_fallthru
    _
  %v17 = vld [vmem:[%s0] sm:$0xff]
  %v18 = vld [vmem:[%s0 + $0x8] sm:$0xff]
  %v19 = vld [vmem:[%s0 + $0x10] sm:$0xff]
  %v20 = vld [vmem:[%s0 + $0x18] sm:$0xff]
  %v21 = vld [vmem:[%s0 + $0x20] sm:$0xff]
  %v22 = vld [vmem:[%s0 + $0x28] sm:$0xff]
  %v23 = vld [vmem:[%s0 + $0x30] sm:$0xff]
  %v24 = vld [vmem:[%s0 + $0x38] sm:$0xff]
  %v25 = vld [vmem:[%s0 + $0x40] sm:$0xff]
  %v26 = vld [vmem:[%s0 + $0x48] sm:$0xff]
  %v27 = vld [vmem:[%s0 + $0x50] sm:$0xff]
  %v28 = vld [vmem:[%s0 + $0x58] sm:$0xff]
  %v29 = vld [vmem:[%s0 + $0x60] sm:$0x3]
  %v30 = vld [vmem:[%s0 + $0x68] sm:$0x3]
  %v31 = vld [vmem:[%s0 + $0x70] sm:$0x3]
  %v32 = vld [vmem:[%s0 + $0x78] sm:$0x3]
  %v33 = vld [vmem:[%s0 + $0x80] sm:$0x3]
  %v34 = vld [vmem:[%s0 + $0x88] sm:$0x3]
  %v35 = vld [vmem:[%s1] sm:$0xff]
  %v36 = vld [vmem:[%s1 + $0x8] sm:$0xff]
  %v37 = vld [vmem:[%s1 + $0x10] sm:$0xff]
  %v38 = vld [vmem:[%s1 + $0x18] sm:$0xff]
  %v39 = vld [vmem:[%s1 + $0x20] sm:$0xff]
  %v40 = vld [vmem:[%s1 + $0x28] sm:$0xff]
  %v41 = vld [vmem:[%s1 + $0x30] sm:$0xff]
  %v42 = vld [vmem:[%s1 + $0x38] sm:$0xff]
  %v43 = vld [vmem:[%s1 + $0x40] sm:$0xff]
  %v44 = vld [vmem:[%s1 + $0x48] sm:$0xff]
  %v45 = vld [vmem:[%s1 + $0x50] sm:$0xff]
  %v46 = vld [vmem:[%s1 + $0x58] sm:$0xff]
  %v47 = vld [vmem:[%s1 + $0x60] sm:$0xff]
  %v48 = vld [vmem:[%s1 + $0x68] sm:$0xff]
  %v49 = vld [vmem:[%s1 + $0x70] sm:$0xff]
  %v50 = vld [vmem:[%s1 + $0x78] sm:$0xff]
  %v51 = vld [vmem:[%s1 + $0x80] sm:$0xff]
  %v52 = vld [vmem:[%s1 + $0x88] sm:$0xff]
  %v53 = vld [vmem:[%s1 + $0x90] sm:$0xff]
  %v54 = vld [vmem:[%s1 + $0x98] sm:$0xff]
  %v55 = vld [vmem:[%s1 + $0xa0] sm:$0xff]
  %v56 = vld [vmem:[%s1 + $0xa8] sm:$0xff]
  %v57 = vld [vmem:[%s1 + $0xb0] sm:$0xff]
  %v58 = vld [vmem:[%s1 + $0xb8] sm:$0xff]
  %v59 = vld [vmem:[%s1 + $0xc0] sm:$0xff]
  %v60 = vld [vmem:[%s1 + $0xc8] sm:$0xff]
  %v61 = vld [vmem:[%s1 + $0xd0] sm:$0xff]
  %v62 = vld [vmem:[%s1 + $0xd8] sm:$0xff]
  %v63 = vld [vmem:[%s1 + $0xe0] sm:$0xff]
  %v64 = vld [vmem:[%s1 + $0xe8] sm:$0xff]
  %v65 = vld [vmem:[%s1 + $0xf0] sm:$0xff]
  %v66 = vld [vmem:[%s1 + $0xf8] sm:$0xff]
  %v67 = vld [vmem:[%s1 + $0x100] sm:$0xff]
  %v68 = vld [vmem:[%s1 + $0x108] sm:$0xff]
  %v69 = vld [vmem:[%s1 + $0x110] sm:$0xff]
  %v70 = vld [vmem:[%s1 + $0x118] sm:$0xff]
  %v71 = vld [vmem:[%s1 + $0x120] sm:$0xff]
  %v72 = vld [vmem:[%s1 + $0x128] sm:$0xff]
  %v73 = vld [vmem:[%s1 + $0x130] sm:$0xff]
  %v74 = vld [vmem:[%s1 + $0x138] sm:$0xff]
  %v75 = vld [vmem:[%s1 + $0x140] sm:$0xff]
  %v76 = vld [vmem:[%s1 + $0x148] sm:$0xff]
  %v77 = vld [vmem:[%s1 + $0x150] sm:$0xff]
  %v78 = vld [vmem:[%s1 + $0x158] sm:$0xff]
  %v79 = vld [vmem:[%s1 + $0x160] sm:$0xff]
  %v80 = vld [vmem:[%s1 + $0x168] sm:$0xff]
  %v81 = vld [vmem:[%s1 + $0x170] sm:$0xff]
  %v82 = vld [vmem:[%s1 + $0x178] sm:$0xff]
  %v83 = vld [vmem:[%s1 + $0x180] sm:$0xff]
  %v84 = vld [vmem:[%s1 + $0x188] sm:$0xff]
  %v85 = vld [vmem:[%s1 + $0x190] sm:$0xff]
  %v86 = vld [vmem:[%s1 + $0x198] sm:$0xff]
  %v87 = vld [vmem:[%s1 + $0x1a0] sm:$0xff]
  %v88 = vld [vmem:[%s1 + $0x1a8] sm:$0xff]
  %v89 = vld [vmem:[%s1 + $0x1b0] sm:$0xff]
  %v90 = vld [vmem:[%s1 + $0x1b8] sm:$0xff]
  %v91 = vld [vmem:[%s1 + $0x1c0] sm:$0xff]
  %v92 = vld [vmem:[%s1 + $0x1c8] sm:$0xff]
  %v93 = vld [vmem:[%s1 + $0x1d0] sm:$0xff]
  %v94 = vld [vmem:[%s1 + $0x1d8] sm:$0xff]
  %v95 = vld [vmem:[%s1 + $0x1e0] sm:$0xff]
  %v96 = vld [vmem:[%s1 + $0x1e8] sm:$0xff]
  %v97 = vld [vmem:[%s1 + $0x1f0] sm:$0xff]
  %v98 = vld [vmem:[%s1 + $0x1f8] sm:$0xff]
  %v99 = vld [vmem:[%s1 + $0x200] sm:$0xff]
  %v100 = vld [vmem:[%s1 + $0x208] sm:$0xff]
  %v101 = vld [vmem:[%s1 + $0x210] sm:$0xff]
  %v102 = vld [vmem:[%s1 + $0x218] sm:$0xff]
  %v103 = vld [vmem:[%s1 + $0x220] sm:$0xff]
  %v104 = vld [vmem:[%s1 + $0x228] sm:$0xff]
  %v105 = vld [vmem:[%s1 + $0x230] sm:$0xff]
  %v106 = vld [vmem:[%s1 + $0x238] sm:$0xff]
  %v107 = vld [vmem:[%s1 + $0x240] sm:$0xff]
  %v108 = vld [vmem:[%s1 + $0x248] sm:$0xff]
  %v109 = vld [vmem:[%s1 + $0x250] sm:$0xff]
  %v110 = vld [vmem:[%s1 + $0x258] sm:$0xff]
  %v111 = vld [vmem:[%s1 + $0x260] sm:$0xff]
  %v112 = vld [vmem:[%s1 + $0x268] sm:$0xff]
  %v113 = vld [vmem:[%s1 + $0x270] sm:$0xff]
  %v114 = vld [vmem:[%s1 + $0x278] sm:$0xff]
  %v115 = vld [vmem:[%s1 + $0x280] sm:$0xff]
  %v116 = vld [vmem:[%s1 + $0x288] sm:$0xff]
  %v117 = vld [vmem:[%s1 + $0x290] sm:$0xff]
  %v118 = vld [vmem:[%s1 + $0x298] sm:$0xff]
  %v119 = vld [vmem:[%s1 + $0x2a0] sm:$0xff]
  %v120 = vld [vmem:[%s1 + $0x2a8] sm:$0x3f]
  %vm121 = vcmask 375808
  %v123 = vsel %vm121, %v22, 0
  %v126 = vsel %vm121, %v28, 0
  %v129 = vsel %vm121, %v34, 0
  %vm131 = vcmask 1045504
  %v133 = vsel %vm131, %v120, 0
  %v135 = vand.u32 %v50, 4294901760
  %136 = vmatpush.msra.mxu0 %v135
  %v137 = vand.u32 %v49, 4294901760
  %138 = vmatpush.msra.mxu0 %v137
  %v139 = vand.u32 %v48, 4294901760
  %140 = vmatpush.msra.mxu0 %v139
  %v141 = vand.u32 %v47, 4294901760
  %142 = vmatpush.msra.mxu0 %v141
  %v143 = vand.u32 %v46, 4294901760
  %144 = vmatpush.msra.mxu0 %v143
  %v145 = vand.u32 %v45, 4294901760
  %146 = vmatpush.msra.mxu0 %v145
  %v147 = vand.u32 %v44, 4294901760
  %148 = vmatpush.msra.mxu0 %v147
  %v149 = vand.u32 %v43, 4294901760
  %150 = vmatpush.msra.mxu0 %v149
  %v151 = vand.u32 %v42, 4294901760
  %152 = vmatpush.msra.mxu0 %v151
  %v153 = vand.u32 %v41, 4294901760
  %154 = vmatpush.msra.mxu0 %v153
  %v155 = vand.u32 %v40, 4294901760
  %156 = vmatpush.msra.mxu0 %v155
  %v157 = vand.u32 %v39, 4294901760
  %158 = vmatpush.msra.mxu0 %v157
  %v159 = vand.u32 %v38, 4294901760
  %160 = vmatpush.msra.mxu0 %v159
  %v161 = vand.u32 %v37, 4294901760
  %162 = vmatpush.msra.mxu0 %v161
  %v163 = vand.u32 %v36, 4294901760
  %164 = vmatpush.msra.mxu0 %v163
  %v165 = vand.u32 %v35, 4294901760
  %166 = vmatpush.msra.mxu0 %v165
  %v167 = vand.u32 %v17, 4294901760
  %v168 = vsub.f32 %v17, %v167
  %v169 = vand.u32 %v168, 4294901760
  %v170 = vsub.f32 %v168, %v169
  %v171 = vand.u32 %v170, 4294901760
  %172 = vmatmul.f32.gmra.mxu0 %v171
  %v173 = vpop.f32.mrf.mxu0
  %v174 = vadd.f32 0.0, %v173
  %v175 = vand.u32 %v23, 4294901760
  %v176 = vsub.f32 %v23, %v175
  %v177 = vand.u32 %v176, 4294901760
  %v178 = vsub.f32 %v176, %v177
  %v179 = vand.u32 %v178, 4294901760
  %180 = vmatmul.f32.gmra.mxu0 %v179
  %v181 = vpop.f32.mrf.mxu0
  %v182 = vadd.f32 0.0, %v181
  %v183 = vand.u32 %v29, 4294901760
  %v184 = vsub.f32 %v29, %v183
  %v185 = vand.u32 %v184, 4294901760
  %v186 = vsub.f32 %v184, %v185
  %v187 = vand.u32 %v186, 4294901760
  %188 = vmatmul.f32.gmra.mxu0 %v187
  %v189 = vpop.f32.mrf.mxu0
  %v190 = vadd.f32 0.0, %v189
  %191 = vdwg.mxu0
  %v192 = vand.u32 %v50, 4294901760
  %v193 = vsub.f32 %v50, %v192
  %v194 = vand.u32 %v193, 4294901760
  %v195 = vsub.f32 %v193, %v194
  %v196 = vand.u32 %v195, 4294901760
  %197 = vmatpush.msra.mxu0 %v196
  %v198 = vand.u32 %v49, 4294901760
  %v199 = vsub.f32 %v49, %v198
  %v200 = vand.u32 %v199, 4294901760
  %v201 = vsub.f32 %v199, %v200
  %v202 = vand.u32 %v201, 4294901760
  %203 = vmatpush.msra.mxu0 %v202
  %v204 = vand.u32 %v48, 4294901760
  %v205 = vsub.f32 %v48, %v204
  %v206 = vand.u32 %v205, 4294901760
  %v207 = vsub.f32 %v205, %v206
  %v208 = vand.u32 %v207, 4294901760
  %209 = vmatpush.msra.mxu0 %v208
  %v210 = vand.u32 %v47, 4294901760
  %v211 = vsub.f32 %v47, %v210
  %v212 = vand.u32 %v211, 4294901760
  %v213 = vsub.f32 %v211, %v212
  %v214 = vand.u32 %v213, 4294901760
  %215 = vmatpush.msra.mxu0 %v214
  %v216 = vand.u32 %v46, 4294901760
  %v217 = vsub.f32 %v46, %v216
  %v218 = vand.u32 %v217, 4294901760
  %v219 = vsub.f32 %v217, %v218
  %v220 = vand.u32 %v219, 4294901760
  %221 = vmatpush.msra.mxu0 %v220
  %v222 = vand.u32 %v45, 4294901760
  %v223 = vsub.f32 %v45, %v222
  %v224 = vand.u32 %v223, 4294901760
  %v225 = vsub.f32 %v223, %v224
  %v226 = vand.u32 %v225, 4294901760
  %227 = vmatpush.msra.mxu0 %v226
  %v228 = vand.u32 %v44, 4294901760
  %v229 = vsub.f32 %v44, %v228
  %v230 = vand.u32 %v229, 4294901760
  %v231 = vsub.f32 %v229, %v230
  %v232 = vand.u32 %v231, 4294901760
  %233 = vmatpush.msra.mxu0 %v232
  %v234 = vand.u32 %v43, 4294901760
  %v235 = vsub.f32 %v43, %v234
  %v236 = vand.u32 %v235, 4294901760
  %v237 = vsub.f32 %v235, %v236
  %v238 = vand.u32 %v237, 4294901760
  %239 = vmatpush.msra.mxu0 %v238
  %v240 = vand.u32 %v42, 4294901760
  %v241 = vsub.f32 %v42, %v240
  %v242 = vand.u32 %v241, 4294901760
  %v243 = vsub.f32 %v241, %v242
  %v244 = vand.u32 %v243, 4294901760
  %245 = vmatpush.msra.mxu0 %v244
  %v246 = vand.u32 %v41, 4294901760
  %v247 = vsub.f32 %v41, %v246
  %v248 = vand.u32 %v247, 4294901760
  %v249 = vsub.f32 %v247, %v248
  %v250 = vand.u32 %v249, 4294901760
  %251 = vmatpush.msra.mxu0 %v250
  %v252 = vand.u32 %v40, 4294901760
  %v253 = vsub.f32 %v40, %v252
  %v254 = vand.u32 %v253, 4294901760
  %v255 = vsub.f32 %v253, %v254
  %v256 = vand.u32 %v255, 4294901760
  %257 = vmatpush.msra.mxu0 %v256
  %v258 = vand.u32 %v39, 4294901760
  %v259 = vsub.f32 %v39, %v258
  %v260 = vand.u32 %v259, 4294901760
  %v261 = vsub.f32 %v259, %v260
  %v262 = vand.u32 %v261, 4294901760
  %263 = vmatpush.msra.mxu0 %v262
  %v264 = vand.u32 %v38, 4294901760
  %v265 = vsub.f32 %v38, %v264
  %v266 = vand.u32 %v265, 4294901760
  %v267 = vsub.f32 %v265, %v266
  %v268 = vand.u32 %v267, 4294901760
  %269 = vmatpush.msra.mxu0 %v268
  %v270 = vand.u32 %v37, 4294901760
  %v271 = vsub.f32 %v37, %v270
  %v272 = vand.u32 %v271, 4294901760
  %v273 = vsub.f32 %v271, %v272
  %v274 = vand.u32 %v273, 4294901760
  %275 = vmatpush.msra.mxu0 %v274
  %v276 = vand.u32 %v36, 4294901760
  %v277 = vsub.f32 %v36, %v276
  %v278 = vand.u32 %v277, 4294901760
  %v279 = vsub.f32 %v277, %v278
  %v280 = vand.u32 %v279, 4294901760
  %281 = vmatpush.msra.mxu0 %v280
  %v282 = vand.u32 %v35, 4294901760
  %v283 = vsub.f32 %v35, %v282
  %v284 = vand.u32 %v283, 4294901760
  %v285 = vsub.f32 %v283, %v284
  %v286 = vand.u32 %v285, 4294901760
  %287 = vmatpush.msra.mxu0 %v286
  %v288 = vand.u32 %v17, 4294901760
  %289 = vmatmul.f32.gmra.mxu0 %v288
  %v290 = vpop.f32.mrf.mxu0
  %v291 = vadd.f32 %v174, %v290
  %v292 = vand.u32 %v23, 4294901760
  %293 = vmatmul.f32.gmra.mxu0 %v292
  %v294 = vpop.f32.mrf.mxu0
  %v295 = vadd.f32 %v182, %v294
  %v296 = vand.u32 %v29, 4294901760
  %297 = vmatmul.f32.gmra.mxu0 %v296
  %v298 = vpop.f32.mrf.mxu0
  %v299 = vadd.f32 %v190, %v298
  %300 = vdwg.mxu0
  %v301 = vand.u32 %v50, 4294901760
  %v302 = vsub.f32 %v50, %v301
  %303 = vmatpush.msra.mxu0 %v302
  %v304 = vand.u32 %v49, 4294901760
  %v305 = vsub.f32 %v49, %v304
  %306 = vmatpush.msra.mxu0 %v305
  %v307 = vand.u32 %v48, 4294901760
  %v308 = vsub.f32 %v48, %v307
  %309 = vmatpush.msra.mxu0 %v308
  %v310 = vand.u32 %v47, 4294901760
  %v311 = vsub.f32 %v47, %v310
  %312 = vmatpush.msra.mxu0 %v311
  %v313 = vand.u32 %v46, 4294901760
  %v314 = vsub.f32 %v46, %v313
  %315 = vmatpush.msra.mxu0 %v314
  %v316 = vand.u32 %v45, 4294901760
  %v317 = vsub.f32 %v45, %v316
  %318 = vmatpush.msra.mxu0 %v317
  %v319 = vand.u32 %v44, 4294901760
  %v320 = vsub.f32 %v44, %v319
  %321 = vmatpush.msra.mxu0 %v320
  %v322 = vand.u32 %v43, 4294901760
  %v323 = vsub.f32 %v43, %v322
  %324 = vmatpush.msra.mxu0 %v323
  %v325 = vand.u32 %v42, 4294901760
  %v326 = vsub.f32 %v42, %v325
  %327 = vmatpush.msra.mxu0 %v326
  %v328 = vand.u32 %v41, 4294901760
  %v329 = vsub.f32 %v41, %v328
  %330 = vmatpush.msra.mxu0 %v329
  %v331 = vand.u32 %v40, 4294901760
  %v332 = vsub.f32 %v40, %v331
  %333 = vmatpush.msra.mxu0 %v332
  %v334 = vand.u32 %v39, 4294901760
  %v335 = vsub.f32 %v39, %v334
  %336 = vmatpush.msra.mxu0 %v335
  %v337 = vand.u32 %v38, 4294901760
  %v338 = vsub.f32 %v38, %v337
  %339 = vmatpush.msra.mxu0 %v338
  %v340 = vand.u32 %v37, 4294901760
  %v341 = vsub.f32 %v37, %v340
  %342 = vmatpush.msra.mxu0 %v341
  %v343 = vand.u32 %v36, 4294901760
  %v344 = vsub.f32 %v36, %v343
  %345 = vmatpush.msra.mxu0 %v344
  %v346 = vand.u32 %v35, 4294901760
  %v347 = vsub.f32 %v35, %v346
  %348 = vmatpush.msra.mxu0 %v347
  %v349 = vand.u32 %v17, 4294901760
  %v350 = vsub.f32 %v17, %v349
  %351 = vmatmul.f32.gmra.mxu0 %v350
  %v352 = vpop.f32.mrf.mxu0
  %v353 = vadd.f32 %v291, %v352
  %v354 = vand.u32 %v23, 4294901760
  %v355 = vsub.f32 %v23, %v354
  %356 = vmatmul.f32.gmra.mxu0 %v355
  %v357 = vpop.f32.mrf.mxu0
  %v358 = vadd.f32 %v295, %v357
  %v359 = vand.u32 %v29, 4294901760
  %v360 = vsub.f32 %v29, %v359
  %361 = vmatmul.f32.gmra.mxu0 %v360
  %v362 = vpop.f32.mrf.mxu0
  %v363 = vadd.f32 %v299, %v362
  %364 = vdwg.mxu0
  %v365 = vand.u32 %v50, 4294901760
  %366 = vmatpush.msra.mxu0 %v365
  %v367 = vand.u32 %v49, 4294901760
  %368 = vmatpush.msra.mxu0 %v367
  %v369 = vand.u32 %v48, 4294901760
  %370 = vmatpush.msra.mxu0 %v369
  %v371 = vand.u32 %v47, 4294901760
  %372 = vmatpush.msra.mxu0 %v371
  %v373 = vand.u32 %v46, 4294901760
  %374 = vmatpush.msra.mxu0 %v373
  %v375 = vand.u32 %v45, 4294901760
  %376 = vmatpush.msra.mxu0 %v375
  %v377 = vand.u32 %v44, 4294901760
  %378 = vmatpush.msra.mxu0 %v377
  %v379 = vand.u32 %v43, 4294901760
  %380 = vmatpush.msra.mxu0 %v379
  %v381 = vand.u32 %v42, 4294901760
  %382 = vmatpush.msra.mxu0 %v381
  %v383 = vand.u32 %v41, 4294901760
  %384 = vmatpush.msra.mxu0 %v383
  %v385 = vand.u32 %v40, 4294901760
  %386 = vmatpush.msra.mxu0 %v385
  %v387 = vand.u32 %v39, 4294901760
  %388 = vmatpush.msra.mxu0 %v387
  %v389 = vand.u32 %v38, 4294901760
  %390 = vmatpush.msra.mxu0 %v389
  %v391 = vand.u32 %v37, 4294901760
  %392 = vmatpush.msra.mxu0 %v391
  %v393 = vand.u32 %v36, 4294901760
  %394 = vmatpush.msra.mxu0 %v393
  %v395 = vand.u32 %v35, 4294901760
  %396 = vmatpush.msra.mxu0 %v395
  %v397 = vand.u32 %v17, 4294901760
  %v398 = vsub.f32 %v17, %v397
  %v399 = vand.u32 %v398, 4294901760
  %400 = vmatmul.f32.gmra.mxu0 %v399
  %v401 = vpop.f32.mrf.mxu0
  %v402 = vadd.f32 %v353, %v401
  %v403 = vand.u32 %v23, 4294901760
  %v404 = vsub.f32 %v23, %v403
  %v405 = vand.u32 %v404, 4294901760
  %406 = vmatmul.f32.gmra.mxu0 %v405
  %v407 = vpop.f32.mrf.mxu0
  %v408 = vadd.f32 %v358, %v407
  %v409 = vand.u32 %v29, 4294901760
  %v410 = vsub.f32 %v29, %v409
  %v411 = vand.u32 %v410, 4294901760
  %412 = vmatmul.f32.gmra.mxu0 %v411
  %v413 = vpop.f32.mrf.mxu0
  %v414 = vadd.f32 %v363, %v413
  %415 = vdwg.mxu0
  %v416 = vand.u32 %v50, 4294901760
  %v417 = vsub.f32 %v50, %v416
  %v418 = vand.u32 %v417, 4294901760
  %419 = vmatpush.msra.mxu0 %v418
  %v420 = vand.u32 %v49, 4294901760
  %v421 = vsub.f32 %v49, %v420
  %v422 = vand.u32 %v421, 4294901760
  %423 = vmatpush.msra.mxu0 %v422
  %v424 = vand.u32 %v48, 4294901760
  %v425 = vsub.f32 %v48, %v424
  %v426 = vand.u32 %v425, 4294901760
  %427 = vmatpush.msra.mxu0 %v426
  %v428 = vand.u32 %v47, 4294901760
  %v429 = vsub.f32 %v47, %v428
  %v430 = vand.u32 %v429, 4294901760
  %431 = vmatpush.msra.mxu0 %v430
  %v432 = vand.u32 %v46, 4294901760
  %v433 = vsub.f32 %v46, %v432
  %v434 = vand.u32 %v433, 4294901760
  %435 = vmatpush.msra.mxu0 %v434
  %v436 = vand.u32 %v45, 4294901760
  %v437 = vsub.f32 %v45, %v436
  %v438 = vand.u32 %v437, 4294901760
  %439 = vmatpush.msra.mxu0 %v438
  %v440 = vand.u32 %v44, 4294901760
  %v441 = vsub.f32 %v44, %v440
  %v442 = vand.u32 %v441, 4294901760
  %443 = vmatpush.msra.mxu0 %v442
  %v444 = vand.u32 %v43, 4294901760
  %v445 = vsub.f32 %v43, %v444
  %v446 = vand.u32 %v445, 4294901760
  %447 = vmatpush.msra.mxu0 %v446
  %v448 = vand.u32 %v42, 4294901760
  %v449 = vsub.f32 %v42, %v448
  %v450 = vand.u32 %v449, 4294901760
  %451 = vmatpush.msra.mxu0 %v450
  %v452 = vand.u32 %v41, 4294901760
  %v453 = vsub.f32 %v41, %v452
  %v454 = vand.u32 %v453, 4294901760
  %455 = vmatpush.msra.mxu0 %v454
  %v456 = vand.u32 %v40, 4294901760
  %v457 = vsub.f32 %v40, %v456
  %v458 = vand.u32 %v457, 4294901760
  %459 = vmatpush.msra.mxu0 %v458
  %v460 = vand.u32 %v39, 4294901760
  %v461 = vsub.f32 %v39, %v460
  %v462 = vand.u32 %v461, 4294901760
  %463 = vmatpush.msra.mxu0 %v462
  %v464 = vand.u32 %v38, 4294901760
  %v465 = vsub.f32 %v38, %v464
  %v466 = vand.u32 %v465, 4294901760
  %467 = vmatpush.msra.mxu0 %v466
  %v468 = vand.u32 %v37, 4294901760
  %v469 = vsub.f32 %v37, %v468
  %v470 = vand.u32 %v469, 4294901760
  %471 = vmatpush.msra.mxu0 %v470
  %v472 = vand.u32 %v36, 4294901760
  %v473 = vsub.f32 %v36, %v472
  %v474 = vand.u32 %v473, 4294901760
  %475 = vmatpush.msra.mxu0 %v474
  %v476 = vand.u32 %v35, 4294901760
  %v477 = vsub.f32 %v35, %v476
  %v478 = vand.u32 %v477, 4294901760
  %479 = vmatpush.msra.mxu0 %v478
  %v480 = vand.u32 %v17, 4294901760
  %481 = vmatmul.f32.gmra.mxu0 %v480
  %v482 = vpop.f32.mrf.mxu0
  %v483 = vadd.f32 %v402, %v482
  %v484 = vand.u32 %v23, 4294901760
  %485 = vmatmul.f32.gmra.mxu0 %v484
  %v486 = vpop.f32.mrf.mxu0
  %v487 = vadd.f32 %v408, %v486
  %v488 = vand.u32 %v29, 4294901760
  %489 = vmatmul.f32.gmra.mxu0 %v488
  %v490 = vpop.f32.mrf.mxu0
  %v491 = vadd.f32 %v414, %v490
  %492 = vdwg.mxu0
  %v493 = vand.u32 %v50, 4294901760
  %494 = vmatpush.msra.mxu0 %v493
  %v495 = vand.u32 %v49, 4294901760
  %496 = vmatpush.msra.mxu0 %v495
  %v497 = vand.u32 %v48, 4294901760
  %498 = vmatpush.msra.mxu0 %v497
  %v499 = vand.u32 %v47, 4294901760
  %500 = vmatpush.msra.mxu0 %v499
  %v501 = vand.u32 %v46, 4294901760
  %502 = vmatpush.msra.mxu0 %v501
  %v503 = vand.u32 %v45, 4294901760
  %504 = vmatpush.msra.mxu0 %v503
  %v505 = vand.u32 %v44, 4294901760
  %506 = vmatpush.msra.mxu0 %v505
  %v507 = vand.u32 %v43, 4294901760
  %508 = vmatpush.msra.mxu0 %v507
  %v509 = vand.u32 %v42, 4294901760
  %510 = vmatpush.msra.mxu0 %v509
  %v511 = vand.u32 %v41, 4294901760
  %512 = vmatpush.msra.mxu0 %v511
  %v513 = vand.u32 %v40, 4294901760
  %514 = vmatpush.msra.mxu0 %v513
  %v515 = vand.u32 %v39, 4294901760
  %516 = vmatpush.msra.mxu0 %v515
  %v517 = vand.u32 %v38, 4294901760
  %518 = vmatpush.msra.mxu0 %v517
  %v519 = vand.u32 %v37, 4294901760
  %520 = vmatpush.msra.mxu0 %v519
  %v521 = vand.u32 %v36, 4294901760
  %522 = vmatpush.msra.mxu0 %v521
  %v523 = vand.u32 %v35, 4294901760
  %524 = vmatpush.msra.mxu0 %v523
  %v525 = vand.u32 %v17, 4294901760
  %526 = vmatmul.f32.gmra.mxu0 %v525
  %v527 = vpop.f32.mrf.mxu0
  %v528 = vadd.f32 %v483, %v527
  %v529 = vand.u32 %v23, 4294901760
  %530 = vmatmul.f32.gmra.mxu0 %v529
  %v531 = vpop.f32.mrf.mxu0
  %v532 = vadd.f32 %v487, %v531
  %v533 = vand.u32 %v29, 4294901760
  %534 = vmatmul.f32.gmra.mxu0 %v533
  %v535 = vpop.f32.mrf.mxu0
  %v536 = vadd.f32 %v491, %v535
  %537 = vdwg.mxu0
  %v538 = vand.u32 %v66, 4294901760
  %539 = vmatpush.msra.mxu0 %v538
  %v540 = vand.u32 %v65, 4294901760
  %541 = vmatpush.msra.mxu0 %v540
  %v542 = vand.u32 %v64, 4294901760
  %543 = vmatpush.msra.mxu0 %v542
  %v544 = vand.u32 %v63, 4294901760
  %545 = vmatpush.msra.mxu0 %v544
  %v546 = vand.u32 %v62, 4294901760
  %547 = vmatpush.msra.mxu0 %v546
  %v548 = vand.u32 %v61, 4294901760
  %549 = vmatpush.msra.mxu0 %v548
  %v550 = vand.u32 %v60, 4294901760
  %551 = vmatpush.msra.mxu0 %v550
  %v552 = vand.u32 %v59, 4294901760
  %553 = vmatpush.msra.mxu0 %v552
  %v554 = vand.u32 %v58, 4294901760
  %555 = vmatpush.msra.mxu0 %v554
  %v556 = vand.u32 %v57, 4294901760
  %557 = vmatpush.msra.mxu0 %v556
  %v558 = vand.u32 %v56, 4294901760
  %559 = vmatpush.msra.mxu0 %v558
  %v560 = vand.u32 %v55, 4294901760
  %561 = vmatpush.msra.mxu0 %v560
  %v562 = vand.u32 %v54, 4294901760
  %563 = vmatpush.msra.mxu0 %v562
  %v564 = vand.u32 %v53, 4294901760
  %565 = vmatpush.msra.mxu0 %v564
  %v566 = vand.u32 %v52, 4294901760
  %567 = vmatpush.msra.mxu0 %v566
  %v568 = vand.u32 %v51, 4294901760
  %569 = vmatpush.msra.mxu0 %v568
  %v570 = vand.u32 %v18, 4294901760
  %v571 = vsub.f32 %v18, %v570
  %v572 = vand.u32 %v571, 4294901760
  %v573 = vsub.f32 %v571, %v572
  %v574 = vand.u32 %v573, 4294901760
  %575 = vmatmul.f32.gmra.mxu0 %v574
  %v576 = vpop.f32.mrf.mxu0
  %v577 = vadd.f32 %v528, %v576
  %v578 = vand.u32 %v24, 4294901760
  %v579 = vsub.f32 %v24, %v578
  %v580 = vand.u32 %v579, 4294901760
  %v581 = vsub.f32 %v579, %v580
  %v582 = vand.u32 %v581, 4294901760
  %583 = vmatmul.f32.gmra.mxu0 %v582
  %v584 = vpop.f32.mrf.mxu0
  %v585 = vadd.f32 %v532, %v584
  %v586 = vand.u32 %v30, 4294901760
  %v587 = vsub.f32 %v30, %v586
  %v588 = vand.u32 %v587, 4294901760
  %v589 = vsub.f32 %v587, %v588
  %v590 = vand.u32 %v589, 4294901760
  %591 = vmatmul.f32.gmra.mxu0 %v590
  %v592 = vpop.f32.mrf.mxu0
  %v593 = vadd.f32 %v536, %v592
  %594 = vdwg.mxu0
  %v595 = vand.u32 %v66, 4294901760
  %v596 = vsub.f32 %v66, %v595
  %v597 = vand.u32 %v596, 4294901760
  %v598 = vsub.f32 %v596, %v597
  %v599 = vand.u32 %v598, 4294901760
  %600 = vmatpush.msra.mxu0 %v599
  %v601 = vand.u32 %v65, 4294901760
  %v602 = vsub.f32 %v65, %v601
  %v603 = vand.u32 %v602, 4294901760
  %v604 = vsub.f32 %v602, %v603
  %v605 = vand.u32 %v604, 4294901760
  %606 = vmatpush.msra.mxu0 %v605
  %v607 = vand.u32 %v64, 4294901760
  %v608 = vsub.f32 %v64, %v607
  %v609 = vand.u32 %v608, 4294901760
  %v610 = vsub.f32 %v608, %v609
  %v611 = vand.u32 %v610, 4294901760
  %612 = vmatpush.msra.mxu0 %v611
  %v613 = vand.u32 %v63, 4294901760
  %v614 = vsub.f32 %v63, %v613
  %v615 = vand.u32 %v614, 4294901760
  %v616 = vsub.f32 %v614, %v615
  %v617 = vand.u32 %v616, 4294901760
  %618 = vmatpush.msra.mxu0 %v617
  %v619 = vand.u32 %v62, 4294901760
  %v620 = vsub.f32 %v62, %v619
  %v621 = vand.u32 %v620, 4294901760
  %v622 = vsub.f32 %v620, %v621
  %v623 = vand.u32 %v622, 4294901760
  %624 = vmatpush.msra.mxu0 %v623
  %v625 = vand.u32 %v61, 4294901760
  %v626 = vsub.f32 %v61, %v625
  %v627 = vand.u32 %v626, 4294901760
  %v628 = vsub.f32 %v626, %v627
  %v629 = vand.u32 %v628, 4294901760
  %630 = vmatpush.msra.mxu0 %v629
  %v631 = vand.u32 %v60, 4294901760
  %v632 = vsub.f32 %v60, %v631
  %v633 = vand.u32 %v632, 4294901760
  %v634 = vsub.f32 %v632, %v633
  %v635 = vand.u32 %v634, 4294901760
  %636 = vmatpush.msra.mxu0 %v635
  %v637 = vand.u32 %v59, 4294901760
  %v638 = vsub.f32 %v59, %v637
  %v639 = vand.u32 %v638, 4294901760
  %v640 = vsub.f32 %v638, %v639
  %v641 = vand.u32 %v640, 4294901760
  %642 = vmatpush.msra.mxu0 %v641
  %v643 = vand.u32 %v58, 4294901760
  %v644 = vsub.f32 %v58, %v643
  %v645 = vand.u32 %v644, 4294901760
  %v646 = vsub.f32 %v644, %v645
  %v647 = vand.u32 %v646, 4294901760
  %648 = vmatpush.msra.mxu0 %v647
  %v649 = vand.u32 %v57, 4294901760
  %v650 = vsub.f32 %v57, %v649
  %v651 = vand.u32 %v650, 4294901760
  %v652 = vsub.f32 %v650, %v651
  %v653 = vand.u32 %v652, 4294901760
  %654 = vmatpush.msra.mxu0 %v653
  %v655 = vand.u32 %v56, 4294901760
  %v656 = vsub.f32 %v56, %v655
  %v657 = vand.u32 %v656, 4294901760
  %v658 = vsub.f32 %v656, %v657
  %v659 = vand.u32 %v658, 4294901760
  %660 = vmatpush.msra.mxu0 %v659
  %v661 = vand.u32 %v55, 4294901760
  %v662 = vsub.f32 %v55, %v661
  %v663 = vand.u32 %v662, 4294901760
  %v664 = vsub.f32 %v662, %v663
  %v665 = vand.u32 %v664, 4294901760
  %666 = vmatpush.msra.mxu0 %v665
  %v667 = vand.u32 %v54, 4294901760
  %v668 = vsub.f32 %v54, %v667
  %v669 = vand.u32 %v668, 4294901760
  %v670 = vsub.f32 %v668, %v669
  %v671 = vand.u32 %v670, 4294901760
  %672 = vmatpush.msra.mxu0 %v671
  %v673 = vand.u32 %v53, 4294901760
  %v674 = vsub.f32 %v53, %v673
  %v675 = vand.u32 %v674, 4294901760
  %v676 = vsub.f32 %v674, %v675
  %v677 = vand.u32 %v676, 4294901760
  %678 = vmatpush.msra.mxu0 %v677
  %v679 = vand.u32 %v52, 4294901760
  %v680 = vsub.f32 %v52, %v679
  %v681 = vand.u32 %v680, 4294901760
  %v682 = vsub.f32 %v680, %v681
  %v683 = vand.u32 %v682, 4294901760
  %684 = vmatpush.msra.mxu0 %v683
  %v685 = vand.u32 %v51, 4294901760
  %v686 = vsub.f32 %v51, %v685
  %v687 = vand.u32 %v686, 4294901760
  %v688 = vsub.f32 %v686, %v687
  %v689 = vand.u32 %v688, 4294901760
  %690 = vmatpush.msra.mxu0 %v689
  %v691 = vand.u32 %v18, 4294901760
  %692 = vmatmul.f32.gmra.mxu0 %v691
  %v693 = vpop.f32.mrf.mxu0
  %v694 = vadd.f32 %v577, %v693
  %v695 = vand.u32 %v24, 4294901760
  %696 = vmatmul.f32.gmra.mxu0 %v695
  %v697 = vpop.f32.mrf.mxu0
  %v698 = vadd.f32 %v585, %v697
  %v699 = vand.u32 %v30, 4294901760
  %700 = vmatmul.f32.gmra.mxu0 %v699
  %v701 = vpop.f32.mrf.mxu0
  %v702 = vadd.f32 %v593, %v701
  %703 = vdwg.mxu0
  %v704 = vand.u32 %v66, 4294901760
  %v705 = vsub.f32 %v66, %v704
  %706 = vmatpush.msra.mxu0 %v705
  %v707 = vand.u32 %v65, 4294901760
  %v708 = vsub.f32 %v65, %v707
  %709 = vmatpush.msra.mxu0 %v708
  %v710 = vand.u32 %v64, 4294901760
  %v711 = vsub.f32 %v64, %v710
  %712 = vmatpush.msra.mxu0 %v711
  %v713 = vand.u32 %v63, 4294901760
  %v714 = vsub.f32 %v63, %v713
  %715 = vmatpush.msra.mxu0 %v714
  %v716 = vand.u32 %v62, 4294901760
  %v717 = vsub.f32 %v62, %v716
  %718 = vmatpush.msra.mxu0 %v717
  %v719 = vand.u32 %v61, 4294901760
  %v720 = vsub.f32 %v61, %v719
  %721 = vmatpush.msra.mxu0 %v720
  %v722 = vand.u32 %v60, 4294901760
  %v723 = vsub.f32 %v60, %v722
  %724 = vmatpush.msra.mxu0 %v723
  %v725 = vand.u32 %v59, 4294901760
  %v726 = vsub.f32 %v59, %v725
  %727 = vmatpush.msra.mxu0 %v726
  %v728 = vand.u32 %v58, 4294901760
  %v729 = vsub.f32 %v58, %v728
  %730 = vmatpush.msra.mxu0 %v729
  %v731 = vand.u32 %v57, 4294901760
  %v732 = vsub.f32 %v57, %v731
  %733 = vmatpush.msra.mxu0 %v732
  %v734 = vand.u32 %v56, 4294901760
  %v735 = vsub.f32 %v56, %v734
  %736 = vmatpush.msra.mxu0 %v735
  %v737 = vand.u32 %v55, 4294901760
  %v738 = vsub.f32 %v55, %v737
  %739 = vmatpush.msra.mxu0 %v738
  %v740 = vand.u32 %v54, 4294901760
  %v741 = vsub.f32 %v54, %v740
  %742 = vmatpush.msra.mxu0 %v741
  %v743 = vand.u32 %v53, 4294901760
  %v744 = vsub.f32 %v53, %v743
  %745 = vmatpush.msra.mxu0 %v744
  %v746 = vand.u32 %v52, 4294901760
  %v747 = vsub.f32 %v52, %v746
  %748 = vmatpush.msra.mxu0 %v747
  %v749 = vand.u32 %v51, 4294901760
  %v750 = vsub.f32 %v51, %v749
  %751 = vmatpush.msra.mxu0 %v750
  %v752 = vand.u32 %v18, 4294901760
  %v753 = vsub.f32 %v18, %v752
  %754 = vmatmul.f32.gmra.mxu0 %v753
  %v755 = vpop.f32.mrf.mxu0
  %v756 = vadd.f32 %v694, %v755
  %v757 = vand.u32 %v24, 4294901760
  %v758 = vsub.f32 %v24, %v757
  %759 = vmatmul.f32.gmra.mxu0 %v758
  %v760 = vpop.f32.mrf.mxu0
  %v761 = vadd.f32 %v698, %v760
  %v762 = vand.u32 %v30, 4294901760
  %v763 = vsub.f32 %v30, %v762
  %764 = vmatmul.f32.gmra.mxu0 %v763
  %v765 = vpop.f32.mrf.mxu0
  %v766 = vadd.f32 %v702, %v765
  %767 = vdwg.mxu0
  %v768 = vand.u32 %v66, 4294901760
  %769 = vmatpush.msra.mxu0 %v768
  %v770 = vand.u32 %v65, 4294901760
  %771 = vmatpush.msra.mxu0 %v770
  %v772 = vand.u32 %v64, 4294901760
  %773 = vmatpush.msra.mxu0 %v772
  %v774 = vand.u32 %v63, 4294901760
  %775 = vmatpush.msra.mxu0 %v774
  %v776 = vand.u32 %v62, 4294901760
  %777 = vmatpush.msra.mxu0 %v776
  %v778 = vand.u32 %v61, 4294901760
  %779 = vmatpush.msra.mxu0 %v778
  %v780 = vand.u32 %v60, 4294901760
  %781 = vmatpush.msra.mxu0 %v780
  %v782 = vand.u32 %v59, 4294901760
  %783 = vmatpush.msra.mxu0 %v782
  %v784 = vand.u32 %v58, 4294901760
  %785 = vmatpush.msra.mxu0 %v784
  %v786 = vand.u32 %v57, 4294901760
  %787 = vmatpush.msra.mxu0 %v786
  %v788 = vand.u32 %v56, 4294901760
  %789 = vmatpush.msra.mxu0 %v788
  %v790 = vand.u32 %v55, 4294901760
  %791 = vmatpush.msra.mxu0 %v790
  %v792 = vand.u32 %v54, 4294901760
  %793 = vmatpush.msra.mxu0 %v792
  %v794 = vand.u32 %v53, 4294901760
  %795 = vmatpush.msra.mxu0 %v794
  %v796 = vand.u32 %v52, 4294901760
  %797 = vmatpush.msra.mxu0 %v796
  %v798 = vand.u32 %v51, 4294901760
  %799 = vmatpush.msra.mxu0 %v798
  %v800 = vand.u32 %v18, 4294901760
  %v801 = vsub.f32 %v18, %v800
  %v802 = vand.u32 %v801, 4294901760
  %803 = vmatmul.f32.gmra.mxu0 %v802
  %v804 = vpop.f32.mrf.mxu0
  %v805 = vadd.f32 %v756, %v804
  %v806 = vand.u32 %v24, 4294901760
  %v807 = vsub.f32 %v24, %v806
  %v808 = vand.u32 %v807, 4294901760
  %809 = vmatmul.f32.gmra.mxu0 %v808
  %v810 = vpop.f32.mrf.mxu0
  %v811 = vadd.f32 %v761, %v810
  %v812 = vand.u32 %v30, 4294901760
  %v813 = vsub.f32 %v30, %v812
  %v814 = vand.u32 %v813, 4294901760
  %815 = vmatmul.f32.gmra.mxu0 %v814
  %v816 = vpop.f32.mrf.mxu0
  %v817 = vadd.f32 %v766, %v816
  %818 = vdwg.mxu0
  %v819 = vand.u32 %v66, 4294901760
  %v820 = vsub.f32 %v66, %v819
  %v821 = vand.u32 %v820, 4294901760
  %822 = vmatpush.msra.mxu0 %v821
  %v823 = vand.u32 %v65, 4294901760
  %v824 = vsub.f32 %v65, %v823
  %v825 = vand.u32 %v824, 4294901760
  %826 = vmatpush.msra.mxu0 %v825
  %v827 = vand.u32 %v64, 4294901760
  %v828 = vsub.f32 %v64, %v827
  %v829 = vand.u32 %v828, 4294901760
  %830 = vmatpush.msra.mxu0 %v829
  %v831 = vand.u32 %v63, 4294901760
  %v832 = vsub.f32 %v63, %v831
  %v833 = vand.u32 %v832, 4294901760
  %834 = vmatpush.msra.mxu0 %v833
  %v835 = vand.u32 %v62, 4294901760
  %v836 = vsub.f32 %v62, %v835
  %v837 = vand.u32 %v836, 4294901760
  %838 = vmatpush.msra.mxu0 %v837
  %v839 = vand.u32 %v61, 4294901760
  %v840 = vsub.f32 %v61, %v839
  %v841 = vand.u32 %v840, 4294901760
  %842 = vmatpush.msra.mxu0 %v841
  %v843 = vand.u32 %v60, 4294901760
  %v844 = vsub.f32 %v60, %v843
  %v845 = vand.u32 %v844, 4294901760
  %846 = vmatpush.msra.mxu0 %v845
  %v847 = vand.u32 %v59, 4294901760
  %v848 = vsub.f32 %v59, %v847
  %v849 = vand.u32 %v848, 4294901760
  %850 = vmatpush.msra.mxu0 %v849
  %v851 = vand.u32 %v58, 4294901760
  %v852 = vsub.f32 %v58, %v851
  %v853 = vand.u32 %v852, 4294901760
  %854 = vmatpush.msra.mxu0 %v853
  %v855 = vand.u32 %v57, 4294901760
  %v856 = vsub.f32 %v57, %v855
  %v857 = vand.u32 %v856, 4294901760
  %858 = vmatpush.msra.mxu0 %v857
  %v859 = vand.u32 %v56, 4294901760
  %v860 = vsub.f32 %v56, %v859
  %v861 = vand.u32 %v860, 4294901760
  %862 = vmatpush.msra.mxu0 %v861
  %v863 = vand.u32 %v55, 4294901760
  %v864 = vsub.f32 %v55, %v863
  %v865 = vand.u32 %v864, 4294901760
  %866 = vmatpush.msra.mxu0 %v865
  %v867 = vand.u32 %v54, 4294901760
  %v868 = vsub.f32 %v54, %v867
  %v869 = vand.u32 %v868, 4294901760
  %870 = vmatpush.msra.mxu0 %v869
  %v871 = vand.u32 %v53, 4294901760
  %v872 = vsub.f32 %v53, %v871
  %v873 = vand.u32 %v872, 4294901760
  %874 = vmatpush.msra.mxu0 %v873
  %v875 = vand.u32 %v52, 4294901760
  %v876 = vsub.f32 %v52, %v875
  %v877 = vand.u32 %v876, 4294901760
  %878 = vmatpush.msra.mxu0 %v877
  %v879 = vand.u32 %v51, 4294901760
  %v880 = vsub.f32 %v51, %v879
  %v881 = vand.u32 %v880, 4294901760
  %882 = vmatpush.msra.mxu0 %v881
  %v883 = vand.u32 %v18, 4294901760
  %884 = vmatmul.f32.gmra.mxu0 %v883
  %v885 = vpop.f32.mrf.mxu0
  %v886 = vadd.f32 %v805, %v885
  %v887 = vand.u32 %v24, 4294901760
  %888 = vmatmul.f32.gmra.mxu0 %v887
  %v889 = vpop.f32.mrf.mxu0
  %v890 = vadd.f32 %v811, %v889
  %v891 = vand.u32 %v30, 4294901760
  %892 = vmatmul.f32.gmra.mxu0 %v891
  %v893 = vpop.f32.mrf.mxu0
  %v894 = vadd.f32 %v817, %v893
  %895 = vdwg.mxu0
  %v896 = vand.u32 %v66, 4294901760
  %897 = vmatpush.msra.mxu0 %v896
  %v898 = vand.u32 %v65, 4294901760
  %899 = vmatpush.msra.mxu0 %v898
  %v900 = vand.u32 %v64, 4294901760
  %901 = vmatpush.msra.mxu0 %v900
  %v902 = vand.u32 %v63, 4294901760
  %903 = vmatpush.msra.mxu0 %v902
  %v904 = vand.u32 %v62, 4294901760
  %905 = vmatpush.msra.mxu0 %v904
  %v906 = vand.u32 %v61, 4294901760
  %907 = vmatpush.msra.mxu0 %v906
  %v908 = vand.u32 %v60, 4294901760
  %909 = vmatpush.msra.mxu0 %v908
  %v910 = vand.u32 %v59, 4294901760
  %911 = vmatpush.msra.mxu0 %v910
  %v912 = vand.u32 %v58, 4294901760
  %913 = vmatpush.msra.mxu0 %v912
  %v914 = vand.u32 %v57, 4294901760
  %915 = vmatpush.msra.mxu0 %v914
  %v916 = vand.u32 %v56, 4294901760
  %917 = vmatpush.msra.mxu0 %v916
  %v918 = vand.u32 %v55, 4294901760
  %919 = vmatpush.msra.mxu0 %v918
  %v920 = vand.u32 %v54, 4294901760
  %921 = vmatpush.msra.mxu0 %v920
  %v922 = vand.u32 %v53, 4294901760
  %923 = vmatpush.msra.mxu0 %v922
  %v924 = vand.u32 %v52, 4294901760
  %925 = vmatpush.msra.mxu0 %v924
  %v926 = vand.u32 %v51, 4294901760
  %927 = vmatpush.msra.mxu0 %v926
  %v928 = vand.u32 %v18, 4294901760
  %929 = vmatmul.f32.gmra.mxu0 %v928
  %v930 = vpop.f32.mrf.mxu0
  %v931 = vadd.f32 %v886, %v930
  %v932 = vand.u32 %v24, 4294901760
  %933 = vmatmul.f32.gmra.mxu0 %v932
  %v934 = vpop.f32.mrf.mxu0
  %v935 = vadd.f32 %v890, %v934
  %v936 = vand.u32 %v30, 4294901760
  %937 = vmatmul.f32.gmra.mxu0 %v936
  %v938 = vpop.f32.mrf.mxu0
  %v939 = vadd.f32 %v894, %v938
  %940 = vdwg.mxu0
  %v941 = vand.u32 %v82, 4294901760
  %942 = vmatpush.msra.mxu0 %v941
  %v943 = vand.u32 %v81, 4294901760
  %944 = vmatpush.msra.mxu0 %v943
  %v945 = vand.u32 %v80, 4294901760
  %946 = vmatpush.msra.mxu0 %v945
  %v947 = vand.u32 %v79, 4294901760
  %948 = vmatpush.msra.mxu0 %v947
  %v949 = vand.u32 %v78, 4294901760
  %950 = vmatpush.msra.mxu0 %v949
  %v951 = vand.u32 %v77, 4294901760
  %952 = vmatpush.msra.mxu0 %v951
  %v953 = vand.u32 %v76, 4294901760
  %954 = vmatpush.msra.mxu0 %v953
  %v955 = vand.u32 %v75, 4294901760
  %956 = vmatpush.msra.mxu0 %v955
  %v957 = vand.u32 %v74, 4294901760
  %958 = vmatpush.msra.mxu0 %v957
  %v959 = vand.u32 %v73, 4294901760
  %960 = vmatpush.msra.mxu0 %v959
  %v961 = vand.u32 %v72, 4294901760
  %962 = vmatpush.msra.mxu0 %v961
  %v963 = vand.u32 %v71, 4294901760
  %964 = vmatpush.msra.mxu0 %v963
  %v965 = vand.u32 %v70, 4294901760
  %966 = vmatpush.msra.mxu0 %v965
  %v967 = vand.u32 %v69, 4294901760
  %968 = vmatpush.msra.mxu0 %v967
  %v969 = vand.u32 %v68, 4294901760
  %970 = vmatpush.msra.mxu0 %v969
  %v971 = vand.u32 %v67, 4294901760
  %972 = vmatpush.msra.mxu0 %v971
  %v973 = vand.u32 %v19, 4294901760
  %v974 = vsub.f32 %v19, %v973
  %v975 = vand.u32 %v974, 4294901760
  %v976 = vsub.f32 %v974, %v975
  %v977 = vand.u32 %v976, 4294901760
  %978 = vmatmul.f32.gmra.mxu0 %v977
  %v979 = vpop.f32.mrf.mxu0
  %v980 = vadd.f32 %v931, %v979
  %v981 = vand.u32 %v25, 4294901760
  %v982 = vsub.f32 %v25, %v981
  %v983 = vand.u32 %v982, 4294901760
  %v984 = vsub.f32 %v982, %v983
  %v985 = vand.u32 %v984, 4294901760
  %986 = vmatmul.f32.gmra.mxu0 %v985
  %v987 = vpop.f32.mrf.mxu0
  %v988 = vadd.f32 %v935, %v987
  %v989 = vand.u32 %v31, 4294901760
  %v990 = vsub.f32 %v31, %v989
  %v991 = vand.u32 %v990, 4294901760
  %v992 = vsub.f32 %v990, %v991
  %v993 = vand.u32 %v992, 4294901760
  %994 = vmatmul.f32.gmra.mxu0 %v993
  %v995 = vpop.f32.mrf.mxu0
  %v996 = vadd.f32 %v939, %v995
  %997 = vdwg.mxu0
  %v998 = vand.u32 %v82, 4294901760
  %v999 = vsub.f32 %v82, %v998
  %v1000 = vand.u32 %v999, 4294901760
  %v1001 = vsub.f32 %v999, %v1000
  %v1002 = vand.u32 %v1001, 4294901760
  %1003 = vmatpush.msra.mxu0 %v1002
  %v1004 = vand.u32 %v81, 4294901760
  %v1005 = vsub.f32 %v81, %v1004
  %v1006 = vand.u32 %v1005, 4294901760
  %v1007 = vsub.f32 %v1005, %v1006
  %v1008 = vand.u32 %v1007, 4294901760
  %1009 = vmatpush.msra.mxu0 %v1008
  %v1010 = vand.u32 %v80, 4294901760
  %v1011 = vsub.f32 %v80, %v1010
  %v1012 = vand.u32 %v1011, 4294901760
  %v1013 = vsub.f32 %v1011, %v1012
  %v1014 = vand.u32 %v1013, 4294901760
  %1015 = vmatpush.msra.mxu0 %v1014
  %v1016 = vand.u32 %v79, 4294901760
  %v1017 = vsub.f32 %v79, %v1016
  %v1018 = vand.u32 %v1017, 4294901760
  %v1019 = vsub.f32 %v1017, %v1018
  %v1020 = vand.u32 %v1019, 4294901760
  %1021 = vmatpush.msra.mxu0 %v1020
  %v1022 = vand.u32 %v78, 4294901760
  %v1023 = vsub.f32 %v78, %v1022
  %v1024 = vand.u32 %v1023, 4294901760
  %v1025 = vsub.f32 %v1023, %v1024
  %v1026 = vand.u32 %v1025, 4294901760
  %1027 = vmatpush.msra.mxu0 %v1026
  %v1028 = vand.u32 %v77, 4294901760
  %v1029 = vsub.f32 %v77, %v1028
  %v1030 = vand.u32 %v1029, 4294901760
  %v1031 = vsub.f32 %v1029, %v1030
  %v1032 = vand.u32 %v1031, 4294901760
  %1033 = vmatpush.msra.mxu0 %v1032
  %v1034 = vand.u32 %v76, 4294901760
  %v1035 = vsub.f32 %v76, %v1034
  %v1036 = vand.u32 %v1035, 4294901760
  %v1037 = vsub.f32 %v1035, %v1036
  %v1038 = vand.u32 %v1037, 4294901760
  %1039 = vmatpush.msra.mxu0 %v1038
  %v1040 = vand.u32 %v75, 4294901760
  %v1041 = vsub.f32 %v75, %v1040
  %v1042 = vand.u32 %v1041, 4294901760
  %v1043 = vsub.f32 %v1041, %v1042
  %v1044 = vand.u32 %v1043, 4294901760
  %1045 = vmatpush.msra.mxu0 %v1044
  %v1046 = vand.u32 %v74, 4294901760
  %v1047 = vsub.f32 %v74, %v1046
  %v1048 = vand.u32 %v1047, 4294901760
  %v1049 = vsub.f32 %v1047, %v1048
  %v1050 = vand.u32 %v1049, 4294901760
  %1051 = vmatpush.msra.mxu0 %v1050
  %v1052 = vand.u32 %v73, 4294901760
  %v1053 = vsub.f32 %v73, %v1052
  %v1054 = vand.u32 %v1053, 4294901760
  %v1055 = vsub.f32 %v1053, %v1054
  %v1056 = vand.u32 %v1055, 4294901760
  %1057 = vmatpush.msra.mxu0 %v1056
  %v1058 = vand.u32 %v72, 4294901760
  %v1059 = vsub.f32 %v72, %v1058
  %v1060 = vand.u32 %v1059, 4294901760
  %v1061 = vsub.f32 %v1059, %v1060
  %v1062 = vand.u32 %v1061, 4294901760
  %1063 = vmatpush.msra.mxu0 %v1062
  %v1064 = vand.u32 %v71, 4294901760
  %v1065 = vsub.f32 %v71, %v1064
  %v1066 = vand.u32 %v1065, 4294901760
  %v1067 = vsub.f32 %v1065, %v1066
  %v1068 = vand.u32 %v1067, 4294901760
  %1069 = vmatpush.msra.mxu0 %v1068
  %v1070 = vand.u32 %v70, 4294901760
  %v1071 = vsub.f32 %v70, %v1070
  %v1072 = vand.u32 %v1071, 4294901760
  %v1073 = vsub.f32 %v1071, %v1072
  %v1074 = vand.u32 %v1073, 4294901760
  %1075 = vmatpush.msra.mxu0 %v1074
  %v1076 = vand.u32 %v69, 4294901760
  %v1077 = vsub.f32 %v69, %v1076
  %v1078 = vand.u32 %v1077, 4294901760
  %v1079 = vsub.f32 %v1077, %v1078
  %v1080 = vand.u32 %v1079, 4294901760
  %1081 = vmatpush.msra.mxu0 %v1080
  %v1082 = vand.u32 %v68, 4294901760
  %v1083 = vsub.f32 %v68, %v1082
  %v1084 = vand.u32 %v1083, 4294901760
  %v1085 = vsub.f32 %v1083, %v1084
  %v1086 = vand.u32 %v1085, 4294901760
  %1087 = vmatpush.msra.mxu0 %v1086
  %v1088 = vand.u32 %v67, 4294901760
  %v1089 = vsub.f32 %v67, %v1088
  %v1090 = vand.u32 %v1089, 4294901760
  %v1091 = vsub.f32 %v1089, %v1090
  %v1092 = vand.u32 %v1091, 4294901760
  %1093 = vmatpush.msra.mxu0 %v1092
  %v1094 = vand.u32 %v19, 4294901760
  %1095 = vmatmul.f32.gmra.mxu0 %v1094
  %v1096 = vpop.f32.mrf.mxu0
  %v1097 = vadd.f32 %v980, %v1096
  %v1098 = vand.u32 %v25, 4294901760
  %1099 = vmatmul.f32.gmra.mxu0 %v1098
  %v1100 = vpop.f32.mrf.mxu0
  %v1101 = vadd.f32 %v988, %v1100
  %v1102 = vand.u32 %v31, 4294901760
  %1103 = vmatmul.f32.gmra.mxu0 %v1102
  %v1104 = vpop.f32.mrf.mxu0
  %v1105 = vadd.f32 %v996, %v1104
  %1106 = vdwg.mxu0
  %v1107 = vand.u32 %v82, 4294901760
  %v1108 = vsub.f32 %v82, %v1107
  %1109 = vmatpush.msra.mxu0 %v1108
  %v1110 = vand.u32 %v81, 4294901760
  %v1111 = vsub.f32 %v81, %v1110
  %1112 = vmatpush.msra.mxu0 %v1111
  %v1113 = vand.u32 %v80, 4294901760
  %v1114 = vsub.f32 %v80, %v1113
  %1115 = vmatpush.msra.mxu0 %v1114
  %v1116 = vand.u32 %v79, 4294901760
  %v1117 = vsub.f32 %v79, %v1116
  %1118 = vmatpush.msra.mxu0 %v1117
  %v1119 = vand.u32 %v78, 4294901760
  %v1120 = vsub.f32 %v78, %v1119
  %1121 = vmatpush.msra.mxu0 %v1120
  %v1122 = vand.u32 %v77, 4294901760
  %v1123 = vsub.f32 %v77, %v1122
  %1124 = vmatpush.msra.mxu0 %v1123
  %v1125 = vand.u32 %v76, 4294901760
  %v1126 = vsub.f32 %v76, %v1125
  %1127 = vmatpush.msra.mxu0 %v1126
  %v1128 = vand.u32 %v75, 4294901760
  %v1129 = vsub.f32 %v75, %v1128
  %1130 = vmatpush.msra.mxu0 %v1129
  %v1131 = vand.u32 %v74, 4294901760
  %v1132 = vsub.f32 %v74, %v1131
  %1133 = vmatpush.msra.mxu0 %v1132
  %v1134 = vand.u32 %v73, 4294901760
  %v1135 = vsub.f32 %v73, %v1134
  %1136 = vmatpush.msra.mxu0 %v1135
  %v1137 = vand.u32 %v72, 4294901760
  %v1138 = vsub.f32 %v72, %v1137
  %1139 = vmatpush.msra.mxu0 %v1138
  %v1140 = vand.u32 %v71, 4294901760
  %v1141 = vsub.f32 %v71, %v1140
  %1142 = vmatpush.msra.mxu0 %v1141
  %v1143 = vand.u32 %v70, 4294901760
  %v1144 = vsub.f32 %v70, %v1143
  %1145 = vmatpush.msra.mxu0 %v1144
  %v1146 = vand.u32 %v69, 4294901760
  %v1147 = vsub.f32 %v69, %v1146
  %1148 = vmatpush.msra.mxu0 %v1147
  %v1149 = vand.u32 %v68, 4294901760
  %v1150 = vsub.f32 %v68, %v1149
  %1151 = vmatpush.msra.mxu0 %v1150
  %v1152 = vand.u32 %v67, 4294901760
  %v1153 = vsub.f32 %v67, %v1152
  %1154 = vmatpush.msra.mxu0 %v1153
  %v1155 = vand.u32 %v19, 4294901760
  %v1156 = vsub.f32 %v19, %v1155
  %1157 = vmatmul.f32.gmra.mxu0 %v1156
  %v1158 = vpop.f32.mrf.mxu0
  %v1159 = vadd.f32 %v1097, %v1158
  %v1160 = vand.u32 %v25, 4294901760
  %v1161 = vsub.f32 %v25, %v1160
  %1162 = vmatmul.f32.gmra.mxu0 %v1161
  %v1163 = vpop.f32.mrf.mxu0
  %v1164 = vadd.f32 %v1101, %v1163
  %v1165 = vand.u32 %v31, 4294901760
  %v1166 = vsub.f32 %v31, %v1165
  %1167 = vmatmul.f32.gmra.mxu0 %v1166
  %v1168 = vpop.f32.mrf.mxu0
  %v1169 = vadd.f32 %v1105, %v1168
  %1170 = vdwg.mxu0
  %v1171 = vand.u32 %v82, 4294901760
  %1172 = vmatpush.msra.mxu0 %v1171
  %v1173 = vand.u32 %v81, 4294901760
  %1174 = vmatpush.msra.mxu0 %v1173
  %v1175 = vand.u32 %v80, 4294901760
  %1176 = vmatpush.msra.mxu0 %v1175
  %v1177 = vand.u32 %v79, 4294901760
  %1178 = vmatpush.msra.mxu0 %v1177
  %v1179 = vand.u32 %v78, 4294901760
  %1180 = vmatpush.msra.mxu0 %v1179
  %v1181 = vand.u32 %v77, 4294901760
  %1182 = vmatpush.msra.mxu0 %v1181
  %v1183 = vand.u32 %v76, 4294901760
  %1184 = vmatpush.msra.mxu0 %v1183
  %v1185 = vand.u32 %v75, 4294901760
  %1186 = vmatpush.msra.mxu0 %v1185
  %v1187 = vand.u32 %v74, 4294901760
  %1188 = vmatpush.msra.mxu0 %v1187
  %v1189 = vand.u32 %v73, 4294901760
  %1190 = vmatpush.msra.mxu0 %v1189
  %v1191 = vand.u32 %v72, 4294901760
  %1192 = vmatpush.msra.mxu0 %v1191
  %v1193 = vand.u32 %v71, 4294901760
  %1194 = vmatpush.msra.mxu0 %v1193
  %v1195 = vand.u32 %v70, 4294901760
  %1196 = vmatpush.msra.mxu0 %v1195
  %v1197 = vand.u32 %v69, 4294901760
  %1198 = vmatpush.msra.mxu0 %v1197
  %v1199 = vand.u32 %v68, 4294901760
  %1200 = vmatpush.msra.mxu0 %v1199
  %v1201 = vand.u32 %v67, 4294901760
  %1202 = vmatpush.msra.mxu0 %v1201
  %v1203 = vand.u32 %v19, 4294901760
  %v1204 = vsub.f32 %v19, %v1203
  %v1205 = vand.u32 %v1204, 4294901760
  %1206 = vmatmul.f32.gmra.mxu0 %v1205
  %v1207 = vpop.f32.mrf.mxu0
  %v1208 = vadd.f32 %v1159, %v1207
  %v1209 = vand.u32 %v25, 4294901760
  %v1210 = vsub.f32 %v25, %v1209
  %v1211 = vand.u32 %v1210, 4294901760
  %1212 = vmatmul.f32.gmra.mxu0 %v1211
  %v1213 = vpop.f32.mrf.mxu0
  %v1214 = vadd.f32 %v1164, %v1213
  %v1215 = vand.u32 %v31, 4294901760
  %v1216 = vsub.f32 %v31, %v1215
  %v1217 = vand.u32 %v1216, 4294901760
  %1218 = vmatmul.f32.gmra.mxu0 %v1217
  %v1219 = vpop.f32.mrf.mxu0
  %v1220 = vadd.f32 %v1169, %v1219
  %1221 = vdwg.mxu0
  %v1222 = vand.u32 %v82, 4294901760
  %v1223 = vsub.f32 %v82, %v1222
  %v1224 = vand.u32 %v1223, 4294901760
  %1225 = vmatpush.msra.mxu0 %v1224
  %v1226 = vand.u32 %v81, 4294901760
  %v1227 = vsub.f32 %v81, %v1226
  %v1228 = vand.u32 %v1227, 4294901760
  %1229 = vmatpush.msra.mxu0 %v1228
  %v1230 = vand.u32 %v80, 4294901760
  %v1231 = vsub.f32 %v80, %v1230
  %v1232 = vand.u32 %v1231, 4294901760
  %1233 = vmatpush.msra.mxu0 %v1232
  %v1234 = vand.u32 %v79, 4294901760
  %v1235 = vsub.f32 %v79, %v1234
  %v1236 = vand.u32 %v1235, 4294901760
  %1237 = vmatpush.msra.mxu0 %v1236
  %v1238 = vand.u32 %v78, 4294901760
  %v1239 = vsub.f32 %v78, %v1238
  %v1240 = vand.u32 %v1239, 4294901760
  %1241 = vmatpush.msra.mxu0 %v1240
  %v1242 = vand.u32 %v77, 4294901760
  %v1243 = vsub.f32 %v77, %v1242
  %v1244 = vand.u32 %v1243, 4294901760
  %1245 = vmatpush.msra.mxu0 %v1244
  %v1246 = vand.u32 %v76, 4294901760
  %v1247 = vsub.f32 %v76, %v1246
  %v1248 = vand.u32 %v1247, 4294901760
  %1249 = vmatpush.msra.mxu0 %v1248
  %v1250 = vand.u32 %v75, 4294901760
  %v1251 = vsub.f32 %v75, %v1250
  %v1252 = vand.u32 %v1251, 4294901760
  %1253 = vmatpush.msra.mxu0 %v1252
  %v1254 = vand.u32 %v74, 4294901760
  %v1255 = vsub.f32 %v74, %v1254
  %v1256 = vand.u32 %v1255, 4294901760
  %1257 = vmatpush.msra.mxu0 %v1256
  %v1258 = vand.u32 %v73, 4294901760
  %v1259 = vsub.f32 %v73, %v1258
  %v1260 = vand.u32 %v1259, 4294901760
  %1261 = vmatpush.msra.mxu0 %v1260
  %v1262 = vand.u32 %v72, 4294901760
  %v1263 = vsub.f32 %v72, %v1262
  %v1264 = vand.u32 %v1263, 4294901760
  %1265 = vmatpush.msra.mxu0 %v1264
  %v1266 = vand.u32 %v71, 4294901760
  %v1267 = vsub.f32 %v71, %v1266
  %v1268 = vand.u32 %v1267, 4294901760
  %1269 = vmatpush.msra.mxu0 %v1268
  %v1270 = vand.u32 %v70, 4294901760
  %v1271 = vsub.f32 %v70, %v1270
  %v1272 = vand.u32 %v1271, 4294901760
  %1273 = vmatpush.msra.mxu0 %v1272
  %v1274 = vand.u32 %v69, 4294901760
  %v1275 = vsub.f32 %v69, %v1274
  %v1276 = vand.u32 %v1275, 4294901760
  %1277 = vmatpush.msra.mxu0 %v1276
  %v1278 = vand.u32 %v68, 4294901760
  %v1279 = vsub.f32 %v68, %v1278
  %v1280 = vand.u32 %v1279, 4294901760
  %1281 = vmatpush.msra.mxu0 %v1280
  %v1282 = vand.u32 %v67, 4294901760
  %v1283 = vsub.f32 %v67, %v1282
  %v1284 = vand.u32 %v1283, 4294901760
  %1285 = vmatpush.msra.mxu0 %v1284
  %v1286 = vand.u32 %v19, 4294901760
  %1287 = vmatmul.f32.gmra.mxu0 %v1286
  %v1288 = vpop.f32.mrf.mxu0
  %v1289 = vadd.f32 %v1208, %v1288
  %v1290 = vand.u32 %v25, 4294901760
  %1291 = vmatmul.f32.gmra.mxu0 %v1290
  %v1292 = vpop.f32.mrf.mxu0
  %v1293 = vadd.f32 %v1214, %v1292
  %v1294 = vand.u32 %v31, 4294901760
  %1295 = vmatmul.f32.gmra.mxu0 %v1294
  %v1296 = vpop.f32.mrf.mxu0
  %v1297 = vadd.f32 %v1220, %v1296
  %1298 = vdwg.mxu0
  %v1299 = vand.u32 %v82, 4294901760
  %1300 = vmatpush.msra.mxu0 %v1299
  %v1301 = vand.u32 %v81, 4294901760
  %1302 = vmatpush.msra.mxu0 %v1301
  %v1303 = vand.u32 %v80, 4294901760
  %1304 = vmatpush.msra.mxu0 %v1303
  %v1305 = vand.u32 %v79, 4294901760
  %1306 = vmatpush.msra.mxu0 %v1305
  %v1307 = vand.u32 %v78, 4294901760
  %1308 = vmatpush.msra.mxu0 %v1307
  %v1309 = vand.u32 %v77, 4294901760
  %1310 = vmatpush.msra.mxu0 %v1309
  %v1311 = vand.u32 %v76, 4294901760
  %1312 = vmatpush.msra.mxu0 %v1311
  %v1313 = vand.u32 %v75, 4294901760
  %1314 = vmatpush.msra.mxu0 %v1313
  %v1315 = vand.u32 %v74, 4294901760
  %1316 = vmatpush.msra.mxu0 %v1315
  %v1317 = vand.u32 %v73, 4294901760
  %1318 = vmatpush.msra.mxu0 %v1317
  %v1319 = vand.u32 %v72, 4294901760
  %1320 = vmatpush.msra.mxu0 %v1319
  %v1321 = vand.u32 %v71, 4294901760
  %1322 = vmatpush.msra.mxu0 %v1321
  %v1323 = vand.u32 %v70, 4294901760
  %1324 = vmatpush.msra.mxu0 %v1323
  %v1325 = vand.u32 %v69, 4294901760
  %1326 = vmatpush.msra.mxu0 %v1325
  %v1327 = vand.u32 %v68, 4294901760
  %1328 = vmatpush.msra.mxu0 %v1327
  %v1329 = vand.u32 %v67, 4294901760
  %1330 = vmatpush.msra.mxu0 %v1329
  %v1331 = vand.u32 %v19, 4294901760
  %1332 = vmatmul.f32.gmra.mxu0 %v1331
  %v1333 = vpop.f32.mrf.mxu0
  %v1334 = vadd.f32 %v1289, %v1333
  %v1335 = vand.u32 %v25, 4294901760
  %1336 = vmatmul.f32.gmra.mxu0 %v1335
  %v1337 = vpop.f32.mrf.mxu0
  %v1338 = vadd.f32 %v1293, %v1337
  %v1339 = vand.u32 %v31, 4294901760
  %1340 = vmatmul.f32.gmra.mxu0 %v1339
  %v1341 = vpop.f32.mrf.mxu0
  %v1342 = vadd.f32 %v1297, %v1341
  %1343 = vdwg.mxu0
  %v1344 = vand.u32 %v98, 4294901760
  %1345 = vmatpush.msra.mxu0 %v1344
  %v1346 = vand.u32 %v97, 4294901760
  %1347 = vmatpush.msra.mxu0 %v1346
  %v1348 = vand.u32 %v96, 4294901760
  %1349 = vmatpush.msra.mxu0 %v1348
  %v1350 = vand.u32 %v95, 4294901760
  %1351 = vmatpush.msra.mxu0 %v1350
  %v1352 = vand.u32 %v94, 4294901760
  %1353 = vmatpush.msra.mxu0 %v1352
  %v1354 = vand.u32 %v93, 4294901760
  %1355 = vmatpush.msra.mxu0 %v1354
  %v1356 = vand.u32 %v92, 4294901760
  %1357 = vmatpush.msra.mxu0 %v1356
  %v1358 = vand.u32 %v91, 4294901760
  %1359 = vmatpush.msra.mxu0 %v1358
  %v1360 = vand.u32 %v90, 4294901760
  %1361 = vmatpush.msra.mxu0 %v1360
  %v1362 = vand.u32 %v89, 4294901760
  %1363 = vmatpush.msra.mxu0 %v1362
  %v1364 = vand.u32 %v88, 4294901760
  %1365 = vmatpush.msra.mxu0 %v1364
  %v1366 = vand.u32 %v87, 4294901760
  %1367 = vmatpush.msra.mxu0 %v1366
  %v1368 = vand.u32 %v86, 4294901760
  %1369 = vmatpush.msra.mxu0 %v1368
  %v1370 = vand.u32 %v85, 4294901760
  %1371 = vmatpush.msra.mxu0 %v1370
  %v1372 = vand.u32 %v84, 4294901760
  %1373 = vmatpush.msra.mxu0 %v1372
  %v1374 = vand.u32 %v83, 4294901760
  %1375 = vmatpush.msra.mxu0 %v1374
  %v1376 = vand.u32 %v20, 4294901760
  %v1377 = vsub.f32 %v20, %v1376
  %v1378 = vand.u32 %v1377, 4294901760
  %v1379 = vsub.f32 %v1377, %v1378
  %v1380 = vand.u32 %v1379, 4294901760
  %1381 = vmatmul.f32.gmra.mxu0 %v1380
  %v1382 = vpop.f32.mrf.mxu0
  %v1383 = vadd.f32 %v1334, %v1382
  %v1384 = vand.u32 %v26, 4294901760
  %v1385 = vsub.f32 %v26, %v1384
  %v1386 = vand.u32 %v1385, 4294901760
  %v1387 = vsub.f32 %v1385, %v1386
  %v1388 = vand.u32 %v1387, 4294901760
  %1389 = vmatmul.f32.gmra.mxu0 %v1388
  %v1390 = vpop.f32.mrf.mxu0
  %v1391 = vadd.f32 %v1338, %v1390
  %v1392 = vand.u32 %v32, 4294901760
  %v1393 = vsub.f32 %v32, %v1392
  %v1394 = vand.u32 %v1393, 4294901760
  %v1395 = vsub.f32 %v1393, %v1394
  %v1396 = vand.u32 %v1395, 4294901760
  %1397 = vmatmul.f32.gmra.mxu0 %v1396
  %v1398 = vpop.f32.mrf.mxu0
  %v1399 = vadd.f32 %v1342, %v1398
  %1400 = vdwg.mxu0
  %v1401 = vand.u32 %v98, 4294901760
  %v1402 = vsub.f32 %v98, %v1401
  %v1403 = vand.u32 %v1402, 4294901760
  %v1404 = vsub.f32 %v1402, %v1403
  %v1405 = vand.u32 %v1404, 4294901760
  %1406 = vmatpush.msra.mxu0 %v1405
  %v1407 = vand.u32 %v97, 4294901760
  %v1408 = vsub.f32 %v97, %v1407
  %v1409 = vand.u32 %v1408, 4294901760
  %v1410 = vsub.f32 %v1408, %v1409
  %v1411 = vand.u32 %v1410, 4294901760
  %1412 = vmatpush.msra.mxu0 %v1411
  %v1413 = vand.u32 %v96, 4294901760
  %v1414 = vsub.f32 %v96, %v1413
  %v1415 = vand.u32 %v1414, 4294901760
  %v1416 = vsub.f32 %v1414, %v1415
  %v1417 = vand.u32 %v1416, 4294901760
  %1418 = vmatpush.msra.mxu0 %v1417
  %v1419 = vand.u32 %v95, 4294901760
  %v1420 = vsub.f32 %v95, %v1419
  %v1421 = vand.u32 %v1420, 4294901760
  %v1422 = vsub.f32 %v1420, %v1421
  %v1423 = vand.u32 %v1422, 4294901760
  %1424 = vmatpush.msra.mxu0 %v1423
  %v1425 = vand.u32 %v94, 4294901760
  %v1426 = vsub.f32 %v94, %v1425
  %v1427 = vand.u32 %v1426, 4294901760
  %v1428 = vsub.f32 %v1426, %v1427
  %v1429 = vand.u32 %v1428, 4294901760
  %1430 = vmatpush.msra.mxu0 %v1429
  %v1431 = vand.u32 %v93, 4294901760
  %v1432 = vsub.f32 %v93, %v1431
  %v1433 = vand.u32 %v1432, 4294901760
  %v1434 = vsub.f32 %v1432, %v1433
  %v1435 = vand.u32 %v1434, 4294901760
  %1436 = vmatpush.msra.mxu0 %v1435
  %v1437 = vand.u32 %v92, 4294901760
  %v1438 = vsub.f32 %v92, %v1437
  %v1439 = vand.u32 %v1438, 4294901760
  %v1440 = vsub.f32 %v1438, %v1439
  %v1441 = vand.u32 %v1440, 4294901760
  %1442 = vmatpush.msra.mxu0 %v1441
  %v1443 = vand.u32 %v91, 4294901760
  %v1444 = vsub.f32 %v91, %v1443
  %v1445 = vand.u32 %v1444, 4294901760
  %v1446 = vsub.f32 %v1444, %v1445
  %v1447 = vand.u32 %v1446, 4294901760
  %1448 = vmatpush.msra.mxu0 %v1447
  %v1449 = vand.u32 %v90, 4294901760
  %v1450 = vsub.f32 %v90, %v1449
  %v1451 = vand.u32 %v1450, 4294901760
  %v1452 = vsub.f32 %v1450, %v1451
  %v1453 = vand.u32 %v1452, 4294901760
  %1454 = vmatpush.msra.mxu0 %v1453
  %v1455 = vand.u32 %v89, 4294901760
  %v1456 = vsub.f32 %v89, %v1455
  %v1457 = vand.u32 %v1456, 4294901760
  %v1458 = vsub.f32 %v1456, %v1457
  %v1459 = vand.u32 %v1458, 4294901760
  %1460 = vmatpush.msra.mxu0 %v1459
  %v1461 = vand.u32 %v88, 4294901760
  %v1462 = vsub.f32 %v88, %v1461
  %v1463 = vand.u32 %v1462, 4294901760
  %v1464 = vsub.f32 %v1462, %v1463
  %v1465 = vand.u32 %v1464, 4294901760
  %1466 = vmatpush.msra.mxu0 %v1465
  %v1467 = vand.u32 %v87, 4294901760
  %v1468 = vsub.f32 %v87, %v1467
  %v1469 = vand.u32 %v1468, 4294901760
  %v1470 = vsub.f32 %v1468, %v1469
  %v1471 = vand.u32 %v1470, 4294901760
  %1472 = vmatpush.msra.mxu0 %v1471
  %v1473 = vand.u32 %v86, 4294901760
  %v1474 = vsub.f32 %v86, %v1473
  %v1475 = vand.u32 %v1474, 4294901760
  %v1476 = vsub.f32 %v1474, %v1475
  %v1477 = vand.u32 %v1476, 4294901760
  %1478 = vmatpush.msra.mxu0 %v1477
  %v1479 = vand.u32 %v85, 4294901760
  %v1480 = vsub.f32 %v85, %v1479
  %v1481 = vand.u32 %v1480, 4294901760
  %v1482 = vsub.f32 %v1480, %v1481
  %v1483 = vand.u32 %v1482, 4294901760
  %1484 = vmatpush.msra.mxu0 %v1483
  %v1485 = vand.u32 %v84, 4294901760
  %v1486 = vsub.f32 %v84, %v1485
  %v1487 = vand.u32 %v1486, 4294901760
  %v1488 = vsub.f32 %v1486, %v1487
  %v1489 = vand.u32 %v1488, 4294901760
  %1490 = vmatpush.msra.mxu0 %v1489
  %v1491 = vand.u32 %v83, 4294901760
  %v1492 = vsub.f32 %v83, %v1491
  %v1493 = vand.u32 %v1492, 4294901760
  %v1494 = vsub.f32 %v1492, %v1493
  %v1495 = vand.u32 %v1494, 4294901760
  %1496 = vmatpush.msra.mxu0 %v1495
  %v1497 = vand.u32 %v20, 4294901760
  %1498 = vmatmul.f32.gmra.mxu0 %v1497
  %v1499 = vpop.f32.mrf.mxu0
  %v1500 = vadd.f32 %v1383, %v1499
  %v1501 = vand.u32 %v26, 4294901760
  %1502 = vmatmul.f32.gmra.mxu0 %v1501
  %v1503 = vpop.f32.mrf.mxu0
  %v1504 = vadd.f32 %v1391, %v1503
  %v1505 = vand.u32 %v32, 4294901760
  %1506 = vmatmul.f32.gmra.mxu0 %v1505
  %v1507 = vpop.f32.mrf.mxu0
  %v1508 = vadd.f32 %v1399, %v1507
  %1509 = vdwg.mxu0
  %v1510 = vand.u32 %v98, 4294901760
  %v1511 = vsub.f32 %v98, %v1510
  %1512 = vmatpush.msra.mxu0 %v1511
  %v1513 = vand.u32 %v97, 4294901760
  %v1514 = vsub.f32 %v97, %v1513
  %1515 = vmatpush.msra.mxu0 %v1514
  %v1516 = vand.u32 %v96, 4294901760
  %v1517 = vsub.f32 %v96, %v1516
  %1518 = vmatpush.msra.mxu0 %v1517
  %v1519 = vand.u32 %v95, 4294901760
  %v1520 = vsub.f32 %v95, %v1519
  %1521 = vmatpush.msra.mxu0 %v1520
  %v1522 = vand.u32 %v94, 4294901760
  %v1523 = vsub.f32 %v94, %v1522
  %1524 = vmatpush.msra.mxu0 %v1523
  %v1525 = vand.u32 %v93, 4294901760
  %v1526 = vsub.f32 %v93, %v1525
  %1527 = vmatpush.msra.mxu0 %v1526
  %v1528 = vand.u32 %v92, 4294901760
  %v1529 = vsub.f32 %v92, %v1528
  %1530 = vmatpush.msra.mxu0 %v1529
  %v1531 = vand.u32 %v91, 4294901760
  %v1532 = vsub.f32 %v91, %v1531
  %1533 = vmatpush.msra.mxu0 %v1532
  %v1534 = vand.u32 %v90, 4294901760
  %v1535 = vsub.f32 %v90, %v1534
  %1536 = vmatpush.msra.mxu0 %v1535
  %v1537 = vand.u32 %v89, 4294901760
  %v1538 = vsub.f32 %v89, %v1537
  %1539 = vmatpush.msra.mxu0 %v1538
  %v1540 = vand.u32 %v88, 4294901760
  %v1541 = vsub.f32 %v88, %v1540
  %1542 = vmatpush.msra.mxu0 %v1541
  %v1543 = vand.u32 %v87, 4294901760
  %v1544 = vsub.f32 %v87, %v1543
  %1545 = vmatpush.msra.mxu0 %v1544
  %v1546 = vand.u32 %v86, 4294901760
  %v1547 = vsub.f32 %v86, %v1546
  %1548 = vmatpush.msra.mxu0 %v1547
  %v1549 = vand.u32 %v85, 4294901760
  %v1550 = vsub.f32 %v85, %v1549
  %1551 = vmatpush.msra.mxu0 %v1550
  %v1552 = vand.u32 %v84, 4294901760
  %v1553 = vsub.f32 %v84, %v1552
  %1554 = vmatpush.msra.mxu0 %v1553
  %v1555 = vand.u32 %v83, 4294901760
  %v1556 = vsub.f32 %v83, %v1555
  %1557 = vmatpush.msra.mxu0 %v1556
  %v1558 = vand.u32 %v20, 4294901760
  %v1559 = vsub.f32 %v20, %v1558
  %1560 = vmatmul.f32.gmra.mxu0 %v1559
  %v1561 = vpop.f32.mrf.mxu0
  %v1562 = vadd.f32 %v1500, %v1561
  %v1563 = vand.u32 %v26, 4294901760
  %v1564 = vsub.f32 %v26, %v1563
  %1565 = vmatmul.f32.gmra.mxu0 %v1564
  %v1566 = vpop.f32.mrf.mxu0
  %v1567 = vadd.f32 %v1504, %v1566
  %v1568 = vand.u32 %v32, 4294901760
  %v1569 = vsub.f32 %v32, %v1568
  %1570 = vmatmul.f32.gmra.mxu0 %v1569
  %v1571 = vpop.f32.mrf.mxu0
  %v1572 = vadd.f32 %v1508, %v1571
  %1573 = vdwg.mxu0
  %v1574 = vand.u32 %v98, 4294901760
  %1575 = vmatpush.msra.mxu0 %v1574
  %v1576 = vand.u32 %v97, 4294901760
  %1577 = vmatpush.msra.mxu0 %v1576
  %v1578 = vand.u32 %v96, 4294901760
  %1579 = vmatpush.msra.mxu0 %v1578
  %v1580 = vand.u32 %v95, 4294901760
  %1581 = vmatpush.msra.mxu0 %v1580
  %v1582 = vand.u32 %v94, 4294901760
  %1583 = vmatpush.msra.mxu0 %v1582
  %v1584 = vand.u32 %v93, 4294901760
  %1585 = vmatpush.msra.mxu0 %v1584
  %v1586 = vand.u32 %v92, 4294901760
  %1587 = vmatpush.msra.mxu0 %v1586
  %v1588 = vand.u32 %v91, 4294901760
  %1589 = vmatpush.msra.mxu0 %v1588
  %v1590 = vand.u32 %v90, 4294901760
  %1591 = vmatpush.msra.mxu0 %v1590
  %v1592 = vand.u32 %v89, 4294901760
  %1593 = vmatpush.msra.mxu0 %v1592
  %v1594 = vand.u32 %v88, 4294901760
  %1595 = vmatpush.msra.mxu0 %v1594
  %v1596 = vand.u32 %v87, 4294901760
  %1597 = vmatpush.msra.mxu0 %v1596
  %v1598 = vand.u32 %v86, 4294901760
  %1599 = vmatpush.msra.mxu0 %v1598
  %v1600 = vand.u32 %v85, 4294901760
  %1601 = vmatpush.msra.mxu0 %v1600
  %v1602 = vand.u32 %v84, 4294901760
  %1603 = vmatpush.msra.mxu0 %v1602
  %v1604 = vand.u32 %v83, 4294901760
  %1605 = vmatpush.msra.mxu0 %v1604
  %v1606 = vand.u32 %v20, 4294901760
  %v1607 = vsub.f32 %v20, %v1606
  %v1608 = vand.u32 %v1607, 4294901760
  %1609 = vmatmul.f32.gmra.mxu0 %v1608
  %v1610 = vpop.f32.mrf.mxu0
  %v1611 = vadd.f32 %v1562, %v1610
  %v1612 = vand.u32 %v26, 4294901760
  %v1613 = vsub.f32 %v26, %v1612
  %v1614 = vand.u32 %v1613, 4294901760
  %1615 = vmatmul.f32.gmra.mxu0 %v1614
  %v1616 = vpop.f32.mrf.mxu0
  %v1617 = vadd.f32 %v1567, %v1616
  %v1618 = vand.u32 %v32, 4294901760
  %v1619 = vsub.f32 %v32, %v1618
  %v1620 = vand.u32 %v1619, 4294901760
  %1621 = vmatmul.f32.gmra.mxu0 %v1620
  %v1622 = vpop.f32.mrf.mxu0
  %v1623 = vadd.f32 %v1572, %v1622
  %1624 = vdwg.mxu0
  %v1625 = vand.u32 %v98, 4294901760
  %v1626 = vsub.f32 %v98, %v1625
  %v1627 = vand.u32 %v1626, 4294901760
  %1628 = vmatpush.msra.mxu0 %v1627
  %v1629 = vand.u32 %v97, 4294901760
  %v1630 = vsub.f32 %v97, %v1629
  %v1631 = vand.u32 %v1630, 4294901760
  %1632 = vmatpush.msra.mxu0 %v1631
  %v1633 = vand.u32 %v96, 4294901760
  %v1634 = vsub.f32 %v96, %v1633
  %v1635 = vand.u32 %v1634, 4294901760
  %1636 = vmatpush.msra.mxu0 %v1635
  %v1637 = vand.u32 %v95, 4294901760
  %v1638 = vsub.f32 %v95, %v1637
  %v1639 = vand.u32 %v1638, 4294901760
  %1640 = vmatpush.msra.mxu0 %v1639
  %v1641 = vand.u32 %v94, 4294901760
  %v1642 = vsub.f32 %v94, %v1641
  %v1643 = vand.u32 %v1642, 4294901760
  %1644 = vmatpush.msra.mxu0 %v1643
  %v1645 = vand.u32 %v93, 4294901760
  %v1646 = vsub.f32 %v93, %v1645
  %v1647 = vand.u32 %v1646, 4294901760
  %1648 = vmatpush.msra.mxu0 %v1647
  %v1649 = vand.u32 %v92, 4294901760
  %v1650 = vsub.f32 %v92, %v1649
  %v1651 = vand.u32 %v1650, 4294901760
  %1652 = vmatpush.msra.mxu0 %v1651
  %v1653 = vand.u32 %v91, 4294901760
  %v1654 = vsub.f32 %v91, %v1653
  %v1655 = vand.u32 %v1654, 4294901760
  %1656 = vmatpush.msra.mxu0 %v1655
  %v1657 = vand.u32 %v90, 4294901760
  %v1658 = vsub.f32 %v90, %v1657
  %v1659 = vand.u32 %v1658, 4294901760
  %1660 = vmatpush.msra.mxu0 %v1659
  %v1661 = vand.u32 %v89, 4294901760
  %v1662 = vsub.f32 %v89, %v1661
  %v1663 = vand.u32 %v1662, 4294901760
  %1664 = vmatpush.msra.mxu0 %v1663
  %v1665 = vand.u32 %v88, 4294901760
  %v1666 = vsub.f32 %v88, %v1665
  %v1667 = vand.u32 %v1666, 4294901760
  %1668 = vmatpush.msra.mxu0 %v1667
  %v1669 = vand.u32 %v87, 4294901760
  %v1670 = vsub.f32 %v87, %v1669
  %v1671 = vand.u32 %v1670, 4294901760
  %1672 = vmatpush.msra.mxu0 %v1671
  %v1673 = vand.u32 %v86, 4294901760
  %v1674 = vsub.f32 %v86, %v1673
  %v1675 = vand.u32 %v1674, 4294901760
  %1676 = vmatpush.msra.mxu0 %v1675
  %v1677 = vand.u32 %v85, 4294901760
  %v1678 = vsub.f32 %v85, %v1677
  %v1679 = vand.u32 %v1678, 4294901760
  %1680 = vmatpush.msra.mxu0 %v1679
  %v1681 = vand.u32 %v84, 4294901760
  %v1682 = vsub.f32 %v84, %v1681
  %v1683 = vand.u32 %v1682, 4294901760
  %1684 = vmatpush.msra.mxu0 %v1683
  %v1685 = vand.u32 %v83, 4294901760
  %v1686 = vsub.f32 %v83, %v1685
  %v1687 = vand.u32 %v1686, 4294901760
  %1688 = vmatpush.msra.mxu0 %v1687
  %v1689 = vand.u32 %v20, 4294901760
  %1690 = vmatmul.f32.gmra.mxu0 %v1689
  %v1691 = vpop.f32.mrf.mxu0
  %v1692 = vadd.f32 %v1611, %v1691
  %v1693 = vand.u32 %v26, 4294901760
  %1694 = vmatmul.f32.gmra.mxu0 %v1693
  %v1695 = vpop.f32.mrf.mxu0
  %v1696 = vadd.f32 %v1617, %v1695
  %v1697 = vand.u32 %v32, 4294901760
  %1698 = vmatmul.f32.gmra.mxu0 %v1697
  %v1699 = vpop.f32.mrf.mxu0
  %v1700 = vadd.f32 %v1623, %v1699
  %1701 = vdwg.mxu0
  %v1702 = vand.u32 %v98, 4294901760
  %1703 = vmatpush.msra.mxu0 %v1702
  %v1704 = vand.u32 %v97, 4294901760
  %1705 = vmatpush.msra.mxu0 %v1704
  %v1706 = vand.u32 %v96, 4294901760
  %1707 = vmatpush.msra.mxu0 %v1706
  %v1708 = vand.u32 %v95, 4294901760
  %1709 = vmatpush.msra.mxu0 %v1708
  %v1710 = vand.u32 %v94, 4294901760
  %1711 = vmatpush.msra.mxu0 %v1710
  %v1712 = vand.u32 %v93, 4294901760
  %1713 = vmatpush.msra.mxu0 %v1712
  %v1714 = vand.u32 %v92, 4294901760
  %1715 = vmatpush.msra.mxu0 %v1714
  %v1716 = vand.u32 %v91, 4294901760
  %1717 = vmatpush.msra.mxu0 %v1716
  %v1718 = vand.u32 %v90, 4294901760
  %1719 = vmatpush.msra.mxu0 %v1718
  %v1720 = vand.u32 %v89, 4294901760
  %1721 = vmatpush.msra.mxu0 %v1720
  %v1722 = vand.u32 %v88, 4294901760
  %1723 = vmatpush.msra.mxu0 %v1722
  %v1724 = vand.u32 %v87, 4294901760
  %1725 = vmatpush.msra.mxu0 %v1724
  %v1726 = vand.u32 %v86, 4294901760
  %1727 = vmatpush.msra.mxu0 %v1726
  %v1728 = vand.u32 %v85, 4294901760
  %1729 = vmatpush.msra.mxu0 %v1728
  %v1730 = vand.u32 %v84, 4294901760
  %1731 = vmatpush.msra.mxu0 %v1730
  %v1732 = vand.u32 %v83, 4294901760
  %1733 = vmatpush.msra.mxu0 %v1732
  %v1734 = vand.u32 %v20, 4294901760
  %1735 = vmatmul.f32.gmra.mxu0 %v1734
  %v1736 = vpop.f32.mrf.mxu0
  %v1737 = vadd.f32 %v1692, %v1736
  %v1738 = vand.u32 %v26, 4294901760
  %1739 = vmatmul.f32.gmra.mxu0 %v1738
  %v1740 = vpop.f32.mrf.mxu0
  %v1741 = vadd.f32 %v1696, %v1740
  %v1742 = vand.u32 %v32, 4294901760
  %1743 = vmatmul.f32.gmra.mxu0 %v1742
  %v1744 = vpop.f32.mrf.mxu0
  %v1745 = vadd.f32 %v1700, %v1744
  %1746 = vdwg.mxu0
  %v1747 = vand.u32 %v114, 4294901760
  %1748 = vmatpush.msra.mxu0 %v1747
  %v1749 = vand.u32 %v113, 4294901760
  %1750 = vmatpush.msra.mxu0 %v1749
  %v1751 = vand.u32 %v112, 4294901760
  %1752 = vmatpush.msra.mxu0 %v1751
  %v1753 = vand.u32 %v111, 4294901760
  %1754 = vmatpush.msra.mxu0 %v1753
  %v1755 = vand.u32 %v110, 4294901760
  %1756 = vmatpush.msra.mxu0 %v1755
  %v1757 = vand.u32 %v109, 4294901760
  %1758 = vmatpush.msra.mxu0 %v1757
  %v1759 = vand.u32 %v108, 4294901760
  %1760 = vmatpush.msra.mxu0 %v1759
  %v1761 = vand.u32 %v107, 4294901760
  %1762 = vmatpush.msra.mxu0 %v1761
  %v1763 = vand.u32 %v106, 4294901760
  %1764 = vmatpush.msra.mxu0 %v1763
  %v1765 = vand.u32 %v105, 4294901760
  %1766 = vmatpush.msra.mxu0 %v1765
  %v1767 = vand.u32 %v104, 4294901760
  %1768 = vmatpush.msra.mxu0 %v1767
  %v1769 = vand.u32 %v103, 4294901760
  %1770 = vmatpush.msra.mxu0 %v1769
  %v1771 = vand.u32 %v102, 4294901760
  %1772 = vmatpush.msra.mxu0 %v1771
  %v1773 = vand.u32 %v101, 4294901760
  %1774 = vmatpush.msra.mxu0 %v1773
  %v1775 = vand.u32 %v100, 4294901760
  %1776 = vmatpush.msra.mxu0 %v1775
  %v1777 = vand.u32 %v99, 4294901760
  %1778 = vmatpush.msra.mxu0 %v1777
  %v1779 = vand.u32 %v21, 4294901760
  %v1780 = vsub.f32 %v21, %v1779
  %v1781 = vand.u32 %v1780, 4294901760
  %v1782 = vsub.f32 %v1780, %v1781
  %v1783 = vand.u32 %v1782, 4294901760
  %1784 = vmatmul.f32.gmra.mxu0 %v1783
  %v1785 = vpop.f32.mrf.mxu0
  %v1786 = vadd.f32 %v1737, %v1785
  %v1787 = vand.u32 %v27, 4294901760
  %v1788 = vsub.f32 %v27, %v1787
  %v1789 = vand.u32 %v1788, 4294901760
  %v1790 = vsub.f32 %v1788, %v1789
  %v1791 = vand.u32 %v1790, 4294901760
  %1792 = vmatmul.f32.gmra.mxu0 %v1791
  %v1793 = vpop.f32.mrf.mxu0
  %v1794 = vadd.f32 %v1741, %v1793
  %v1795 = vand.u32 %v33, 4294901760
  %v1796 = vsub.f32 %v33, %v1795
  %v1797 = vand.u32 %v1796, 4294901760
  %v1798 = vsub.f32 %v1796, %v1797
  %v1799 = vand.u32 %v1798, 4294901760
  %1800 = vmatmul.f32.gmra.mxu0 %v1799
  %v1801 = vpop.f32.mrf.mxu0
  %v1802 = vadd.f32 %v1745, %v1801
  %1803 = vdwg.mxu0
  %v1804 = vand.u32 %v114, 4294901760
  %v1805 = vsub.f32 %v114, %v1804
  %v1806 = vand.u32 %v1805, 4294901760
  %v1807 = vsub.f32 %v1805, %v1806
  %v1808 = vand.u32 %v1807, 4294901760
  %1809 = vmatpush.msra.mxu0 %v1808
  %v1810 = vand.u32 %v113, 4294901760
  %v1811 = vsub.f32 %v113, %v1810
  %v1812 = vand.u32 %v1811, 4294901760
  %v1813 = vsub.f32 %v1811, %v1812
  %v1814 = vand.u32 %v1813, 4294901760
  %1815 = vmatpush.msra.mxu0 %v1814
  %v1816 = vand.u32 %v112, 4294901760
  %v1817 = vsub.f32 %v112, %v1816
  %v1818 = vand.u32 %v1817, 4294901760
  %v1819 = vsub.f32 %v1817, %v1818
  %v1820 = vand.u32 %v1819, 4294901760
  %1821 = vmatpush.msra.mxu0 %v1820
  %v1822 = vand.u32 %v111, 4294901760
  %v1823 = vsub.f32 %v111, %v1822
  %v1824 = vand.u32 %v1823, 4294901760
  %v1825 = vsub.f32 %v1823, %v1824
  %v1826 = vand.u32 %v1825, 4294901760
  %1827 = vmatpush.msra.mxu0 %v1826
  %v1828 = vand.u32 %v110, 4294901760
  %v1829 = vsub.f32 %v110, %v1828
  %v1830 = vand.u32 %v1829, 4294901760
  %v1831 = vsub.f32 %v1829, %v1830
  %v1832 = vand.u32 %v1831, 4294901760
  %1833 = vmatpush.msra.mxu0 %v1832
  %v1834 = vand.u32 %v109, 4294901760
  %v1835 = vsub.f32 %v109, %v1834
  %v1836 = vand.u32 %v1835, 4294901760
  %v1837 = vsub.f32 %v1835, %v1836
  %v1838 = vand.u32 %v1837, 4294901760
  %1839 = vmatpush.msra.mxu0 %v1838
  %v1840 = vand.u32 %v108, 4294901760
  %v1841 = vsub.f32 %v108, %v1840
  %v1842 = vand.u32 %v1841, 4294901760
  %v1843 = vsub.f32 %v1841, %v1842
  %v1844 = vand.u32 %v1843, 4294901760
  %1845 = vmatpush.msra.mxu0 %v1844
  %v1846 = vand.u32 %v107, 4294901760
  %v1847 = vsub.f32 %v107, %v1846
  %v1848 = vand.u32 %v1847, 4294901760
  %v1849 = vsub.f32 %v1847, %v1848
  %v1850 = vand.u32 %v1849, 4294901760
  %1851 = vmatpush.msra.mxu0 %v1850
  %v1852 = vand.u32 %v106, 4294901760
  %v1853 = vsub.f32 %v106, %v1852
  %v1854 = vand.u32 %v1853, 4294901760
  %v1855 = vsub.f32 %v1853, %v1854
  %v1856 = vand.u32 %v1855, 4294901760
  %1857 = vmatpush.msra.mxu0 %v1856
  %v1858 = vand.u32 %v105, 4294901760
  %v1859 = vsub.f32 %v105, %v1858
  %v1860 = vand.u32 %v1859, 4294901760
  %v1861 = vsub.f32 %v1859, %v1860
  %v1862 = vand.u32 %v1861, 4294901760
  %1863 = vmatpush.msra.mxu0 %v1862
  %v1864 = vand.u32 %v104, 4294901760
  %v1865 = vsub.f32 %v104, %v1864
  %v1866 = vand.u32 %v1865, 4294901760
  %v1867 = vsub.f32 %v1865, %v1866
  %v1868 = vand.u32 %v1867, 4294901760
  %1869 = vmatpush.msra.mxu0 %v1868
  %v1870 = vand.u32 %v103, 4294901760
  %v1871 = vsub.f32 %v103, %v1870
  %v1872 = vand.u32 %v1871, 4294901760
  %v1873 = vsub.f32 %v1871, %v1872
  %v1874 = vand.u32 %v1873, 4294901760
  %1875 = vmatpush.msra.mxu0 %v1874
  %v1876 = vand.u32 %v102, 4294901760
  %v1877 = vsub.f32 %v102, %v1876
  %v1878 = vand.u32 %v1877, 4294901760
  %v1879 = vsub.f32 %v1877, %v1878
  %v1880 = vand.u32 %v1879, 4294901760
  %1881 = vmatpush.msra.mxu0 %v1880
  %v1882 = vand.u32 %v101, 4294901760
  %v1883 = vsub.f32 %v101, %v1882
  %v1884 = vand.u32 %v1883, 4294901760
  %v1885 = vsub.f32 %v1883, %v1884
  %v1886 = vand.u32 %v1885, 4294901760
  %1887 = vmatpush.msra.mxu0 %v1886
  %v1888 = vand.u32 %v100, 4294901760
  %v1889 = vsub.f32 %v100, %v1888
  %v1890 = vand.u32 %v1889, 4294901760
  %v1891 = vsub.f32 %v1889, %v1890
  %v1892 = vand.u32 %v1891, 4294901760
  %1893 = vmatpush.msra.mxu0 %v1892
  %v1894 = vand.u32 %v99, 4294901760
  %v1895 = vsub.f32 %v99, %v1894
  %v1896 = vand.u32 %v1895, 4294901760
  %v1897 = vsub.f32 %v1895, %v1896
  %v1898 = vand.u32 %v1897, 4294901760
  %1899 = vmatpush.msra.mxu0 %v1898
  %v1900 = vand.u32 %v21, 4294901760
  %1901 = vmatmul.f32.gmra.mxu0 %v1900
  %v1902 = vpop.f32.mrf.mxu0
  %v1903 = vadd.f32 %v1786, %v1902
  %v1904 = vand.u32 %v27, 4294901760
  %1905 = vmatmul.f32.gmra.mxu0 %v1904
  %v1906 = vpop.f32.mrf.mxu0
  %v1907 = vadd.f32 %v1794, %v1906
  %v1908 = vand.u32 %v33, 4294901760
  %1909 = vmatmul.f32.gmra.mxu0 %v1908
  %v1910 = vpop.f32.mrf.mxu0
  %v1911 = vadd.f32 %v1802, %v1910
  %1912 = vdwg.mxu0
  %v1913 = vand.u32 %v114, 4294901760
  %v1914 = vsub.f32 %v114, %v1913
  %1915 = vmatpush.msra.mxu0 %v1914
  %v1916 = vand.u32 %v113, 4294901760
  %v1917 = vsub.f32 %v113, %v1916
  %1918 = vmatpush.msra.mxu0 %v1917
  %v1919 = vand.u32 %v112, 4294901760
  %v1920 = vsub.f32 %v112, %v1919
  %1921 = vmatpush.msra.mxu0 %v1920
  %v1922 = vand.u32 %v111, 4294901760
  %v1923 = vsub.f32 %v111, %v1922
  %1924 = vmatpush.msra.mxu0 %v1923
  %v1925 = vand.u32 %v110, 4294901760
  %v1926 = vsub.f32 %v110, %v1925
  %1927 = vmatpush.msra.mxu0 %v1926
  %v1928 = vand.u32 %v109, 4294901760
  %v1929 = vsub.f32 %v109, %v1928
  %1930 = vmatpush.msra.mxu0 %v1929
  %v1931 = vand.u32 %v108, 4294901760
  %v1932 = vsub.f32 %v108, %v1931
  %1933 = vmatpush.msra.mxu0 %v1932
  %v1934 = vand.u32 %v107, 4294901760
  %v1935 = vsub.f32 %v107, %v1934
  %1936 = vmatpush.msra.mxu0 %v1935
  %v1937 = vand.u32 %v106, 4294901760
  %v1938 = vsub.f32 %v106, %v1937
  %1939 = vmatpush.msra.mxu0 %v1938
  %v1940 = vand.u32 %v105, 4294901760
  %v1941 = vsub.f32 %v105, %v1940
  %1942 = vmatpush.msra.mxu0 %v1941
  %v1943 = vand.u32 %v104, 4294901760
  %v1944 = vsub.f32 %v104, %v1943
  %1945 = vmatpush.msra.mxu0 %v1944
  %v1946 = vand.u32 %v103, 4294901760
  %v1947 = vsub.f32 %v103, %v1946
  %1948 = vmatpush.msra.mxu0 %v1947
  %v1949 = vand.u32 %v102, 4294901760
  %v1950 = vsub.f32 %v102, %v1949
  %1951 = vmatpush.msra.mxu0 %v1950
  %v1952 = vand.u32 %v101, 4294901760
  %v1953 = vsub.f32 %v101, %v1952
  %1954 = vmatpush.msra.mxu0 %v1953
  %v1955 = vand.u32 %v100, 4294901760
  %v1956 = vsub.f32 %v100, %v1955
  %1957 = vmatpush.msra.mxu0 %v1956
  %v1958 = vand.u32 %v99, 4294901760
  %v1959 = vsub.f32 %v99, %v1958
  %1960 = vmatpush.msra.mxu0 %v1959
  %v1961 = vand.u32 %v21, 4294901760
  %v1962 = vsub.f32 %v21, %v1961
  %1963 = vmatmul.f32.gmra.mxu0 %v1962
  %v1964 = vpop.f32.mrf.mxu0
  %v1965 = vadd.f32 %v1903, %v1964
  %v1966 = vand.u32 %v27, 4294901760
  %v1967 = vsub.f32 %v27, %v1966
  %1968 = vmatmul.f32.gmra.mxu0 %v1967
  %v1969 = vpop.f32.mrf.mxu0
  %v1970 = vadd.f32 %v1907, %v1969
  %v1971 = vand.u32 %v33, 4294901760
  %v1972 = vsub.f32 %v33, %v1971
  %1973 = vmatmul.f32.gmra.mxu0 %v1972
  %v1974 = vpop.f32.mrf.mxu0
  %v1975 = vadd.f32 %v1911, %v1974
  %1976 = vdwg.mxu0
  %v1977 = vand.u32 %v114, 4294901760
  %1978 = vmatpush.msra.mxu0 %v1977
  %v1979 = vand.u32 %v113, 4294901760
  %1980 = vmatpush.msra.mxu0 %v1979
  %v1981 = vand.u32 %v112, 4294901760
  %1982 = vmatpush.msra.mxu0 %v1981
  %v1983 = vand.u32 %v111, 4294901760
  %1984 = vmatpush.msra.mxu0 %v1983
  %v1985 = vand.u32 %v110, 4294901760
  %1986 = vmatpush.msra.mxu0 %v1985
  %v1987 = vand.u32 %v109, 4294901760
  %1988 = vmatpush.msra.mxu0 %v1987
  %v1989 = vand.u32 %v108, 4294901760
  %1990 = vmatpush.msra.mxu0 %v1989
  %v1991 = vand.u32 %v107, 4294901760
  %1992 = vmatpush.msra.mxu0 %v1991
  %v1993 = vand.u32 %v106, 4294901760
  %1994 = vmatpush.msra.mxu0 %v1993
  %v1995 = vand.u32 %v105, 4294901760
  %1996 = vmatpush.msra.mxu0 %v1995
  %v1997 = vand.u32 %v104, 4294901760
  %1998 = vmatpush.msra.mxu0 %v1997
  %v1999 = vand.u32 %v103, 4294901760
  %2000 = vmatpush.msra.mxu0 %v1999
  %v2001 = vand.u32 %v102, 4294901760
  %2002 = vmatpush.msra.mxu0 %v2001
  %v2003 = vand.u32 %v101, 4294901760
  %2004 = vmatpush.msra.mxu0 %v2003
  %v2005 = vand.u32 %v100, 4294901760
  %2006 = vmatpush.msra.mxu0 %v2005
  %v2007 = vand.u32 %v99, 4294901760
  %2008 = vmatpush.msra.mxu0 %v2007
  %v2009 = vand.u32 %v21, 4294901760
  %v2010 = vsub.f32 %v21, %v2009
  %v2011 = vand.u32 %v2010, 4294901760
  %2012 = vmatmul.f32.gmra.mxu0 %v2011
  %v2013 = vpop.f32.mrf.mxu0
  %v2014 = vadd.f32 %v1965, %v2013
  %v2015 = vand.u32 %v27, 4294901760
  %v2016 = vsub.f32 %v27, %v2015
  %v2017 = vand.u32 %v2016, 4294901760
  %2018 = vmatmul.f32.gmra.mxu0 %v2017
  %v2019 = vpop.f32.mrf.mxu0
  %v2020 = vadd.f32 %v1970, %v2019
  %v2021 = vand.u32 %v33, 4294901760
  %v2022 = vsub.f32 %v33, %v2021
  %v2023 = vand.u32 %v2022, 4294901760
  %2024 = vmatmul.f32.gmra.mxu0 %v2023
  %v2025 = vpop.f32.mrf.mxu0
  %v2026 = vadd.f32 %v1975, %v2025
  %2027 = vdwg.mxu0
  %v2028 = vand.u32 %v114, 4294901760
  %v2029 = vsub.f32 %v114, %v2028
  %v2030 = vand.u32 %v2029, 4294901760
  %2031 = vmatpush.msra.mxu0 %v2030
  %v2032 = vand.u32 %v113, 4294901760
  %v2033 = vsub.f32 %v113, %v2032
  %v2034 = vand.u32 %v2033, 4294901760
  %2035 = vmatpush.msra.mxu0 %v2034
  %v2036 = vand.u32 %v112, 4294901760
  %v2037 = vsub.f32 %v112, %v2036
  %v2038 = vand.u32 %v2037, 4294901760
  %2039 = vmatpush.msra.mxu0 %v2038
  %v2040 = vand.u32 %v111, 4294901760
  %v2041 = vsub.f32 %v111, %v2040
  %v2042 = vand.u32 %v2041, 4294901760
  %2043 = vmatpush.msra.mxu0 %v2042
  %v2044 = vand.u32 %v110, 4294901760
  %v2045 = vsub.f32 %v110, %v2044
  %v2046 = vand.u32 %v2045, 4294901760
  %2047 = vmatpush.msra.mxu0 %v2046
  %v2048 = vand.u32 %v109, 4294901760
  %v2049 = vsub.f32 %v109, %v2048
  %v2050 = vand.u32 %v2049, 4294901760
  %2051 = vmatpush.msra.mxu0 %v2050
  %v2052 = vand.u32 %v108, 4294901760
  %v2053 = vsub.f32 %v108, %v2052
  %v2054 = vand.u32 %v2053, 4294901760
  %2055 = vmatpush.msra.mxu0 %v2054
  %v2056 = vand.u32 %v107, 4294901760
  %v2057 = vsub.f32 %v107, %v2056
  %v2058 = vand.u32 %v2057, 4294901760
  %2059 = vmatpush.msra.mxu0 %v2058
  %v2060 = vand.u32 %v106, 4294901760
  %v2061 = vsub.f32 %v106, %v2060
  %v2062 = vand.u32 %v2061, 4294901760
  %2063 = vmatpush.msra.mxu0 %v2062
  %v2064 = vand.u32 %v105, 4294901760
  %v2065 = vsub.f32 %v105, %v2064
  %v2066 = vand.u32 %v2065, 4294901760
  %2067 = vmatpush.msra.mxu0 %v2066
  %v2068 = vand.u32 %v104, 4294901760
  %v2069 = vsub.f32 %v104, %v2068
  %v2070 = vand.u32 %v2069, 4294901760
  %2071 = vmatpush.msra.mxu0 %v2070
  %v2072 = vand.u32 %v103, 4294901760
  %v2073 = vsub.f32 %v103, %v2072
  %v2074 = vand.u32 %v2073, 4294901760
  %2075 = vmatpush.msra.mxu0 %v2074
  %v2076 = vand.u32 %v102, 4294901760
  %v2077 = vsub.f32 %v102, %v2076
  %v2078 = vand.u32 %v2077, 4294901760
  %2079 = vmatpush.msra.mxu0 %v2078
  %v2080 = vand.u32 %v101, 4294901760
  %v2081 = vsub.f32 %v101, %v2080
  %v2082 = vand.u32 %v2081, 4294901760
  %2083 = vmatpush.msra.mxu0 %v2082
  %v2084 = vand.u32 %v100, 4294901760
  %v2085 = vsub.f32 %v100, %v2084
  %v2086 = vand.u32 %v2085, 4294901760
  %2087 = vmatpush.msra.mxu0 %v2086
  %v2088 = vand.u32 %v99, 4294901760
  %v2089 = vsub.f32 %v99, %v2088
  %v2090 = vand.u32 %v2089, 4294901760
  %2091 = vmatpush.msra.mxu0 %v2090
  %v2092 = vand.u32 %v21, 4294901760
  %2093 = vmatmul.f32.gmra.mxu0 %v2092
  %v2094 = vpop.f32.mrf.mxu0
  %v2095 = vadd.f32 %v2014, %v2094
  %v2096 = vand.u32 %v27, 4294901760
  %2097 = vmatmul.f32.gmra.mxu0 %v2096
  %v2098 = vpop.f32.mrf.mxu0
  %v2099 = vadd.f32 %v2020, %v2098
  %v2100 = vand.u32 %v33, 4294901760
  %2101 = vmatmul.f32.gmra.mxu0 %v2100
  %v2102 = vpop.f32.mrf.mxu0
  %v2103 = vadd.f32 %v2026, %v2102
  %2104 = vdwg.mxu0
  %v2105 = vand.u32 %v114, 4294901760
  %2106 = vmatpush.msra.mxu0 %v2105
  %v2107 = vand.u32 %v113, 4294901760
  %2108 = vmatpush.msra.mxu0 %v2107
  %v2109 = vand.u32 %v112, 4294901760
  %2110 = vmatpush.msra.mxu0 %v2109
  %v2111 = vand.u32 %v111, 4294901760
  %2112 = vmatpush.msra.mxu0 %v2111
  %v2113 = vand.u32 %v110, 4294901760
  %2114 = vmatpush.msra.mxu0 %v2113
  %v2115 = vand.u32 %v109, 4294901760
  %2116 = vmatpush.msra.mxu0 %v2115
  %v2117 = vand.u32 %v108, 4294901760
  %2118 = vmatpush.msra.mxu0 %v2117
  %v2119 = vand.u32 %v107, 4294901760
  %2120 = vmatpush.msra.mxu0 %v2119
  %v2121 = vand.u32 %v106, 4294901760
  %2122 = vmatpush.msra.mxu0 %v2121
  %v2123 = vand.u32 %v105, 4294901760
  %2124 = vmatpush.msra.mxu0 %v2123
  %v2125 = vand.u32 %v104, 4294901760
  %2126 = vmatpush.msra.mxu0 %v2125
  %v2127 = vand.u32 %v103, 4294901760
  %2128 = vmatpush.msra.mxu0 %v2127
  %v2129 = vand.u32 %v102, 4294901760
  %2130 = vmatpush.msra.mxu0 %v2129
  %v2131 = vand.u32 %v101, 4294901760
  %2132 = vmatpush.msra.mxu0 %v2131
  %v2133 = vand.u32 %v100, 4294901760
  %2134 = vmatpush.msra.mxu0 %v2133
  %v2135 = vand.u32 %v99, 4294901760
  %2136 = vmatpush.msra.mxu0 %v2135
  %v2137 = vand.u32 %v21, 4294901760
  %2138 = vmatmul.f32.gmra.mxu0 %v2137
  %v2139 = vpop.f32.mrf.mxu0
  %v2140 = vadd.f32 %v2095, %v2139
  %v2141 = vand.u32 %v27, 4294901760
  %2142 = vmatmul.f32.gmra.mxu0 %v2141
  %v2143 = vpop.f32.mrf.mxu0
  %v2144 = vadd.f32 %v2099, %v2143
  %v2145 = vand.u32 %v33, 4294901760
  %2146 = vmatmul.f32.gmra.mxu0 %v2145
  %v2147 = vpop.f32.mrf.mxu0
  %v2148 = vadd.f32 %v2103, %v2147
  %2149 = vdwg.mxu0
  %2150 = vmatpush.msra.mxu0 0.0
  %2151 = vmatpush.msra.mxu0 0.0
  %2152 = vmatpush.msra.mxu0 0.0
  %2153 = vmatpush.msra.mxu0 0.0
  %2154 = vmatpush.msra.mxu0 0.0
  %2155 = vmatpush.msra.mxu0 0.0
  %2156 = vmatpush.msra.mxu0 0.0
  %2157 = vmatpush.msra.mxu0 0.0
  %2158 = vmatpush.msra.mxu0 0.0
  %2159 = vmatpush.msra.mxu0 0.0
  %v2160 = vand.u32 %v133, 4294901760
  %2161 = vmatpush.msra.mxu0 %v2160
  %v2162 = vand.u32 %v119, 4294901760
  %2163 = vmatpush.msra.mxu0 %v2162
  %v2164 = vand.u32 %v118, 4294901760
  %2165 = vmatpush.msra.mxu0 %v2164
  %v2166 = vand.u32 %v117, 4294901760
  %2167 = vmatpush.msra.mxu0 %v2166
  %v2168 = vand.u32 %v116, 4294901760
  %2169 = vmatpush.msra.mxu0 %v2168
  %v2170 = vand.u32 %v115, 4294901760
  %2171 = vmatpush.msra.mxu0 %v2170
  %v2172 = vand.u32 %v123, 4294901760
  %v2173 = vsub.f32 %v123, %v2172
  %v2174 = vand.u32 %v2173, 4294901760
  %v2175 = vsub.f32 %v2173, %v2174
  %v2176 = vand.u32 %v2175, 4294901760
  %2177 = vmatmul.f32.gmra.mxu0 %v2176
  %v2178 = vpop.f32.mrf.mxu0
  %v2179 = vadd.f32 %v2140, %v2178
  %v2180 = vand.u32 %v126, 4294901760
  %v2181 = vsub.f32 %v126, %v2180
  %v2182 = vand.u32 %v2181, 4294901760
  %v2183 = vsub.f32 %v2181, %v2182
  %v2184 = vand.u32 %v2183, 4294901760
  %2185 = vmatmul.f32.gmra.mxu0 %v2184
  %v2186 = vpop.f32.mrf.mxu0
  %v2187 = vadd.f32 %v2144, %v2186
  %v2188 = vand.u32 %v129, 4294901760
  %v2189 = vsub.f32 %v129, %v2188
  %v2190 = vand.u32 %v2189, 4294901760
  %v2191 = vsub.f32 %v2189, %v2190
  %v2192 = vand.u32 %v2191, 4294901760
  %2193 = vmatmul.f32.gmra.mxu0 %v2192
  %v2194 = vpop.f32.mrf.mxu0
  %v2195 = vadd.f32 %v2148, %v2194
  %2196 = vdwg.mxu0
  %2197 = vmatpush.msra.mxu0 0.0
  %2198 = vmatpush.msra.mxu0 0.0
  %2199 = vmatpush.msra.mxu0 0.0
  %2200 = vmatpush.msra.mxu0 0.0
  %2201 = vmatpush.msra.mxu0 0.0
  %2202 = vmatpush.msra.mxu0 0.0
  %2203 = vmatpush.msra.mxu0 0.0
  %2204 = vmatpush.msra.mxu0 0.0
  %2205 = vmatpush.msra.mxu0 0.0
  %2206 = vmatpush.msra.mxu0 0.0
  %v2207 = vand.u32 %v133, 4294901760
  %v2208 = vsub.f32 %v133, %v2207
  %v2209 = vand.u32 %v2208, 4294901760
  %v2210 = vsub.f32 %v2208, %v2209
  %v2211 = vand.u32 %v2210, 4294901760
  %2212 = vmatpush.msra.mxu0 %v2211
  %v2213 = vand.u32 %v119, 4294901760
  %v2214 = vsub.f32 %v119, %v2213
  %v2215 = vand.u32 %v2214, 4294901760
  %v2216 = vsub.f32 %v2214, %v2215
  %v2217 = vand.u32 %v2216, 4294901760
  %2218 = vmatpush.msra.mxu0 %v2217
  %v2219 = vand.u32 %v118, 4294901760
  %v2220 = vsub.f32 %v118, %v2219
  %v2221 = vand.u32 %v2220, 4294901760
  %v2222 = vsub.f32 %v2220, %v2221
  %v2223 = vand.u32 %v2222, 4294901760
  %2224 = vmatpush.msra.mxu0 %v2223
  %v2225 = vand.u32 %v117, 4294901760
  %v2226 = vsub.f32 %v117, %v2225
  %v2227 = vand.u32 %v2226, 4294901760
  %v2228 = vsub.f32 %v2226, %v2227
  %v2229 = vand.u32 %v2228, 4294901760
  %2230 = vmatpush.msra.mxu0 %v2229
  %v2231 = vand.u32 %v116, 4294901760
  %v2232 = vsub.f32 %v116, %v2231
  %v2233 = vand.u32 %v2232, 4294901760
  %v2234 = vsub.f32 %v2232, %v2233
  %v2235 = vand.u32 %v2234, 4294901760
  %2236 = vmatpush.msra.mxu0 %v2235
  %v2237 = vand.u32 %v115, 4294901760
  %v2238 = vsub.f32 %v115, %v2237
  %v2239 = vand.u32 %v2238, 4294901760
  %v2240 = vsub.f32 %v2238, %v2239
  %v2241 = vand.u32 %v2240, 4294901760
  %2242 = vmatpush.msra.mxu0 %v2241
  %v2243 = vand.u32 %v123, 4294901760
  %2244 = vmatmul.f32.gmra.mxu0 %v2243
  %v2245 = vpop.f32.mrf.mxu0
  %v2246 = vadd.f32 %v2179, %v2245
  %v2247 = vand.u32 %v126, 4294901760
  %2248 = vmatmul.f32.gmra.mxu0 %v2247
  %v2249 = vpop.f32.mrf.mxu0
  %v2250 = vadd.f32 %v2187, %v2249
  %v2251 = vand.u32 %v129, 4294901760
  %2252 = vmatmul.f32.gmra.mxu0 %v2251
  %v2253 = vpop.f32.mrf.mxu0
  %v2254 = vadd.f32 %v2195, %v2253
  %2255 = vdwg.mxu0
  %2256 = vmatpush.msra.mxu0 0.0
  %2257 = vmatpush.msra.mxu0 0.0
  %2258 = vmatpush.msra.mxu0 0.0
  %2259 = vmatpush.msra.mxu0 0.0
  %2260 = vmatpush.msra.mxu0 0.0
  %2261 = vmatpush.msra.mxu0 0.0
  %2262 = vmatpush.msra.mxu0 0.0
  %2263 = vmatpush.msra.mxu0 0.0
  %2264 = vmatpush.msra.mxu0 0.0
  %2265 = vmatpush.msra.mxu0 0.0
  %v2266 = vand.u32 %v133, 4294901760
  %v2267 = vsub.f32 %v133, %v2266
  %2268 = vmatpush.msra.mxu0 %v2267
  %v2269 = vand.u32 %v119, 4294901760
  %v2270 = vsub.f32 %v119, %v2269
  %2271 = vmatpush.msra.mxu0 %v2270
  %v2272 = vand.u32 %v118, 4294901760
  %v2273 = vsub.f32 %v118, %v2272
  %2274 = vmatpush.msra.mxu0 %v2273
  %v2275 = vand.u32 %v117, 4294901760
  %v2276 = vsub.f32 %v117, %v2275
  %2277 = vmatpush.msra.mxu0 %v2276
  %v2278 = vand.u32 %v116, 4294901760
  %v2279 = vsub.f32 %v116, %v2278
  %2280 = vmatpush.msra.mxu0 %v2279
  %v2281 = vand.u32 %v115, 4294901760
  %v2282 = vsub.f32 %v115, %v2281
  %2283 = vmatpush.msra.mxu0 %v2282
  %v2284 = vand.u32 %v123, 4294901760
  %v2285 = vsub.f32 %v123, %v2284
  %2286 = vmatmul.f32.gmra.mxu0 %v2285
  %v2287 = vpop.f32.mrf.mxu0
  %v2288 = vadd.f32 %v2246, %v2287
  %v2289 = vand.u32 %v126, 4294901760
  %v2290 = vsub.f32 %v126, %v2289
  %2291 = vmatmul.f32.gmra.mxu0 %v2290
  %v2292 = vpop.f32.mrf.mxu0
  %v2293 = vadd.f32 %v2250, %v2292
  %v2294 = vand.u32 %v129, 4294901760
  %v2295 = vsub.f32 %v129, %v2294
  %2296 = vmatmul.f32.gmra.mxu0 %v2295
  %v2297 = vpop.f32.mrf.mxu0
  %v2298 = vadd.f32 %v2254, %v2297
  %2299 = vdwg.mxu0
  %2300 = vmatpush.msra.mxu0 0.0
  %2301 = vmatpush.msra.mxu0 0.0
  %2302 = vmatpush.msra.mxu0 0.0
  %2303 = vmatpush.msra.mxu0 0.0
  %2304 = vmatpush.msra.mxu0 0.0
  %2305 = vmatpush.msra.mxu0 0.0
  %2306 = vmatpush.msra.mxu0 0.0
  %2307 = vmatpush.msra.mxu0 0.0
  %2308 = vmatpush.msra.mxu0 0.0
  %2309 = vmatpush.msra.mxu0 0.0
  %v2310 = vand.u32 %v133, 4294901760
  %2311 = vmatpush.msra.mxu0 %v2310
  %v2312 = vand.u32 %v119, 4294901760
  %2313 = vmatpush.msra.mxu0 %v2312
  %v2314 = vand.u32 %v118, 4294901760
  %2315 = vmatpush.msra.mxu0 %v2314
  %v2316 = vand.u32 %v117, 4294901760
  %2317 = vmatpush.msra.mxu0 %v2316
  %v2318 = vand.u32 %v116, 4294901760
  %2319 = vmatpush.msra.mxu0 %v2318
  %v2320 = vand.u32 %v115, 4294901760
  %2321 = vmatpush.msra.mxu0 %v2320
  %v2322 = vand.u32 %v123, 4294901760
  %v2323 = vsub.f32 %v123, %v2322
  %v2324 = vand.u32 %v2323, 4294901760
  %2325 = vmatmul.f32.gmra.mxu0 %v2324
  %v2326 = vpop.f32.mrf.mxu0
  %v2327 = vadd.f32 %v2288, %v2326
  %v2328 = vand.u32 %v126, 4294901760
  %v2329 = vsub.f32 %v126, %v2328
  %v2330 = vand.u32 %v2329, 4294901760
  %2331 = vmatmul.f32.gmra.mxu0 %v2330
  %v2332 = vpop.f32.mrf.mxu0
  %v2333 = vadd.f32 %v2293, %v2332
  %v2334 = vand.u32 %v129, 4294901760
  %v2335 = vsub.f32 %v129, %v2334
  %v2336 = vand.u32 %v2335, 4294901760
  %2337 = vmatmul.f32.gmra.mxu0 %v2336
  %v2338 = vpop.f32.mrf.mxu0
  %v2339 = vadd.f32 %v2298, %v2338
  %2340 = vdwg.mxu0
  %2341 = vmatpush.msra.mxu0 0.0
  %2342 = vmatpush.msra.mxu0 0.0
  %2343 = vmatpush.msra.mxu0 0.0
  %2344 = vmatpush.msra.mxu0 0.0
  %2345 = vmatpush.msra.mxu0 0.0
  %2346 = vmatpush.msra.mxu0 0.0
  %2347 = vmatpush.msra.mxu0 0.0
  %2348 = vmatpush.msra.mxu0 0.0
  %2349 = vmatpush.msra.mxu0 0.0
  %2350 = vmatpush.msra.mxu0 0.0
  %v2351 = vand.u32 %v133, 4294901760
  %v2352 = vsub.f32 %v133, %v2351
  %v2353 = vand.u32 %v2352, 4294901760
  %2354 = vmatpush.msra.mxu0 %v2353
  %v2355 = vand.u32 %v119, 4294901760
  %v2356 = vsub.f32 %v119, %v2355
  %v2357 = vand.u32 %v2356, 4294901760
  %2358 = vmatpush.msra.mxu0 %v2357
  %v2359 = vand.u32 %v118, 4294901760
  %v2360 = vsub.f32 %v118, %v2359
  %v2361 = vand.u32 %v2360, 4294901760
  %2362 = vmatpush.msra.mxu0 %v2361
  %v2363 = vand.u32 %v117, 4294901760
  %v2364 = vsub.f32 %v117, %v2363
  %v2365 = vand.u32 %v2364, 4294901760
  %2366 = vmatpush.msra.mxu0 %v2365
  %v2367 = vand.u32 %v116, 4294901760
  %v2368 = vsub.f32 %v116, %v2367
  %v2369 = vand.u32 %v2368, 4294901760
  %2370 = vmatpush.msra.mxu0 %v2369
  %v2371 = vand.u32 %v115, 4294901760
  %v2372 = vsub.f32 %v115, %v2371
  %v2373 = vand.u32 %v2372, 4294901760
  %2374 = vmatpush.msra.mxu0 %v2373
  %v2375 = vand.u32 %v123, 4294901760
  %2376 = vmatmul.f32.gmra.mxu0 %v2375
  %v2377 = vpop.f32.mrf.mxu0
  %v2378 = vadd.f32 %v2327, %v2377
  %v2379 = vand.u32 %v126, 4294901760
  %2380 = vmatmul.f32.gmra.mxu0 %v2379
  %v2381 = vpop.f32.mrf.mxu0
  %v2382 = vadd.f32 %v2333, %v2381
  %v2383 = vand.u32 %v129, 4294901760
  %2384 = vmatmul.f32.gmra.mxu0 %v2383
  %v2385 = vpop.f32.mrf.mxu0
  %v2386 = vadd.f32 %v2339, %v2385
  %2387 = vdwg.mxu0
  %2388 = vmatpush.msra.mxu0 0.0
  %2389 = vmatpush.msra.mxu0 0.0
  %2390 = vmatpush.msra.mxu0 0.0
  %2391 = vmatpush.msra.mxu0 0.0
  %2392 = vmatpush.msra.mxu0 0.0
  %2393 = vmatpush.msra.mxu0 0.0
  %2394 = vmatpush.msra.mxu0 0.0
  %2395 = vmatpush.msra.mxu0 0.0
  %2396 = vmatpush.msra.mxu0 0.0
  %2397 = vmatpush.msra.mxu0 0.0
  %v2398 = vand.u32 %v133, 4294901760
  %2399 = vmatpush.msra.mxu0 %v2398
  %v2400 = vand.u32 %v119, 4294901760
  %2401 = vmatpush.msra.mxu0 %v2400
  %v2402 = vand.u32 %v118, 4294901760
  %2403 = vmatpush.msra.mxu0 %v2402
  %v2404 = vand.u32 %v117, 4294901760
  %2405 = vmatpush.msra.mxu0 %v2404
  %v2406 = vand.u32 %v116, 4294901760
  %2407 = vmatpush.msra.mxu0 %v2406
  %v2408 = vand.u32 %v115, 4294901760
  %2409 = vmatpush.msra.mxu0 %v2408
  %v2410 = vand.u32 %v123, 4294901760
  %2411 = vmatmul.f32.gmra.mxu0 %v2410
  %v2412 = vpop.f32.mrf.mxu0
  %v2413 = vadd.f32 %v2378, %v2412
  %v2414 = vand.u32 %v126, 4294901760
  %2415 = vmatmul.f32.gmra.mxu0 %v2414
  %v2416 = vpop.f32.mrf.mxu0
  %v2417 = vadd.f32 %v2382, %v2416
  %v2418 = vand.u32 %v129, 4294901760
  %2419 = vmatmul.f32.gmra.mxu0 %v2418
  %v2420 = vpop.f32.mrf.mxu0
  %v2421 = vadd.f32 %v2386, %v2420
  %2422 = vdwg.mxu0
  %v2423 = vld [vmem:[%s2] sm:$0xff]
  %v2424 = vld [vmem:[%s2 + $0x8] sm:$0xff]
  %v2425 = vld [vmem:[%s2 + $0x10] sm:$0x1f]
  %s2426 = scalar_lea.vmem %s2, 24
  %v2427 = vld [vmem:[%s2426] sm:$0xff]
  %v2428 = vld [vmem:[%s2426 + $0x8] sm:$0xff]
  %v2429 = vld [vmem:[%s2426 + $0x10] sm:$0x1f]
  %v2432 = vrot.slane %v2413, 2
  %v2433 = vrot.slane %v2417, 2
  %v2434 = vsel %vm131, %v2432, %v2433
  %vm2435 = vcmask 171008
  %v2436 = vsel %vm2435, %v2434, 0
  %vm2438 = vcmask 1044480
  %v2440 = vsel %vm2438, %v2429, 0
  %2442 = vmatpush.msra.mxu0 0.0
  %2443 = vmatpush.msra.mxu0 0.0
  %2444 = vmatpush.msra.mxu0 0.0
  %2445 = vmatpush.msra.mxu0 0.0
  %2446 = vmatpush.msra.mxu0 0.0
  %2447 = vmatpush.msra.mxu0 0.0
  %2448 = vmatpush.msra.mxu0 0.0
  %2449 = vmatpush.msra.mxu0 0.0
  %2450 = vmatpush.msra.mxu0 0.0
  %2451 = vmatpush.msra.mxu0 0.0
  %2452 = vmatpush.msra.mxu0 0.0
  %2453 = vmatpush.msra.mxu0 0.0
  %2454 = vmatpush.msra.mxu0 0.0
  %v2455 = vand.u32 %v2440, 4294901760
  %2456 = vmatpush.msra.mxu0 %v2455
  %v2457 = vand.u32 %v2428, 4294901760
  %2458 = vmatpush.msra.mxu0 %v2457
  %v2459 = vand.u32 %v2427, 4294901760
  %2460 = vmatpush.msra.mxu0 %v2459
  %v2461 = vand.u32 %v2436, 4294901760
  %v2462 = vsub.f32 %v2436, %v2461
  %v2463 = vand.u32 %v2462, 4294901760
  %v2464 = vsub.f32 %v2462, %v2463
  %v2465 = vand.u32 %v2464, 4294901760
  %2466 = vmatmul.f32.gmra.mxu0 %v2465
  %v2467 = vpop.f32.mrf.mxu0
  %v2468 = vadd.f32 0.0, %v2467
  %2469 = vdwg.mxu0
  %2470 = vmatpush.msra.mxu0 0.0
  %2471 = vmatpush.msra.mxu0 0.0
  %2472 = vmatpush.msra.mxu0 0.0
  %2473 = vmatpush.msra.mxu0 0.0
  %2474 = vmatpush.msra.mxu0 0.0
  %2475 = vmatpush.msra.mxu0 0.0
  %2476 = vmatpush.msra.mxu0 0.0
  %2477 = vmatpush.msra.mxu0 0.0
  %2478 = vmatpush.msra.mxu0 0.0
  %2479 = vmatpush.msra.mxu0 0.0
  %2480 = vmatpush.msra.mxu0 0.0
  %2481 = vmatpush.msra.mxu0 0.0
  %2482 = vmatpush.msra.mxu0 0.0
  %v2483 = vand.u32 %v2440, 4294901760
  %v2484 = vsub.f32 %v2440, %v2483
  %v2485 = vand.u32 %v2484, 4294901760
  %v2486 = vsub.f32 %v2484, %v2485
  %v2487 = vand.u32 %v2486, 4294901760
  %2488 = vmatpush.msra.mxu0 %v2487
  %v2489 = vand.u32 %v2428, 4294901760
  %v2490 = vsub.f32 %v2428, %v2489
  %v2491 = vand.u32 %v2490, 4294901760
  %v2492 = vsub.f32 %v2490, %v2491
  %v2493 = vand.u32 %v2492, 4294901760
  %2494 = vmatpush.msra.mxu0 %v2493
  %v2495 = vand.u32 %v2427, 4294901760
  %v2496 = vsub.f32 %v2427, %v2495
  %v2497 = vand.u32 %v2496, 4294901760
  %v2498 = vsub.f32 %v2496, %v2497
  %v2499 = vand.u32 %v2498, 4294901760
  %2500 = vmatpush.msra.mxu0 %v2499
  %v2501 = vand.u32 %v2436, 4294901760
  %2502 = vmatmul.f32.gmra.mxu0 %v2501
  %v2503 = vpop.f32.mrf.mxu0
  %v2504 = vadd.f32 %v2468, %v2503
  %2505 = vdwg.mxu0
  %2506 = vmatpush.msra.mxu0 0.0
  %2507 = vmatpush.msra.mxu0 0.0
  %2508 = vmatpush.msra.mxu0 0.0
  %2509 = vmatpush.msra.mxu0 0.0
  %2510 = vmatpush.msra.mxu0 0.0
  %2511 = vmatpush.msra.mxu0 0.0
  %2512 = vmatpush.msra.mxu0 0.0
  %2513 = vmatpush.msra.mxu0 0.0
  %2514 = vmatpush.msra.mxu0 0.0
  %2515 = vmatpush.msra.mxu0 0.0
  %2516 = vmatpush.msra.mxu0 0.0
  %2517 = vmatpush.msra.mxu0 0.0
  %2518 = vmatpush.msra.mxu0 0.0
  %v2519 = vand.u32 %v2440, 4294901760
  %v2520 = vsub.f32 %v2440, %v2519
  %2521 = vmatpush.msra.mxu0 %v2520
  %v2522 = vand.u32 %v2428, 4294901760
  %v2523 = vsub.f32 %v2428, %v2522
  %2524 = vmatpush.msra.mxu0 %v2523
  %v2525 = vand.u32 %v2427, 4294901760
  %v2526 = vsub.f32 %v2427, %v2525
  %2527 = vmatpush.msra.mxu0 %v2526
  %v2528 = vand.u32 %v2436, 4294901760
  %v2529 = vsub.f32 %v2436, %v2528
  %2530 = vmatmul.f32.gmra.mxu0 %v2529
  %v2531 = vpop.f32.mrf.mxu0
  %v2532 = vadd.f32 %v2504, %v2531
  %2533 = vdwg.mxu0
  %2534 = vmatpush.msra.mxu0 0.0
  %2535 = vmatpush.msra.mxu0 0.0
  %2536 = vmatpush.msra.mxu0 0.0
  %2537 = vmatpush.msra.mxu0 0.0
  %2538 = vmatpush.msra.mxu0 0.0
  %2539 = vmatpush.msra.mxu0 0.0
  %2540 = vmatpush.msra.mxu0 0.0
  %2541 = vmatpush.msra.mxu0 0.0
  %2542 = vmatpush.msra.mxu0 0.0
  %2543 = vmatpush.msra.mxu0 0.0
  %2544 = vmatpush.msra.mxu0 0.0
  %2545 = vmatpush.msra.mxu0 0.0
  %2546 = vmatpush.msra.mxu0 0.0
  %v2547 = vand.u32 %v2440, 4294901760
  %2548 = vmatpush.msra.mxu0 %v2547
  %v2549 = vand.u32 %v2428, 4294901760
  %2550 = vmatpush.msra.mxu0 %v2549
  %v2551 = vand.u32 %v2427, 4294901760
  %2552 = vmatpush.msra.mxu0 %v2551
  %v2553 = vand.u32 %v2436, 4294901760
  %v2554 = vsub.f32 %v2436, %v2553
  %v2555 = vand.u32 %v2554, 4294901760
  %2556 = vmatmul.f32.gmra.mxu0 %v2555
  %v2557 = vpop.f32.mrf.mxu0
  %v2558 = vadd.f32 %v2532, %v2557
  %2559 = vdwg.mxu0
  %2560 = vmatpush.msra.mxu0 0.0
  %2561 = vmatpush.msra.mxu0 0.0
  %2562 = vmatpush.msra.mxu0 0.0
  %2563 = vmatpush.msra.mxu0 0.0
  %2564 = vmatpush.msra.mxu0 0.0
  %2565 = vmatpush.msra.mxu0 0.0
  %2566 = vmatpush.msra.mxu0 0.0
  %2567 = vmatpush.msra.mxu0 0.0
  %2568 = vmatpush.msra.mxu0 0.0
  %2569 = vmatpush.msra.mxu0 0.0
  %2570 = vmatpush.msra.mxu0 0.0
  %2571 = vmatpush.msra.mxu0 0.0
  %2572 = vmatpush.msra.mxu0 0.0
  %v2573 = vand.u32 %v2440, 4294901760
  %v2574 = vsub.f32 %v2440, %v2573
  %v2575 = vand.u32 %v2574, 4294901760
  %2576 = vmatpush.msra.mxu0 %v2575
  %v2577 = vand.u32 %v2428, 4294901760
  %v2578 = vsub.f32 %v2428, %v2577
  %v2579 = vand.u32 %v2578, 4294901760
  %2580 = vmatpush.msra.mxu0 %v2579
  %v2581 = vand.u32 %v2427, 4294901760
  %v2582 = vsub.f32 %v2427, %v2581
  %v2583 = vand.u32 %v2582, 4294901760
  %2584 = vmatpush.msra.mxu0 %v2583
  %v2585 = vand.u32 %v2436, 4294901760
  %2586 = vmatmul.f32.gmra.mxu0 %v2585
  %v2587 = vpop.f32.mrf.mxu0
  %v2588 = vadd.f32 %v2558, %v2587
  %2589 = vdwg.mxu0
  %2590 = vmatpush.msra.mxu0 0.0
  %2591 = vmatpush.msra.mxu0 0.0
  %2592 = vmatpush.msra.mxu0 0.0
  %2593 = vmatpush.msra.mxu0 0.0
  %2594 = vmatpush.msra.mxu0 0.0
  %2595 = vmatpush.msra.mxu0 0.0
  %2596 = vmatpush.msra.mxu0 0.0
  %2597 = vmatpush.msra.mxu0 0.0
  %2598 = vmatpush.msra.mxu0 0.0
  %2599 = vmatpush.msra.mxu0 0.0
  %2600 = vmatpush.msra.mxu0 0.0
  %2601 = vmatpush.msra.mxu0 0.0
  %2602 = vmatpush.msra.mxu0 0.0
  %v2603 = vand.u32 %v2440, 4294901760
  %2604 = vmatpush.msra.mxu0 %v2603
  %v2605 = vand.u32 %v2428, 4294901760
  %2606 = vmatpush.msra.mxu0 %v2605
  %v2607 = vand.u32 %v2427, 4294901760
  %2608 = vmatpush.msra.mxu0 %v2607
  %v2609 = vand.u32 %v2436, 4294901760
  %2610 = vmatmul.f32.gmra.mxu0 %v2609
  %v2611 = vpop.f32.mrf.mxu0
  %v2612 = vadd.f32 %v2588, %v2611
  %2613 = vdwg.mxu0
  %v2614 = vsel %vm2435, %v2413, 0
  %v2617 = vsel %vm2438, %v2425, 0
  %2619 = vmatpush.msra.mxu0 0.0
  %2620 = vmatpush.msra.mxu0 0.0
  %2621 = vmatpush.msra.mxu0 0.0
  %2622 = vmatpush.msra.mxu0 0.0
  %2623 = vmatpush.msra.mxu0 0.0
  %2624 = vmatpush.msra.mxu0 0.0
  %2625 = vmatpush.msra.mxu0 0.0
  %2626 = vmatpush.msra.mxu0 0.0
  %2627 = vmatpush.msra.mxu0 0.0
  %2628 = vmatpush.msra.mxu0 0.0
  %2629 = vmatpush.msra.mxu0 0.0
  %2630 = vmatpush.msra.mxu0 0.0
  %2631 = vmatpush.msra.mxu0 0.0
  %v2632 = vand.u32 %v2617, 4294901760
  %2633 = vmatpush.msra.mxu0 %v2632
  %v2634 = vand.u32 %v2424, 4294901760
  %2635 = vmatpush.msra.mxu0 %v2634
  %v2636 = vand.u32 %v2423, 4294901760
  %2637 = vmatpush.msra.mxu0 %v2636
  %v2638 = vand.u32 %v2614, 4294901760
  %v2639 = vsub.f32 %v2614, %v2638
  %v2640 = vand.u32 %v2639, 4294901760
  %v2641 = vsub.f32 %v2639, %v2640
  %v2642 = vand.u32 %v2641, 4294901760
  %2643 = vmatmul.f32.gmra.mxu0 %v2642
  %v2644 = vpop.f32.mrf.mxu0
  %v2645 = vadd.f32 %v2612, %v2644
  %2646 = vdwg.mxu0
  %2647 = vmatpush.msra.mxu0 0.0
  %2648 = vmatpush.msra.mxu0 0.0
  %2649 = vmatpush.msra.mxu0 0.0
  %2650 = vmatpush.msra.mxu0 0.0
  %2651 = vmatpush.msra.mxu0 0.0
  %2652 = vmatpush.msra.mxu0 0.0
  %2653 = vmatpush.msra.mxu0 0.0
  %2654 = vmatpush.msra.mxu0 0.0
  %2655 = vmatpush.msra.mxu0 0.0
  %2656 = vmatpush.msra.mxu0 0.0
  %2657 = vmatpush.msra.mxu0 0.0
  %2658 = vmatpush.msra.mxu0 0.0
  %2659 = vmatpush.msra.mxu0 0.0
  %v2660 = vand.u32 %v2617, 4294901760
  %v2661 = vsub.f32 %v2617, %v2660
  %v2662 = vand.u32 %v2661, 4294901760
  %v2663 = vsub.f32 %v2661, %v2662
  %v2664 = vand.u32 %v2663, 4294901760
  %2665 = vmatpush.msra.mxu0 %v2664
  %v2666 = vand.u32 %v2424, 4294901760
  %v2667 = vsub.f32 %v2424, %v2666
  %v2668 = vand.u32 %v2667, 4294901760
  %v2669 = vsub.f32 %v2667, %v2668
  %v2670 = vand.u32 %v2669, 4294901760
  %2671 = vmatpush.msra.mxu0 %v2670
  %v2672 = vand.u32 %v2423, 4294901760
  %v2673 = vsub.f32 %v2423, %v2672
  %v2674 = vand.u32 %v2673, 4294901760
  %v2675 = vsub.f32 %v2673, %v2674
  %v2676 = vand.u32 %v2675, 4294901760
  %2677 = vmatpush.msra.mxu0 %v2676
  %v2678 = vand.u32 %v2614, 4294901760
  %2679 = vmatmul.f32.gmra.mxu0 %v2678
  %v2680 = vpop.f32.mrf.mxu0
  %v2681 = vadd.f32 %v2645, %v2680
  %2682 = vdwg.mxu0
  %2683 = vmatpush.msra.mxu0 0.0
  %2684 = vmatpush.msra.mxu0 0.0
  %2685 = vmatpush.msra.mxu0 0.0
  %2686 = vmatpush.msra.mxu0 0.0
  %2687 = vmatpush.msra.mxu0 0.0
  %2688 = vmatpush.msra.mxu0 0.0
  %2689 = vmatpush.msra.mxu0 0.0
  %2690 = vmatpush.msra.mxu0 0.0
  %2691 = vmatpush.msra.mxu0 0.0
  %2692 = vmatpush.msra.mxu0 0.0
  %2693 = vmatpush.msra.mxu0 0.0
  %2694 = vmatpush.msra.mxu0 0.0
  %2695 = vmatpush.msra.mxu0 0.0
  %v2696 = vand.u32 %v2617, 4294901760
  %v2697 = vsub.f32 %v2617, %v2696
  %2698 = vmatpush.msra.mxu0 %v2697
  %v2699 = vand.u32 %v2424, 4294901760
  %v2700 = vsub.f32 %v2424, %v2699
  %2701 = vmatpush.msra.mxu0 %v2700
  %v2702 = vand.u32 %v2423, 4294901760
  %v2703 = vsub.f32 %v2423, %v2702
  %2704 = vmatpush.msra.mxu0 %v2703
  %v2705 = vand.u32 %v2614, 4294901760
  %v2706 = vsub.f32 %v2614, %v2705
  %2707 = vmatmul.f32.gmra.mxu0 %v2706
  %v2708 = vpop.f32.mrf.mxu0
  %v2709 = vadd.f32 %v2681, %v2708
  %2710 = vdwg.mxu0
  %2711 = vmatpush.msra.mxu0 0.0
  %2712 = vmatpush.msra.mxu0 0.0
  %2713 = vmatpush.msra.mxu0 0.0
  %2714 = vmatpush.msra.mxu0 0.0
  %2715 = vmatpush.msra.mxu0 0.0
  %2716 = vmatpush.msra.mxu0 0.0
  %2717 = vmatpush.msra.mxu0 0.0
  %2718 = vmatpush.msra.mxu0 0.0
  %2719 = vmatpush.msra.mxu0 0.0
  %2720 = vmatpush.msra.mxu0 0.0
  %2721 = vmatpush.msra.mxu0 0.0
  %2722 = vmatpush.msra.mxu0 0.0
  %2723 = vmatpush.msra.mxu0 0.0
  %v2724 = vand.u32 %v2617, 4294901760
  %2725 = vmatpush.msra.mxu0 %v2724
  %v2726 = vand.u32 %v2424, 4294901760
  %2727 = vmatpush.msra.mxu0 %v2726
  %v2728 = vand.u32 %v2423, 4294901760
  %2729 = vmatpush.msra.mxu0 %v2728
  %v2730 = vand.u32 %v2614, 4294901760
  %v2731 = vsub.f32 %v2614, %v2730
  %v2732 = vand.u32 %v2731, 4294901760
  %2733 = vmatmul.f32.gmra.mxu0 %v2732
  %v2734 = vpop.f32.mrf.mxu0
  %v2735 = vadd.f32 %v2709, %v2734
  %2736 = vdwg.mxu0
  %2737 = vmatpush.msra.mxu0 0.0
  %2738 = vmatpush.msra.mxu0 0.0
  %2739 = vmatpush.msra.mxu0 0.0
  %2740 = vmatpush.msra.mxu0 0.0
  %2741 = vmatpush.msra.mxu0 0.0
  %2742 = vmatpush.msra.mxu0 0.0
  %2743 = vmatpush.msra.mxu0 0.0
  %2744 = vmatpush.msra.mxu0 0.0
  %2745 = vmatpush.msra.mxu0 0.0
  %2746 = vmatpush.msra.mxu0 0.0
  %2747 = vmatpush.msra.mxu0 0.0
  %2748 = vmatpush.msra.mxu0 0.0
  %2749 = vmatpush.msra.mxu0 0.0
  %v2750 = vand.u32 %v2617, 4294901760
  %v2751 = vsub.f32 %v2617, %v2750
  %v2752 = vand.u32 %v2751, 4294901760
  %2753 = vmatpush.msra.mxu0 %v2752
  %v2754 = vand.u32 %v2424, 4294901760
  %v2755 = vsub.f32 %v2424, %v2754
  %v2756 = vand.u32 %v2755, 4294901760
  %2757 = vmatpush.msra.mxu0 %v2756
  %v2758 = vand.u32 %v2423, 4294901760
  %v2759 = vsub.f32 %v2423, %v2758
  %v2760 = vand.u32 %v2759, 4294901760
  %2761 = vmatpush.msra.mxu0 %v2760
  %v2762 = vand.u32 %v2614, 4294901760
  %2763 = vmatmul.f32.gmra.mxu0 %v2762
  %v2764 = vpop.f32.mrf.mxu0
  %v2765 = vadd.f32 %v2735, %v2764
  %2766 = vdwg.mxu0
  %2767 = vmatpush.msra.mxu0 0.0
  %2768 = vmatpush.msra.mxu0 0.0
  %2769 = vmatpush.msra.mxu0 0.0
  %2770 = vmatpush.msra.mxu0 0.0
  %2771 = vmatpush.msra.mxu0 0.0
  %2772 = vmatpush.msra.mxu0 0.0
  %2773 = vmatpush.msra.mxu0 0.0
  %2774 = vmatpush.msra.mxu0 0.0
  %2775 = vmatpush.msra.mxu0 0.0
  %2776 = vmatpush.msra.mxu0 0.0
  %2777 = vmatpush.msra.mxu0 0.0
  %2778 = vmatpush.msra.mxu0 0.0
  %2779 = vmatpush.msra.mxu0 0.0
  %v2780 = vand.u32 %v2617, 4294901760
  %2781 = vmatpush.msra.mxu0 %v2780
  %v2782 = vand.u32 %v2424, 4294901760
  %2783 = vmatpush.msra.mxu0 %v2782
  %v2784 = vand.u32 %v2423, 4294901760
  %2785 = vmatpush.msra.mxu0 %v2784
  %v2786 = vand.u32 %v2614, 4294901760
  %2787 = vmatmul.f32.gmra.mxu0 %v2786
  %v2788 = vpop.f32.mrf.mxu0
  %v2789 = vadd.f32 %v2765, %v2788
  %2790 = vdwg.mxu0
  %s2791 = scalar_lea.vmem %s2, 48
  %v2792 = vld [vmem:[%s2791] sm:$0xff]
  %v2793 = vld [vmem:[%s2791 + $0x8] sm:$0xff]
  %v2794 = vld [vmem:[%s2791 + $0x10] sm:$0x1f]
  %vm2795 = vcmask 1043456
  %v2796 = vrot.slane %v2413, 4
  %v2797 = vrot.slane %v2417, 4
  %v2798 = vsel %vm2795, %v2796, %v2797
  %v2799 = vsel %vm2435, %v2798, 0
  %v2802 = vsel %vm2438, %v2794, 0
  %2804 = vmatpush.msra.mxu0 0.0
  %2805 = vmatpush.msra.mxu0 0.0
  %2806 = vmatpush.msra.mxu0 0.0
  %2807 = vmatpush.msra.mxu0 0.0
  %2808 = vmatpush.msra.mxu0 0.0
  %2809 = vmatpush.msra.mxu0 0.0
  %2810 = vmatpush.msra.mxu0 0.0
  %2811 = vmatpush.msra.mxu0 0.0
  %2812 = vmatpush.msra.mxu0 0.0
  %2813 = vmatpush.msra.mxu0 0.0
  %2814 = vmatpush.msra.mxu0 0.0
  %2815 = vmatpush.msra.mxu0 0.0
  %2816 = vmatpush.msra.mxu0 0.0
  %v2817 = vand.u32 %v2802, 4294901760
  %2818 = vmatpush.msra.mxu0 %v2817
  %v2819 = vand.u32 %v2793, 4294901760
  %2820 = vmatpush.msra.mxu0 %v2819
  %v2821 = vand.u32 %v2792, 4294901760
  %2822 = vmatpush.msra.mxu0 %v2821
  %v2823 = vand.u32 %v2799, 4294901760
  %v2824 = vsub.f32 %v2799, %v2823
  %v2825 = vand.u32 %v2824, 4294901760
  %v2826 = vsub.f32 %v2824, %v2825
  %v2827 = vand.u32 %v2826, 4294901760
  %2828 = vmatmul.f32.gmra.mxu0 %v2827
  %v2829 = vpop.f32.mrf.mxu0
  %v2830 = vadd.f32 0.0, %v2829
  %2831 = vdwg.mxu0
  %2832 = vmatpush.msra.mxu0 0.0
  %2833 = vmatpush.msra.mxu0 0.0
  %2834 = vmatpush.msra.mxu0 0.0
  %2835 = vmatpush.msra.mxu0 0.0
  %2836 = vmatpush.msra.mxu0 0.0
  %2837 = vmatpush.msra.mxu0 0.0
  %2838 = vmatpush.msra.mxu0 0.0
  %2839 = vmatpush.msra.mxu0 0.0
  %2840 = vmatpush.msra.mxu0 0.0
  %2841 = vmatpush.msra.mxu0 0.0
  %2842 = vmatpush.msra.mxu0 0.0
  %2843 = vmatpush.msra.mxu0 0.0
  %2844 = vmatpush.msra.mxu0 0.0
  %v2845 = vand.u32 %v2802, 4294901760
  %v2846 = vsub.f32 %v2802, %v2845
  %v2847 = vand.u32 %v2846, 4294901760
  %v2848 = vsub.f32 %v2846, %v2847
  %v2849 = vand.u32 %v2848, 4294901760
  %2850 = vmatpush.msra.mxu0 %v2849
  %v2851 = vand.u32 %v2793, 4294901760
  %v2852 = vsub.f32 %v2793, %v2851
  %v2853 = vand.u32 %v2852, 4294901760
  %v2854 = vsub.f32 %v2852, %v2853
  %v2855 = vand.u32 %v2854, 4294901760
  %2856 = vmatpush.msra.mxu0 %v2855
  %v2857 = vand.u32 %v2792, 4294901760
  %v2858 = vsub.f32 %v2792, %v2857
  %v2859 = vand.u32 %v2858, 4294901760
  %v2860 = vsub.f32 %v2858, %v2859
  %v2861 = vand.u32 %v2860, 4294901760
  %2862 = vmatpush.msra.mxu0 %v2861
  %v2863 = vand.u32 %v2799, 4294901760
  %2864 = vmatmul.f32.gmra.mxu0 %v2863
  %v2865 = vpop.f32.mrf.mxu0
  %v2866 = vadd.f32 %v2830, %v2865
  %2867 = vdwg.mxu0
  %2868 = vmatpush.msra.mxu0 0.0
  %2869 = vmatpush.msra.mxu0 0.0
  %2870 = vmatpush.msra.mxu0 0.0
  %2871 = vmatpush.msra.mxu0 0.0
  %2872 = vmatpush.msra.mxu0 0.0
  %2873 = vmatpush.msra.mxu0 0.0
  %2874 = vmatpush.msra.mxu0 0.0
  %2875 = vmatpush.msra.mxu0 0.0
  %2876 = vmatpush.msra.mxu0 0.0
  %2877 = vmatpush.msra.mxu0 0.0
  %2878 = vmatpush.msra.mxu0 0.0
  %2879 = vmatpush.msra.mxu0 0.0
  %2880 = vmatpush.msra.mxu0 0.0
  %v2881 = vand.u32 %v2802, 4294901760
  %v2882 = vsub.f32 %v2802, %v2881
  %2883 = vmatpush.msra.mxu0 %v2882
  %v2884 = vand.u32 %v2793, 4294901760
  %v2885 = vsub.f32 %v2793, %v2884
  %2886 = vmatpush.msra.mxu0 %v2885
  %v2887 = vand.u32 %v2792, 4294901760
  %v2888 = vsub.f32 %v2792, %v2887
  %2889 = vmatpush.msra.mxu0 %v2888
  %v2890 = vand.u32 %v2799, 4294901760
  %v2891 = vsub.f32 %v2799, %v2890
  %2892 = vmatmul.f32.gmra.mxu0 %v2891
  %v2893 = vpop.f32.mrf.mxu0
  %v2894 = vadd.f32 %v2866, %v2893
  %2895 = vdwg.mxu0
  %2896 = vmatpush.msra.mxu0 0.0
  %2897 = vmatpush.msra.mxu0 0.0
  %2898 = vmatpush.msra.mxu0 0.0
  %2899 = vmatpush.msra.mxu0 0.0
  %2900 = vmatpush.msra.mxu0 0.0
  %2901 = vmatpush.msra.mxu0 0.0
  %2902 = vmatpush.msra.mxu0 0.0
  %2903 = vmatpush.msra.mxu0 0.0
  %2904 = vmatpush.msra.mxu0 0.0
  %2905 = vmatpush.msra.mxu0 0.0
  %2906 = vmatpush.msra.mxu0 0.0
  %2907 = vmatpush.msra.mxu0 0.0
  %2908 = vmatpush.msra.mxu0 0.0
  %v2909 = vand.u32 %v2802, 4294901760
  %2910 = vmatpush.msra.mxu0 %v2909
  %v2911 = vand.u32 %v2793, 4294901760
  %2912 = vmatpush.msra.mxu0 %v2911
  %v2913 = vand.u32 %v2792, 4294901760
  %2914 = vmatpush.msra.mxu0 %v2913
  %v2915 = vand.u32 %v2799, 4294901760
  %v2916 = vsub.f32 %v2799, %v2915
  %v2917 = vand.u32 %v2916, 4294901760
  %2918 = vmatmul.f32.gmra.mxu0 %v2917
  %v2919 = vpop.f32.mrf.mxu0
  %v2920 = vadd.f32 %v2894, %v2919
  %2921 = vdwg.mxu0
  %2922 = vmatpush.msra.mxu0 0.0
  %2923 = vmatpush.msra.mxu0 0.0
  %2924 = vmatpush.msra.mxu0 0.0
  %2925 = vmatpush.msra.mxu0 0.0
  %2926 = vmatpush.msra.mxu0 0.0
  %2927 = vmatpush.msra.mxu0 0.0
  %2928 = vmatpush.msra.mxu0 0.0
  %2929 = vmatpush.msra.mxu0 0.0
  %2930 = vmatpush.msra.mxu0 0.0
  %2931 = vmatpush.msra.mxu0 0.0
  %2932 = vmatpush.msra.mxu0 0.0
  %2933 = vmatpush.msra.mxu0 0.0
  %2934 = vmatpush.msra.mxu0 0.0
  %v2935 = vand.u32 %v2802, 4294901760
  %v2936 = vsub.f32 %v2802, %v2935
  %v2937 = vand.u32 %v2936, 4294901760
  %2938 = vmatpush.msra.mxu0 %v2937
  %v2939 = vand.u32 %v2793, 4294901760
  %v2940 = vsub.f32 %v2793, %v2939
  %v2941 = vand.u32 %v2940, 4294901760
  %2942 = vmatpush.msra.mxu0 %v2941
  %v2943 = vand.u32 %v2792, 4294901760
  %v2944 = vsub.f32 %v2792, %v2943
  %v2945 = vand.u32 %v2944, 4294901760
  %2946 = vmatpush.msra.mxu0 %v2945
  %v2947 = vand.u32 %v2799, 4294901760
  %2948 = vmatmul.f32.gmra.mxu0 %v2947
  %v2949 = vpop.f32.mrf.mxu0
  %v2950 = vadd.f32 %v2920, %v2949
  %2951 = vdwg.mxu0
  %2952 = vmatpush.msra.mxu0 0.0
  %2953 = vmatpush.msra.mxu0 0.0
  %2954 = vmatpush.msra.mxu0 0.0
  %2955 = vmatpush.msra.mxu0 0.0
  %2956 = vmatpush.msra.mxu0 0.0
  %2957 = vmatpush.msra.mxu0 0.0
  %2958 = vmatpush.msra.mxu0 0.0
  %2959 = vmatpush.msra.mxu0 0.0
  %2960 = vmatpush.msra.mxu0 0.0
  %2961 = vmatpush.msra.mxu0 0.0
  %2962 = vmatpush.msra.mxu0 0.0
  %2963 = vmatpush.msra.mxu0 0.0
  %2964 = vmatpush.msra.mxu0 0.0
  %v2965 = vand.u32 %v2802, 4294901760
  %2966 = vmatpush.msra.mxu0 %v2965
  %v2967 = vand.u32 %v2793, 4294901760
  %2968 = vmatpush.msra.mxu0 %v2967
  %v2969 = vand.u32 %v2792, 4294901760
  %2970 = vmatpush.msra.mxu0 %v2969
  %v2971 = vand.u32 %v2799, 4294901760
  %2972 = vmatmul.f32.gmra.mxu0 %v2971
  %v2973 = vpop.f32.mrf.mxu0
  %v2974 = vadd.f32 %v2950, %v2973
  %2975 = vdwg.mxu0
  %v2976 = vadd.f32 %v2789, %v2974
  %s2977 = scalar_lea.vmem %s2, 72
  %v2978 = vld [vmem:[%s2977] sm:$0xff]
  %v2979 = vld [vmem:[%s2977 + $0x8] sm:$0xff]
  %v2980 = vld [vmem:[%s2977 + $0x10] sm:$0x1f]
  %vm2981 = vcmask 1041408
  %v2982 = vrot.slane %v2413, 6
  %v2983 = vrot.slane %v2417, 6
  %v2984 = vsel %vm2981, %v2982, %v2983
  %v2985 = vsel %vm2435, %v2984, 0
  %v2988 = vsel %vm2438, %v2980, 0
  %2990 = vmatpush.msra.mxu0 0.0
  %2991 = vmatpush.msra.mxu0 0.0
  %2992 = vmatpush.msra.mxu0 0.0
  %2993 = vmatpush.msra.mxu0 0.0
  %2994 = vmatpush.msra.mxu0 0.0
  %2995 = vmatpush.msra.mxu0 0.0
  %2996 = vmatpush.msra.mxu0 0.0
  %2997 = vmatpush.msra.mxu0 0.0
  %2998 = vmatpush.msra.mxu0 0.0
  %2999 = vmatpush.msra.mxu0 0.0
  %3000 = vmatpush.msra.mxu0 0.0
  %3001 = vmatpush.msra.mxu0 0.0
  %3002 = vmatpush.msra.mxu0 0.0
  %v3003 = vand.u32 %v2988, 4294901760
  %3004 = vmatpush.msra.mxu0 %v3003
  %v3005 = vand.u32 %v2979, 4294901760
  %3006 = vmatpush.msra.mxu0 %v3005
  %v3007 = vand.u32 %v2978, 4294901760
  %3008 = vmatpush.msra.mxu0 %v3007
  %v3009 = vand.u32 %v2985, 4294901760
  %v3010 = vsub.f32 %v2985, %v3009
  %v3011 = vand.u32 %v3010, 4294901760
  %v3012 = vsub.f32 %v3010, %v3011
  %v3013 = vand.u32 %v3012, 4294901760
  %3014 = vmatmul.f32.gmra.mxu0 %v3013
  %v3015 = vpop.f32.mrf.mxu0
  %v3016 = vadd.f32 0.0, %v3015
  %3017 = vdwg.mxu0
  %3018 = vmatpush.msra.mxu0 0.0
  %3019 = vmatpush.msra.mxu0 0.0
  %3020 = vmatpush.msra.mxu0 0.0
  %3021 = vmatpush.msra.mxu0 0.0
  %3022 = vmatpush.msra.mxu0 0.0
  %3023 = vmatpush.msra.mxu0 0.0
  %3024 = vmatpush.msra.mxu0 0.0
  %3025 = vmatpush.msra.mxu0 0.0
  %3026 = vmatpush.msra.mxu0 0.0
  %3027 = vmatpush.msra.mxu0 0.0
  %3028 = vmatpush.msra.mxu0 0.0
  %3029 = vmatpush.msra.mxu0 0.0
  %3030 = vmatpush.msra.mxu0 0.0
  %v3031 = vand.u32 %v2988, 4294901760
  %v3032 = vsub.f32 %v2988, %v3031
  %v3033 = vand.u32 %v3032, 4294901760
  %v3034 = vsub.f32 %v3032, %v3033
  %v3035 = vand.u32 %v3034, 4294901760
  %3036 = vmatpush.msra.mxu0 %v3035
  %v3037 = vand.u32 %v2979, 4294901760
  %v3038 = vsub.f32 %v2979, %v3037
  %v3039 = vand.u32 %v3038, 4294901760
  %v3040 = vsub.f32 %v3038, %v3039
  %v3041 = vand.u32 %v3040, 4294901760
  %3042 = vmatpush.msra.mxu0 %v3041
  %v3043 = vand.u32 %v2978, 4294901760
  %v3044 = vsub.f32 %v2978, %v3043
  %v3045 = vand.u32 %v3044, 4294901760
  %v3046 = vsub.f32 %v3044, %v3045
  %v3047 = vand.u32 %v3046, 4294901760
  %3048 = vmatpush.msra.mxu0 %v3047
  %v3049 = vand.u32 %v2985, 4294901760
  %3050 = vmatmul.f32.gmra.mxu0 %v3049
  %v3051 = vpop.f32.mrf.mxu0
  %v3052 = vadd.f32 %v3016, %v3051
  %3053 = vdwg.mxu0
  %3054 = vmatpush.msra.mxu0 0.0
  %3055 = vmatpush.msra.mxu0 0.0
  %3056 = vmatpush.msra.mxu0 0.0
  %3057 = vmatpush.msra.mxu0 0.0
  %3058 = vmatpush.msra.mxu0 0.0
  %3059 = vmatpush.msra.mxu0 0.0
  %3060 = vmatpush.msra.mxu0 0.0
  %3061 = vmatpush.msra.mxu0 0.0
  %3062 = vmatpush.msra.mxu0 0.0
  %3063 = vmatpush.msra.mxu0 0.0
  %3064 = vmatpush.msra.mxu0 0.0
  %3065 = vmatpush.msra.mxu0 0.0
  %3066 = vmatpush.msra.mxu0 0.0
  %v3067 = vand.u32 %v2988, 4294901760
  %v3068 = vsub.f32 %v2988, %v3067
  %3069 = vmatpush.msra.mxu0 %v3068
  %v3070 = vand.u32 %v2979, 4294901760
  %v3071 = vsub.f32 %v2979, %v3070
  %3072 = vmatpush.msra.mxu0 %v3071
  %v3073 = vand.u32 %v2978, 4294901760
  %v3074 = vsub.f32 %v2978, %v3073
  %3075 = vmatpush.msra.mxu0 %v3074
  %v3076 = vand.u32 %v2985, 4294901760
  %v3077 = vsub.f32 %v2985, %v3076
  %3078 = vmatmul.f32.gmra.mxu0 %v3077
  %v3079 = vpop.f32.mrf.mxu0
  %v3080 = vadd.f32 %v3052, %v3079
  %3081 = vdwg.mxu0
  %3082 = vmatpush.msra.mxu0 0.0
  %3083 = vmatpush.msra.mxu0 0.0
  %3084 = vmatpush.msra.mxu0 0.0
  %3085 = vmatpush.msra.mxu0 0.0
  %3086 = vmatpush.msra.mxu0 0.0
  %3087 = vmatpush.msra.mxu0 0.0
  %3088 = vmatpush.msra.mxu0 0.0
  %3089 = vmatpush.msra.mxu0 0.0
  %3090 = vmatpush.msra.mxu0 0.0
  %3091 = vmatpush.msra.mxu0 0.0
  %3092 = vmatpush.msra.mxu0 0.0
  %3093 = vmatpush.msra.mxu0 0.0
  %3094 = vmatpush.msra.mxu0 0.0
  %v3095 = vand.u32 %v2988, 4294901760
  %3096 = vmatpush.msra.mxu0 %v3095
  %v3097 = vand.u32 %v2979, 4294901760
  %3098 = vmatpush.msra.mxu0 %v3097
  %v3099 = vand.u32 %v2978, 4294901760
  %3100 = vmatpush.msra.mxu0 %v3099
  %v3101 = vand.u32 %v2985, 4294901760
  %v3102 = vsub.f32 %v2985, %v3101
  %v3103 = vand.u32 %v3102, 4294901760
  %3104 = vmatmul.f32.gmra.mxu0 %v3103
  %v3105 = vpop.f32.mrf.mxu0
  %v3106 = vadd.f32 %v3080, %v3105
  %3107 = vdwg.mxu0
  %3108 = vmatpush.msra.mxu0 0.0
  %3109 = vmatpush.msra.mxu0 0.0
  %3110 = vmatpush.msra.mxu0 0.0
  %3111 = vmatpush.msra.mxu0 0.0
  %3112 = vmatpush.msra.mxu0 0.0
  %3113 = vmatpush.msra.mxu0 0.0
  %3114 = vmatpush.msra.mxu0 0.0
  %3115 = vmatpush.msra.mxu0 0.0
  %3116 = vmatpush.msra.mxu0 0.0
  %3117 = vmatpush.msra.mxu0 0.0
  %3118 = vmatpush.msra.mxu0 0.0
  %3119 = vmatpush.msra.mxu0 0.0
  %3120 = vmatpush.msra.mxu0 0.0
  %v3121 = vand.u32 %v2988, 4294901760
  %v3122 = vsub.f32 %v2988, %v3121
  %v3123 = vand.u32 %v3122, 4294901760
  %3124 = vmatpush.msra.mxu0 %v3123
  %v3125 = vand.u32 %v2979, 4294901760
  %v3126 = vsub.f32 %v2979, %v3125
  %v3127 = vand.u32 %v3126, 4294901760
  %3128 = vmatpush.msra.mxu0 %v3127
  %v3129 = vand.u32 %v2978, 4294901760
  %v3130 = vsub.f32 %v2978, %v3129
  %v3131 = vand.u32 %v3130, 4294901760
  %3132 = vmatpush.msra.mxu0 %v3131
  %v3133 = vand.u32 %v2985, 4294901760
  %3134 = vmatmul.f32.gmra.mxu0 %v3133
  %v3135 = vpop.f32.mrf.mxu0
  %v3136 = vadd.f32 %v3106, %v3135
  %3137 = vdwg.mxu0
  %3138 = vmatpush.msra.mxu0 0.0
  %3139 = vmatpush.msra.mxu0 0.0
  %3140 = vmatpush.msra.mxu0 0.0
  %3141 = vmatpush.msra.mxu0 0.0
  %3142 = vmatpush.msra.mxu0 0.0
  %3143 = vmatpush.msra.mxu0 0.0
  %3144 = vmatpush.msra.mxu0 0.0
  %3145 = vmatpush.msra.mxu0 0.0
  %3146 = vmatpush.msra.mxu0 0.0
  %3147 = vmatpush.msra.mxu0 0.0
  %3148 = vmatpush.msra.mxu0 0.0
  %3149 = vmatpush.msra.mxu0 0.0
  %3150 = vmatpush.msra.mxu0 0.0
  %v3151 = vand.u32 %v2988, 4294901760
  %3152 = vmatpush.msra.mxu0 %v3151
  %v3153 = vand.u32 %v2979, 4294901760
  %3154 = vmatpush.msra.mxu0 %v3153
  %v3155 = vand.u32 %v2978, 4294901760
  %3156 = vmatpush.msra.mxu0 %v3155
  %v3157 = vand.u32 %v2985, 4294901760
  %3158 = vmatmul.f32.gmra.mxu0 %v3157
  %v3159 = vpop.f32.mrf.mxu0
  %v3160 = vadd.f32 %v3136, %v3159
  %3161 = vdwg.mxu0
  %v3162 = vadd.f32 %v2976, %v3160
  %s3163 = scalar_lea.vmem %s2, 96
  %v3164 = vld [vmem:[%s3163] sm:$0xff]
  %v3165 = vld [vmem:[%s3163 + $0x8] sm:$0xff]
  %v3166 = vld [vmem:[%s3163 + $0x10] sm:$0x1f]
  %v3167 = vsel %vm2435, %v2417, 0
  %v3170 = vsel %vm2438, %v3166, 0
  %3172 = vmatpush.msra.mxu0 0.0
  %3173 = vmatpush.msra.mxu0 0.0
  %3174 = vmatpush.msra.mxu0 0.0
  %3175 = vmatpush.msra.mxu0 0.0
  %3176 = vmatpush.msra.mxu0 0.0
  %3177 = vmatpush.msra.mxu0 0.0
  %3178 = vmatpush.msra.mxu0 0.0
  %3179 = vmatpush.msra.mxu0 0.0
  %3180 = vmatpush.msra.mxu0 0.0
  %3181 = vmatpush.msra.mxu0 0.0
  %3182 = vmatpush.msra.mxu0 0.0
  %3183 = vmatpush.msra.mxu0 0.0
  %3184 = vmatpush.msra.mxu0 0.0
  %v3185 = vand.u32 %v3170, 4294901760
  %3186 = vmatpush.msra.mxu0 %v3185
  %v3187 = vand.u32 %v3165, 4294901760
  %3188 = vmatpush.msra.mxu0 %v3187
  %v3189 = vand.u32 %v3164, 4294901760
  %3190 = vmatpush.msra.mxu0 %v3189
  %v3191 = vand.u32 %v3167, 4294901760
  %v3192 = vsub.f32 %v3167, %v3191
  %v3193 = vand.u32 %v3192, 4294901760
  %v3194 = vsub.f32 %v3192, %v3193
  %v3195 = vand.u32 %v3194, 4294901760
  %3196 = vmatmul.f32.gmra.mxu0 %v3195
  %v3197 = vpop.f32.mrf.mxu0
  %v3198 = vadd.f32 0.0, %v3197
  %3199 = vdwg.mxu0
  %3200 = vmatpush.msra.mxu0 0.0
  %3201 = vmatpush.msra.mxu0 0.0
  %3202 = vmatpush.msra.mxu0 0.0
  %3203 = vmatpush.msra.mxu0 0.0
  %3204 = vmatpush.msra.mxu0 0.0
  %3205 = vmatpush.msra.mxu0 0.0
  %3206 = vmatpush.msra.mxu0 0.0
  %3207 = vmatpush.msra.mxu0 0.0
  %3208 = vmatpush.msra.mxu0 0.0
  %3209 = vmatpush.msra.mxu0 0.0
  %3210 = vmatpush.msra.mxu0 0.0
  %3211 = vmatpush.msra.mxu0 0.0
  %3212 = vmatpush.msra.mxu0 0.0
  %v3213 = vand.u32 %v3170, 4294901760
  %v3214 = vsub.f32 %v3170, %v3213
  %v3215 = vand.u32 %v3214, 4294901760
  %v3216 = vsub.f32 %v3214, %v3215
  %v3217 = vand.u32 %v3216, 4294901760
  %3218 = vmatpush.msra.mxu0 %v3217
  %v3219 = vand.u32 %v3165, 4294901760
  %v3220 = vsub.f32 %v3165, %v3219
  %v3221 = vand.u32 %v3220, 4294901760
  %v3222 = vsub.f32 %v3220, %v3221
  %v3223 = vand.u32 %v3222, 4294901760
  %3224 = vmatpush.msra.mxu0 %v3223
  %v3225 = vand.u32 %v3164, 4294901760
  %v3226 = vsub.f32 %v3164, %v3225
  %v3227 = vand.u32 %v3226, 4294901760
  %v3228 = vsub.f32 %v3226, %v3227
  %v3229 = vand.u32 %v3228, 4294901760
  %3230 = vmatpush.msra.mxu0 %v3229
  %v3231 = vand.u32 %v3167, 4294901760
  %3232 = vmatmul.f32.gmra.mxu0 %v3231
  %v3233 = vpop.f32.mrf.mxu0
  %v3234 = vadd.f32 %v3198, %v3233
  %3235 = vdwg.mxu0
  %3236 = vmatpush.msra.mxu0 0.0
  %3237 = vmatpush.msra.mxu0 0.0
  %3238 = vmatpush.msra.mxu0 0.0
  %3239 = vmatpush.msra.mxu0 0.0
  %3240 = vmatpush.msra.mxu0 0.0
  %3241 = vmatpush.msra.mxu0 0.0
  %3242 = vmatpush.msra.mxu0 0.0
  %3243 = vmatpush.msra.mxu0 0.0
  %3244 = vmatpush.msra.mxu0 0.0
  %3245 = vmatpush.msra.mxu0 0.0
  %3246 = vmatpush.msra.mxu0 0.0
  %3247 = vmatpush.msra.mxu0 0.0
  %3248 = vmatpush.msra.mxu0 0.0
  %v3249 = vand.u32 %v3170, 4294901760
  %v3250 = vsub.f32 %v3170, %v3249
  %3251 = vmatpush.msra.mxu0 %v3250
  %v3252 = vand.u32 %v3165, 4294901760
  %v3253 = vsub.f32 %v3165, %v3252
  %3254 = vmatpush.msra.mxu0 %v3253
  %v3255 = vand.u32 %v3164, 4294901760
  %v3256 = vsub.f32 %v3164, %v3255
  %3257 = vmatpush.msra.mxu0 %v3256
  %v3258 = vand.u32 %v3167, 4294901760
  %v3259 = vsub.f32 %v3167, %v3258
  %3260 = vmatmul.f32.gmra.mxu0 %v3259
  %v3261 = vpop.f32.mrf.mxu0
  %v3262 = vadd.f32 %v3234, %v3261
  %3263 = vdwg.mxu0
  %3264 = vmatpush.msra.mxu0 0.0
  %3265 = vmatpush.msra.mxu0 0.0
  %3266 = vmatpush.msra.mxu0 0.0
  %3267 = vmatpush.msra.mxu0 0.0
  %3268 = vmatpush.msra.mxu0 0.0
  %3269 = vmatpush.msra.mxu0 0.0
  %3270 = vmatpush.msra.mxu0 0.0
  %3271 = vmatpush.msra.mxu0 0.0
  %3272 = vmatpush.msra.mxu0 0.0
  %3273 = vmatpush.msra.mxu0 0.0
  %3274 = vmatpush.msra.mxu0 0.0
  %3275 = vmatpush.msra.mxu0 0.0
  %3276 = vmatpush.msra.mxu0 0.0
  %v3277 = vand.u32 %v3170, 4294901760
  %3278 = vmatpush.msra.mxu0 %v3277
  %v3279 = vand.u32 %v3165, 4294901760
  %3280 = vmatpush.msra.mxu0 %v3279
  %v3281 = vand.u32 %v3164, 4294901760
  %3282 = vmatpush.msra.mxu0 %v3281
  %v3283 = vand.u32 %v3167, 4294901760
  %v3284 = vsub.f32 %v3167, %v3283
  %v3285 = vand.u32 %v3284, 4294901760
  %3286 = vmatmul.f32.gmra.mxu0 %v3285
  %v3287 = vpop.f32.mrf.mxu0
  %v3288 = vadd.f32 %v3262, %v3287
  %3289 = vdwg.mxu0
  %3290 = vmatpush.msra.mxu0 0.0
  %3291 = vmatpush.msra.mxu0 0.0
  %3292 = vmatpush.msra.mxu0 0.0
  %3293 = vmatpush.msra.mxu0 0.0
  %3294 = vmatpush.msra.mxu0 0.0
  %3295 = vmatpush.msra.mxu0 0.0
  %3296 = vmatpush.msra.mxu0 0.0
  %3297 = vmatpush.msra.mxu0 0.0
  %3298 = vmatpush.msra.mxu0 0.0
  %3299 = vmatpush.msra.mxu0 0.0
  %3300 = vmatpush.msra.mxu0 0.0
  %3301 = vmatpush.msra.mxu0 0.0
  %3302 = vmatpush.msra.mxu0 0.0
  %v3303 = vand.u32 %v3170, 4294901760
  %v3304 = vsub.f32 %v3170, %v3303
  %v3305 = vand.u32 %v3304, 4294901760
  %3306 = vmatpush.msra.mxu0 %v3305
  %v3307 = vand.u32 %v3165, 4294901760
  %v3308 = vsub.f32 %v3165, %v3307
  %v3309 = vand.u32 %v3308, 4294901760
  %3310 = vmatpush.msra.mxu0 %v3309
  %v3311 = vand.u32 %v3164, 4294901760
  %v3312 = vsub.f32 %v3164, %v3311
  %v3313 = vand.u32 %v3312, 4294901760
  %3314 = vmatpush.msra.mxu0 %v3313
  %v3315 = vand.u32 %v3167, 4294901760
  %3316 = vmatmul.f32.gmra.mxu0 %v3315
  %v3317 = vpop.f32.mrf.mxu0
  %v3318 = vadd.f32 %v3288, %v3317
  %3319 = vdwg.mxu0
  %3320 = vmatpush.msra.mxu0 0.0
  %3321 = vmatpush.msra.mxu0 0.0
  %3322 = vmatpush.msra.mxu0 0.0
  %3323 = vmatpush.msra.mxu0 0.0
  %3324 = vmatpush.msra.mxu0 0.0
  %3325 = vmatpush.msra.mxu0 0.0
  %3326 = vmatpush.msra.mxu0 0.0
  %3327 = vmatpush.msra.mxu0 0.0
  %3328 = vmatpush.msra.mxu0 0.0
  %3329 = vmatpush.msra.mxu0 0.0
  %3330 = vmatpush.msra.mxu0 0.0
  %3331 = vmatpush.msra.mxu0 0.0
  %3332 = vmatpush.msra.mxu0 0.0
  %v3333 = vand.u32 %v3170, 4294901760
  %3334 = vmatpush.msra.mxu0 %v3333
  %v3335 = vand.u32 %v3165, 4294901760
  %3336 = vmatpush.msra.mxu0 %v3335
  %v3337 = vand.u32 %v3164, 4294901760
  %3338 = vmatpush.msra.mxu0 %v3337
  %v3339 = vand.u32 %v3167, 4294901760
  %3340 = vmatmul.f32.gmra.mxu0 %v3339
  %v3341 = vpop.f32.mrf.mxu0
  %v3342 = vadd.f32 %v3318, %v3341
  %3343 = vdwg.mxu0
  %v3344 = vadd.f32 %v3162, %v3342
  %s3345 = scalar_lea.vmem %s2, 120
  %v3346 = vld [vmem:[%s3345] sm:$0xff]
  %v3347 = vld [vmem:[%s3345 + $0x8] sm:$0xff]
  %v3348 = vld [vmem:[%s3345 + $0x10] sm:$0x1f]
  %v3350 = vrot.slane %v2421, 2
  %v3351 = vsel %vm131, %v2433, %v3350
  %v3352 = vsel %vm2435, %v3351, 0
  %v3355 = vsel %vm2438, %v3348, 0
  %3357 = vmatpush.msra.mxu0 0.0
  %3358 = vmatpush.msra.mxu0 0.0
  %3359 = vmatpush.msra.mxu0 0.0
  %3360 = vmatpush.msra.mxu0 0.0
  %3361 = vmatpush.msra.mxu0 0.0
  %3362 = vmatpush.msra.mxu0 0.0
  %3363 = vmatpush.msra.mxu0 0.0
  %3364 = vmatpush.msra.mxu0 0.0
  %3365 = vmatpush.msra.mxu0 0.0
  %3366 = vmatpush.msra.mxu0 0.0
  %3367 = vmatpush.msra.mxu0 0.0
  %3368 = vmatpush.msra.mxu0 0.0
  %3369 = vmatpush.msra.mxu0 0.0
  %v3370 = vand.u32 %v3355, 4294901760
  %3371 = vmatpush.msra.mxu0 %v3370
  %v3372 = vand.u32 %v3347, 4294901760
  %3373 = vmatpush.msra.mxu0 %v3372
  %v3374 = vand.u32 %v3346, 4294901760
  %3375 = vmatpush.msra.mxu0 %v3374
  %v3376 = vand.u32 %v3352, 4294901760
  %v3377 = vsub.f32 %v3352, %v3376
  %v3378 = vand.u32 %v3377, 4294901760
  %v3379 = vsub.f32 %v3377, %v3378
  %v3380 = vand.u32 %v3379, 4294901760
  %3381 = vmatmul.f32.gmra.mxu0 %v3380
  %v3382 = vpop.f32.mrf.mxu0
  %v3383 = vadd.f32 0.0, %v3382
  %3384 = vdwg.mxu0
  %3385 = vmatpush.msra.mxu0 0.0
  %3386 = vmatpush.msra.mxu0 0.0
  %3387 = vmatpush.msra.mxu0 0.0
  %3388 = vmatpush.msra.mxu0 0.0
  %3389 = vmatpush.msra.mxu0 0.0
  %3390 = vmatpush.msra.mxu0 0.0
  %3391 = vmatpush.msra.mxu0 0.0
  %3392 = vmatpush.msra.mxu0 0.0
  %3393 = vmatpush.msra.mxu0 0.0
  %3394 = vmatpush.msra.mxu0 0.0
  %3395 = vmatpush.msra.mxu0 0.0
  %3396 = vmatpush.msra.mxu0 0.0
  %3397 = vmatpush.msra.mxu0 0.0
  %v3398 = vand.u32 %v3355, 4294901760
  %v3399 = vsub.f32 %v3355, %v3398
  %v3400 = vand.u32 %v3399, 4294901760
  %v3401 = vsub.f32 %v3399, %v3400
  %v3402 = vand.u32 %v3401, 4294901760
  %3403 = vmatpush.msra.mxu0 %v3402
  %v3404 = vand.u32 %v3347, 4294901760
  %v3405 = vsub.f32 %v3347, %v3404
  %v3406 = vand.u32 %v3405, 4294901760
  %v3407 = vsub.f32 %v3405, %v3406
  %v3408 = vand.u32 %v3407, 4294901760
  %3409 = vmatpush.msra.mxu0 %v3408
  %v3410 = vand.u32 %v3346, 4294901760
  %v3411 = vsub.f32 %v3346, %v3410
  %v3412 = vand.u32 %v3411, 4294901760
  %v3413 = vsub.f32 %v3411, %v3412
  %v3414 = vand.u32 %v3413, 4294901760
  %3415 = vmatpush.msra.mxu0 %v3414
  %v3416 = vand.u32 %v3352, 4294901760
  %3417 = vmatmul.f32.gmra.mxu0 %v3416
  %v3418 = vpop.f32.mrf.mxu0
  %v3419 = vadd.f32 %v3383, %v3418
  %3420 = vdwg.mxu0
  %3421 = vmatpush.msra.mxu0 0.0
  %3422 = vmatpush.msra.mxu0 0.0
  %3423 = vmatpush.msra.mxu0 0.0
  %3424 = vmatpush.msra.mxu0 0.0
  %3425 = vmatpush.msra.mxu0 0.0
  %3426 = vmatpush.msra.mxu0 0.0
  %3427 = vmatpush.msra.mxu0 0.0
  %3428 = vmatpush.msra.mxu0 0.0
  %3429 = vmatpush.msra.mxu0 0.0
  %3430 = vmatpush.msra.mxu0 0.0
  %3431 = vmatpush.msra.mxu0 0.0
  %3432 = vmatpush.msra.mxu0 0.0
  %3433 = vmatpush.msra.mxu0 0.0
  %v3434 = vand.u32 %v3355, 4294901760
  %v3435 = vsub.f32 %v3355, %v3434
  %3436 = vmatpush.msra.mxu0 %v3435
  %v3437 = vand.u32 %v3347, 4294901760
  %v3438 = vsub.f32 %v3347, %v3437
  %3439 = vmatpush.msra.mxu0 %v3438
  %v3440 = vand.u32 %v3346, 4294901760
  %v3441 = vsub.f32 %v3346, %v3440
  %3442 = vmatpush.msra.mxu0 %v3441
  %v3443 = vand.u32 %v3352, 4294901760
  %v3444 = vsub.f32 %v3352, %v3443
  %3445 = vmatmul.f32.gmra.mxu0 %v3444
  %v3446 = vpop.f32.mrf.mxu0
  %v3447 = vadd.f32 %v3419, %v3446
  %3448 = vdwg.mxu0
  %3449 = vmatpush.msra.mxu0 0.0
  %3450 = vmatpush.msra.mxu0 0.0
  %3451 = vmatpush.msra.mxu0 0.0
  %3452 = vmatpush.msra.mxu0 0.0
  %3453 = vmatpush.msra.mxu0 0.0
  %3454 = vmatpush.msra.mxu0 0.0
  %3455 = vmatpush.msra.mxu0 0.0
  %3456 = vmatpush.msra.mxu0 0.0
  %3457 = vmatpush.msra.mxu0 0.0
  %3458 = vmatpush.msra.mxu0 0.0
  %3459 = vmatpush.msra.mxu0 0.0
  %3460 = vmatpush.msra.mxu0 0.0
  %3461 = vmatpush.msra.mxu0 0.0
  %v3462 = vand.u32 %v3355, 4294901760
  %3463 = vmatpush.msra.mxu0 %v3462
  %v3464 = vand.u32 %v3347, 4294901760
  %3465 = vmatpush.msra.mxu0 %v3464
  %v3466 = vand.u32 %v3346, 4294901760
  %3467 = vmatpush.msra.mxu0 %v3466
  %v3468 = vand.u32 %v3352, 4294901760
  %v3469 = vsub.f32 %v3352, %v3468
  %v3470 = vand.u32 %v3469, 4294901760
  %3471 = vmatmul.f32.gmra.mxu0 %v3470
  %v3472 = vpop.f32.mrf.mxu0
  %v3473 = vadd.f32 %v3447, %v3472
  %3474 = vdwg.mxu0
  %3475 = vmatpush.msra.mxu0 0.0
  %3476 = vmatpush.msra.mxu0 0.0
  %3477 = vmatpush.msra.mxu0 0.0
  %3478 = vmatpush.msra.mxu0 0.0
  %3479 = vmatpush.msra.mxu0 0.0
  %3480 = vmatpush.msra.mxu0 0.0
  %3481 = vmatpush.msra.mxu0 0.0
  %3482 = vmatpush.msra.mxu0 0.0
  %3483 = vmatpush.msra.mxu0 0.0
  %3484 = vmatpush.msra.mxu0 0.0
  %3485 = vmatpush.msra.mxu0 0.0
  %3486 = vmatpush.msra.mxu0 0.0
  %3487 = vmatpush.msra.mxu0 0.0
  %v3488 = vand.u32 %v3355, 4294901760
  %v3489 = vsub.f32 %v3355, %v3488
  %v3490 = vand.u32 %v3489, 4294901760
  %3491 = vmatpush.msra.mxu0 %v3490
  %v3492 = vand.u32 %v3347, 4294901760
  %v3493 = vsub.f32 %v3347, %v3492
  %v3494 = vand.u32 %v3493, 4294901760
  %3495 = vmatpush.msra.mxu0 %v3494
  %v3496 = vand.u32 %v3346, 4294901760
  %v3497 = vsub.f32 %v3346, %v3496
  %v3498 = vand.u32 %v3497, 4294901760
  %3499 = vmatpush.msra.mxu0 %v3498
  %v3500 = vand.u32 %v3352, 4294901760
  %3501 = vmatmul.f32.gmra.mxu0 %v3500
  %v3502 = vpop.f32.mrf.mxu0
  %v3503 = vadd.f32 %v3473, %v3502
  %3504 = vdwg.mxu0
  %3505 = vmatpush.msra.mxu0 0.0
  %3506 = vmatpush.msra.mxu0 0.0
  %3507 = vmatpush.msra.mxu0 0.0
  %3508 = vmatpush.msra.mxu0 0.0
  %3509 = vmatpush.msra.mxu0 0.0
  %3510 = vmatpush.msra.mxu0 0.0
  %3511 = vmatpush.msra.mxu0 0.0
  %3512 = vmatpush.msra.mxu0 0.0
  %3513 = vmatpush.msra.mxu0 0.0
  %3514 = vmatpush.msra.mxu0 0.0
  %3515 = vmatpush.msra.mxu0 0.0
  %3516 = vmatpush.msra.mxu0 0.0
  %3517 = vmatpush.msra.mxu0 0.0
  %v3518 = vand.u32 %v3355, 4294901760
  %3519 = vmatpush.msra.mxu0 %v3518
  %v3520 = vand.u32 %v3347, 4294901760
  %3521 = vmatpush.msra.mxu0 %v3520
  %v3522 = vand.u32 %v3346, 4294901760
  %3523 = vmatpush.msra.mxu0 %v3522
  %v3524 = vand.u32 %v3352, 4294901760
  %3525 = vmatmul.f32.gmra.mxu0 %v3524
  %v3526 = vpop.f32.mrf.mxu0
  %v3527 = vadd.f32 %v3503, %v3526
  %3528 = vdwg.mxu0
  %v3529 = vadd.f32 %v3344, %v3527
  %v3530 = vld [vmem:[%s3] sm:$0x1]
  %v3532 = vperm.slane %v3530, 0
  %v3534 = vadd.f32 %v3529, %v3532
  %v3535 = vmul.f32 %v3534, %v3534
  %v3536 = vmul.f32 %v3534, %v3535
  %v3537 = vmul.f32 %v3536, 0.044715
  %v3538 = vadd.f32 %v3534, %v3537
  %v3539 = vmul.f32 %v3538, 0.7978846
  %v3540 = vmul.f32 %v3534, 0.5
  %v3541 = vtanh.pop %v3539
  %v3542 = vadd.f32 %v3541, 1.0
  %v3543 = vmul.f32 %v3540, %v3542
  %3544 = vst [vmem:[%s4] sm:$0xff] %v3543
  // Predicated region
  $region18: #{forward.1} parent=0 // pred_check
    _
  $region19: #{forward.1} parent=0 // pred_check_branch
    %3546 = sbr.rel (0) target = $region21
  $region20: #{forward.1} parent=0 // pred_region
    _
  $region21: #{forward.1} parent=0 // pred_fallthru
    _
  // Predicated region
  $region22: #{forward.1} parent=0 // pred_check
    _
  $region23: #{forward.1} parent=0 // pred_check_branch
    %3548 = sbr.rel (0) target = $region25
  $region24: #{forward.1} parent=0 // pred_region
    _
  $region25: #{forward.1} parent=0 // pred_fallthru
    _

</llo_original>
